<compile_context>
chip_gen: v7x
topology: tpu7x:2x2x1
jax: 0.10.0
libtpu: 0.0.40
codegen_flags: <defaults>
</compile_context>

<pallas_src>
import functools

import jax
import jax.numpy as jnp
from jax.experimental import pallas as pl
from jax.experimental.pallas import tpu as pltpu


def _round_up(x, m):
    return ((x + m - 1) // m) * m


# ----------------------------------------------------------------------------
# In-kernel helper: one full-batch multi-head cross attention.
# ----------------------------------------------------------------------------
def _one_cross_attention(q_ref, ctx_ref, wq_ref, wk_ref, wv_ref, wo_ref,
                         out_ref, *, batch, heads, dim_head):
    """Bias-free multi-head cross attention for the whole batch.

    q_ref   : [Nq, Dq_in]     learned query embedding, shared across batch
    ctx_ref : [B*T, Dc]       encoder context, batch folded into rows
    wq      : [Dq_in, H*Dh]   wk, wv : [Dc, H*Dh]   wo : [H*Dh, Dq_pad]
    out_ref : [B*Nq, Dq_pad]  lane-dense (Dq padded to a multiple of 128)
    """
    q_emb = q_ref[...]
    ctx = ctx_ref[...]
    wq = wq_ref[...]
    wk = wk_ref[...]
    wv = wv_ref[...]
    wo = wo_ref[...]

    nq = q_emb.shape[0]
    t = ctx.shape[0] // batch
    scale = dim_head ** -0.5

    # Fused projections: one MXU matmul each over the whole batch.
    q_all = jnp.dot(q_emb, wq, preferred_element_type=jnp.float32)   # [Nq, H*Dh]
    k_all = jnp.dot(ctx, wk, preferred_element_type=jnp.float32)     # [B*T, H*Dh]
    v_all = jnp.dot(ctx, wv, preferred_element_type=jnp.float32)     # [B*T, H*Dh]

    # Static unroll over (batch, head): plain 2D dots on contiguous lane
    # slices, no 3D einsums / head reshapes -> no cross-lane relayouts.
    for b in range(batch):
        k_b = k_all[b * t:(b + 1) * t]          # [T, H*Dh] (sublane-aligned)
        v_b = v_all[b * t:(b + 1) * t]
        out_b = None
        for h in range(heads):
            lo = h * dim_head
            q_h = q_all[:, lo:lo + dim_head]    # [Nq, Dh]
            k_h = k_b[:, lo:lo + dim_head]      # [T,  Dh]
            v_h = v_b[:, lo:lo + dim_head]      # [T,  Dh]

            # scores = q_h @ k_h.T : contract lane dims directly (no explicit
            # transpose op; Mosaic handles the "NT" matmul on the MXU).
            s = jax.lax.dot_general(
                q_h, k_h, (((1,), (1,)), ((), ())),
                preferred_element_type=jnp.float32) * scale          # [Nq, T]

            # softmax over keys; divide moved onto the EUP slot.
            m = jnp.max(s, axis=-1, keepdims=True)
            e = jnp.exp(s - m)
            denom = jnp.sum(e, axis=-1, keepdims=True)
            p = e * pl.reciprocal(denom, approx=True)

            o_h = jnp.dot(p, v_h, preferred_element_type=jnp.float32)  # [Nq, Dh]

            # (concat_h o_h) @ wo  ==  sum_h o_h @ wo[h*Dh:(h+1)*Dh, :]
            # -> avoids an unaligned lane concat of the head outputs.
            contrib = jnp.dot(o_h, wo[lo:lo + dim_head, :],
                              preferred_element_type=jnp.float32)      # [Nq, Dq_pad]
            out_b = contrib if out_b is None else out_b + contrib

        # Lane-dense, sublane-aligned store (Dq_pad is a multiple of 128).
        out_ref[b * nq:(b + 1) * nq, :] = out_b.astype(out_ref.dtype)


def _style_attn_kernel(txt_q_ref, txt_ctx_ref, twq_ref, twk_ref, twv_ref, two_ref,
                       ref_q_ref, ref_ctx_ref, rwq_ref, rwk_ref, rwv_ref, rwo_ref,
                       txt_out_ref, ref_out_ref, *, batch, heads, dim_head):
    # Both cross-attentions fused into one kernel invocation.
    _one_cross_attention(txt_q_ref, txt_ctx_ref, twq_ref, twk_ref, twv_ref,
                         two_ref, txt_out_ref,
                         batch=batch, heads=heads, dim_head=dim_head)
    _one_cross_attention(ref_q_ref, ref_ctx_ref, rwq_ref, rwk_ref, rwv_ref,
                         rwo_ref, ref_out_ref,
                         batch=batch, heads=heads, dim_head=dim_head)


# ----------------------------------------------------------------------------
# Wrapper: single pallas_call for both attentions, whole batch.
# ----------------------------------------------------------------------------
def _attn_cost(B, T, Dc, Nq, Dq_in, heads, dim_head, Dq_pad):
    di = heads * dim_head
    flops = 2 * (Nq * Dq_in * di                      # q projection
                 + 2 * B * T * Dc * di                # k and v projections
                 + 2 * B * heads * Nq * T * dim_head  # scores + p@v
                 + B * Nq * di * Dq_pad)              # output projection
    transcendentals = B * heads * Nq * (T + 1)        # exp + reciprocal
    bytes_accessed = 4 * (Nq * Dq_in + B * T * Dc + Dq_in * di
                          + 2 * Dc * di + di * Dq_pad + B * Nq * Dq_pad)
    return flops, transcendentals, bytes_accessed


def fused_style_cross_attention(params, txt_enc, ref_enc, *, heads, dim_head):
    """Both StyleModule cross-attentions in one Pallas kernel.

    txt_enc : [B, T_txt, txt_ctx_dim], ref_enc : [B, T_ref, ref_ctx_dim]
    returns (prompt_rep [B, Nq_t, txt_hidden_dim], ref_rep [B, Nq_r, ref_hidden_dim])
    """
    B, T_txt, Dc_t = txt_enc.shape
    B2, T_ref, Dc_r = ref_enc.shape
    assert B == B2
    txt_q, ref_q = params["txt_q"], params["ref_q"]
    Nq_t, Dq_t = txt_q.shape
    Nq_r, Dq_r = ref_q.shape

    # Lane-dense outputs: pad output-projection columns up to a multiple of 128
    # so kernel stores are unmasked full-lane stores; slice back outside.
    Dq_t_pad = _round_up(Dq_t, 128)
    Dq_r_pad = _round_up(Dq_r, 128)

    def pad_cols(w, cols):
        return w if w.shape[1] == cols else jnp.pad(w, ((0, 0), (0, cols - w.shape[1])))

    txt_wo = pad_cols(params["txt_wo"], Dq_t_pad)
    ref_wo = pad_cols(params["ref_wo"], Dq_r_pad)

    # Fold batch into rows (free, row-major) -> one big K/V projection matmul.
    txt_ctx = txt_enc.reshape(B * T_txt, Dc_t)
    ref_ctx = ref_enc.reshape(B * T_ref, Dc_r)

    operands = (txt_q, txt_ctx, params["txt_wq"], params["txt_wk"],
                params["txt_wv"], txt_wo,
                ref_q, ref_ctx, params["ref_wq"], params["ref_wk"],
                params["ref_wv"], ref_wo)

    f_t = _attn_cost(B, T_txt, Dc_t, Nq_t, Dq_t, heads, dim_head, Dq_t_pad)
    f_r = _attn_cost(B, T_ref, Dc_r, Nq_r, Dq_r, heads, dim_head, Dq_r_pad)
    cost = pl.CostEstimate(flops=f_t[0] + f_r[0],
                           transcendentals=f_t[1] + f_r[1],
                           bytes_accessed=f_t[2] + f_r[2])

    kernel = functools.partial(_style_attn_kernel, batch=B, heads=heads,
                               dim_head=dim_head)

    def full_spec(arr):
        # Single grid step: block == full array (everything resident in VMEM).
        return pl.BlockSpec(arr.shape, lambda i: (0, 0))

    txt_out, ref_out = pl.pallas_call(
        kernel,
        out_shape=(jax.ShapeDtypeStruct((B * Nq_t, Dq_t_pad), txt_enc.dtype),
                   jax.ShapeDtypeStruct((B * Nq_r, Dq_r_pad), ref_enc.dtype)),
        grid=(1,),
        in_specs=[full_spec(a) for a in operands],
        out_specs=(pl.BlockSpec((B * Nq_t, Dq_t_pad), lambda i: (0, 0)),
                   pl.BlockSpec((B * Nq_r, Dq_r_pad), lambda i: (0, 0))),
        compiler_params=pltpu.CompilerParams(
            dimension_semantics=("arbitrary",)),
        cost_estimate=cost,
    )(*operands)

    prompt_rep = txt_out[:, :Dq_t].reshape(B, Nq_t, Dq_t)
    ref_rep = ref_out[:, :Dq_r].reshape(B, Nq_r, Dq_r)
    return prompt_rep, ref_rep


# ----------------------------------------------------------------------------
# StyleModule (synthetic parameters, forward-pass glue)
# ----------------------------------------------------------------------------
def make_style_module_params(key, *, n_txt_queries, txt_hidden_dim, txt_ctx_dim,
                             n_ref_queries, ref_hidden_dim, ref_ctx_dim,
                             dim_head, heads):
    di = dim_head * heads
    ks = jax.random.split(key, 10)
    emb = lambda k, shp: jax.random.normal(k, shp, dtype=jnp.float32)          # nn.Embedding ~ N(0,1)
    lin = lambda k, shp: (jax.random.normal(k, shp, dtype=jnp.float32)
                          / jnp.sqrt(float(shp[0])))                           # ~ nn.Linear scale
    return {
        # nn.Embedding weights (the learned query sets)
        "txt_q": emb(ks[0], (n_txt_queries, txt_hidden_dim)),
        "ref_q": emb(ks[1], (n_ref_queries, ref_hidden_dim)),
        # txt_attn: Attention(dim=txt_hidden_dim, dim_context=txt_ctx_dim) (bias-free)
        "txt_wq": lin(ks[2], (txt_hidden_dim, di)),
        "txt_wk": lin(ks[3], (txt_ctx_dim, di)),
        "txt_wv": lin(ks[4], (txt_ctx_dim, di)),
        "txt_wo": lin(ks[5], (di, txt_hidden_dim)),
        # ref_attn: Attention(dim=ref_hidden_dim, dim_context=ref_ctx_dim)
        "ref_wq": lin(ks[6], (ref_hidden_dim, di)),
        "ref_wk": lin(ks[7], (ref_ctx_dim, di)),
        "ref_wv": lin(ks[8], (ref_ctx_dim, di)),
        "ref_wo": lin(ks[9], (di, ref_hidden_dim)),
    }


def style_module_forward(params, txt_enc, ref_enc, *, heads, dim_head):
    """Mirrors StyleModule.forward.

    txt_enc : [B, T_txt, txt_ctx_dim]  stand-in for self.bert(txt_tokens)[0]
    ref_enc : [B, T_ref, ref_ctx_dim]  stand-in for
              self.reference_speech_encoder(tokenize_audio(self.codec, ref)[0])
    """
    # TODO(synk): BERTConditioner (pretrained HF model), AudioTokenizer and
    # SpeechPromptEncoder are external pretrained networks; their outputs are
    # supplied directly as txt_enc / ref_enc.
    prompt_rep, ref_rep = fused_style_cross_attention(
        params, txt_enc, ref_enc, heads=heads, dim_head=dim_head)

    # TODO(synk): Variation_Net is not defined in the reference source; its
    # loss cannot be reproduced, so a zero placeholder is returned.
    variation_loss = jnp.zeros((), dtype=jnp.float32)
    return variation_loss, prompt_rep, ref_rep


# ----------------------------------------------------------------------------
# Pure-JAX reference for correctness checking
# ----------------------------------------------------------------------------
def _ref_cross_attention(q_emb, ctx, wq, wk, wv, wo, *, heads, dim_head):
    hp = jax.lax.Precision.HIGHEST
    B = ctx.shape[0]
    x = jnp.broadcast_to(q_emb[None], (B,) + q_emb.shape)
    q = jnp.einsum('bnd,de->bne', x, wq, precision=hp)
    k = jnp.einsum('btd,de->bte', ctx, wk, precision=hp)
    v = jnp.einsum('btd,de->bte', ctx, wv, precision=hp)
    split = lambda t_: t_.reshape(t_.shape[0], t_.shape[1], heads, dim_head).transpose(0, 2, 1, 3)
    q, k, v = split(q), split(k), split(v)
    s = jnp.einsum('bhqd,bhkd->bhqk', q, k, precision=hp) * (dim_head ** -0.5)
    p = jax.nn.softmax(s, axis=-1)
    o = jnp.einsum('bhqk,bhkd->bhqd', p, v, precision=hp)
    o = o.transpose(0, 2, 1, 3).reshape(B, q_emb.shape[0], heads * dim_head)
    return jnp.einsum('bnd,de->bne', o, wo, precision=hp)


if __name__ == "__main__":
    # Small shapes consistent with the module's constructor arguments.
    B = 2
    n_txt_queries, txt_hidden_dim, txt_ctx_dim, T_txt = 8, 32, 32, 16
    n_ref_queries, ref_hidden_dim, ref_ctx_dim, T_ref = 8, 32, 32, 16
    dim_head, heads = 16, 2

    key = jax.random.PRNGKey(0)
    k_params, k_txt, k_ref = jax.random.split(key, 3)

    params = make_style_module_params(
        k_params,
        n_txt_queries=n_txt_queries, txt_hidden_dim=txt_hidden_dim,
        txt_ctx_dim=txt_ctx_dim,
        n_ref_queries=n_ref_queries, ref_hidden_dim=ref_hidden_dim,
        ref_ctx_dim=ref_ctx_dim,
        dim_head=dim_head, heads=heads)

    txt_enc = jax.random.normal(k_txt, (B, T_txt, txt_ctx_dim), dtype=jnp.float32)
    ref_enc = jax.random.normal(k_ref, (B, T_ref, ref_ctx_dim), dtype=jnp.float32)

    fwd = jax.jit(functools.partial(style_module_forward,
                                    heads=heads, dim_head=dim_head))
    variation_loss, prompt_rep, ref_rep = fwd(params, txt_enc, ref_enc)
    jax.block_until_ready((variation_loss, prompt_rep, ref_rep))

    # Correctness check against pure-JAX reference. Tolerance is 2e-3 because
    # the kernel uses the EUP approximate reciprocal for the softmax divide.
    prompt_ref = _ref_cross_attention(params["txt_q"], txt_enc,
                                      params["txt_wq"], params["txt_wk"],
                                      params["txt_wv"], params["txt_wo"],
                                      heads=heads, dim_head=dim_head)
    ref_ref = _ref_cross_attention(params["ref_q"], ref_enc,
                                   params["ref_wq"], params["ref_wk"],
                                   params["ref_wv"], params["ref_wo"],
                                   heads=heads, dim_head=dim_head)

    assert prompt_rep.shape == (B, n_txt_queries, txt_hidden_dim)
    assert ref_rep.shape == (B, n_ref_queries, ref_hidden_dim)
    err_p = float(jnp.max(jnp.abs(prompt_rep - prompt_ref)))
    err_r = float(jnp.max(jnp.abs(ref_rep - ref_ref)))
    assert jnp.allclose(prompt_rep, prompt_ref, atol=2e-3, rtol=2e-3), err_p
    assert jnp.allclose(ref_rep, ref_ref, atol=2e-3, rtol=2e-3), err_r

    print("KERNEL_OK")
</pallas_src>

<mosaic_0001>
module attributes {stable_mosaic.version = 11 : i64} {
  func.func @_style_attn_kernel(%arg0: i32, %arg1: memref<8x32xf32, #tpu.memory_space<vmem>>, %arg2: memref<32x32xf32, #tpu.memory_space<vmem>>, %arg3: memref<32x32xf32, #tpu.memory_space<vmem>>, %arg4: memref<32x32xf32, #tpu.memory_space<vmem>>, %arg5: memref<32x32xf32, #tpu.memory_space<vmem>>, %arg6: memref<32x128xf32, #tpu.memory_space<vmem>>, %arg7: memref<8x32xf32, #tpu.memory_space<vmem>>, %arg8: memref<32x32xf32, #tpu.memory_space<vmem>>, %arg9: memref<32x32xf32, #tpu.memory_space<vmem>>, %arg10: memref<32x32xf32, #tpu.memory_space<vmem>>, %arg11: memref<32x32xf32, #tpu.memory_space<vmem>>, %arg12: memref<32x128xf32, #tpu.memory_space<vmem>>, %arg13: memref<16x128xf32, #tpu.memory_space<vmem>>, %arg14: memref<16x128xf32, #tpu.memory_space<vmem>>) attributes {dimension_semantics = [#tpu.dimension_semantics<arbitrary>], iteration_bounds = array<i64: 1>, scalar_prefetch = 0 : i64, scratch_operands = 0 : i64, tpu.core_type = #tpu.core_type<tc>, window_params = [{pipeline_mode = #tpu.pipeline_mode<synchronous>, transform_indices = @transform_0, window_bounds = array<i64: 8, 32>}, {pipeline_mode = #tpu.pipeline_mode<synchronous>, transform_indices = @transform_1, window_bounds = array<i64: 32, 32>}, {pipeline_mode = #tpu.pipeline_mode<synchronous>, transform_indices = @transform_2, window_bounds = array<i64: 32, 32>}, {pipeline_mode = #tpu.pipeline_mode<synchronous>, transform_indices = @transform_3, window_bounds = array<i64: 32, 32>}, {pipeline_mode = #tpu.pipeline_mode<synchronous>, transform_indices = @transform_4, window_bounds = array<i64: 32, 32>}, {pipeline_mode = #tpu.pipeline_mode<synchronous>, transform_indices = @transform_5, window_bounds = array<i64: 32, 128>}, {pipeline_mode = #tpu.pipeline_mode<synchronous>, transform_indices = @transform_6, window_bounds = array<i64: 8, 32>}, {pipeline_mode = #tpu.pipeline_mode<synchronous>, transform_indices = @transform_7, window_bounds = array<i64: 32, 32>}, {pipeline_mode = #tpu.pipeline_mode<synchronous>, transform_indices = @transform_8, window_bounds = array<i64: 32, 32>}, {pipeline_mode = #tpu.pipeline_mode<synchronous>, transform_indices = @transform_9, window_bounds = array<i64: 32, 32>}, {pipeline_mode = #tpu.pipeline_mode<synchronous>, transform_indices = @transform_10, window_bounds = array<i64: 32, 32>}, {pipeline_mode = #tpu.pipeline_mode<synchronous>, transform_indices = @transform_11, window_bounds = array<i64: 32, 128>}, {pipeline_mode = #tpu.pipeline_mode<synchronous>, transform_indices = @transform_12, window_bounds = array<i64: 16, 128>}, {pipeline_mode = #tpu.pipeline_mode<synchronous>, transform_indices = @transform_13, window_bounds = array<i64: 16, 128>}]} {
    %c0 = arith.constant 0 : index
    %c0_0 = arith.constant 0 : index
    %0 = vector.load %arg1[%c0, %c0_0] : memref<8x32xf32, #tpu.memory_space<vmem>>, vector<8x32xf32>
    %c0_1 = arith.constant 0 : index
    %c0_2 = arith.constant 0 : index
    %1 = vector.load %arg2[%c0_1, %c0_2] : memref<32x32xf32, #tpu.memory_space<vmem>>, vector<32x32xf32>
    %c0_3 = arith.constant 0 : index
    %c0_4 = arith.constant 0 : index
    %2 = vector.load %arg3[%c0_3, %c0_4] : memref<32x32xf32, #tpu.memory_space<vmem>>, vector<32x32xf32>
    %c0_5 = arith.constant 0 : index
    %c0_6 = arith.constant 0 : index
    %3 = vector.load %arg4[%c0_5, %c0_6] : memref<32x32xf32, #tpu.memory_space<vmem>>, vector<32x32xf32>
    %c0_7 = arith.constant 0 : index
    %c0_8 = arith.constant 0 : index
    %4 = vector.load %arg5[%c0_7, %c0_8] : memref<32x32xf32, #tpu.memory_space<vmem>>, vector<32x32xf32>
    %c0_9 = arith.constant 0 : index
    %c0_10 = arith.constant 0 : index
    %5 = vector.load %arg6[%c0_9, %c0_10] : memref<32x128xf32, #tpu.memory_space<vmem>>, vector<32x128xf32>
    %cst = arith.constant dense<0.000000e+00> : vector<8x32xf32>
    %6 = tpu.matmul %0, %2, %cst {dimension_numbers = #tpu.dot_dimension_numbers<[1], [0], [0], [1], [0, 0, 1, 1], [], []>} : vector<8x32xf32>, vector<32x32xf32>, vector<8x32xf32> -> vector<8x32xf32>
    %cst_11 = arith.constant dense<0.000000e+00> : vector<32x32xf32>
    %7 = tpu.matmul %1, %3, %cst_11 {dimension_numbers = #tpu.dot_dimension_numbers<[1], [0], [0], [1], [0, 0, 1, 1], [], []>} : vector<32x32xf32>, vector<32x32xf32>, vector<32x32xf32> -> vector<32x32xf32>
    %cst_12 = arith.constant dense<0.000000e+00> : vector<32x32xf32>
    %8 = tpu.matmul %1, %4, %cst_12 {dimension_numbers = #tpu.dot_dimension_numbers<[1], [0], [0], [1], [0, 0, 1, 1], [], []>} : vector<32x32xf32>, vector<32x32xf32>, vector<32x32xf32> -> vector<32x32xf32>
    %9 = vector.extract_strided_slice %7 {offsets = [0, 0], sizes = [16, 32], strides = [1, 1]} : vector<32x32xf32> to vector<16x32xf32>
    %10 = vector.extract_strided_slice %8 {offsets = [0, 0], sizes = [16, 32], strides = [1, 1]} : vector<32x32xf32> to vector<16x32xf32>
    %11 = vector.extract_strided_slice %6 {offsets = [0, 0], sizes = [8, 16], strides = [1, 1]} : vector<8x32xf32> to vector<8x16xf32>
    %12 = vector.extract_strided_slice %9 {offsets = [0, 0], sizes = [16, 16], strides = [1, 1]} : vector<16x32xf32> to vector<16x16xf32>
    %13 = vector.extract_strided_slice %10 {offsets = [0, 0], sizes = [16, 16], strides = [1, 1]} : vector<16x32xf32> to vector<16x16xf32>
    %cst_13 = arith.constant dense<0.000000e+00> : vector<8x16xf32>
    %14 = tpu.matmul %11, %12, %cst_13 {dimension_numbers = #tpu.dot_dimension_numbers<[1], [1], [0], [0], [0, 0, 1, 0], [], []>} : vector<8x16xf32>, vector<16x16xf32>, vector<8x16xf32> -> vector<8x16xf32>
    %cst_14 = arith.constant 2.500000e-01 : f32
    %15 = vector.broadcast %cst_14 : f32 to vector<8x16xf32>
    %16 = arith.mulf %14, %15 : vector<8x16xf32>
    %cst_15 = arith.constant dense<0xFF800000> : vector<8xf32>
    %17 = vector.multi_reduction <maximumf>, %16, %cst_15 [1] : vector<8x16xf32> to vector<8xf32>
    %18 = vector.shape_cast %17 : vector<8xf32> to vector<8x1xf32>
    %19 = vector.broadcast %18 : vector<8x1xf32> to vector<8x16xf32>
    %20 = arith.subf %16, %19 : vector<8x16xf32>
    %21 = math.exp %20 : vector<8x16xf32>
    %cst_16 = arith.constant dense<0.000000e+00> : vector<8xf32>
    %22 = vector.multi_reduction <add>, %21, %cst_16 [1] : vector<8x16xf32> to vector<8xf32>
    %23 = vector.shape_cast %22 : vector<8xf32> to vector<8x1xf32>
    %24 = tpu.reciprocal %23 {approx = true} : vector<8x1xf32> -> vector<8x1xf32>
    %25 = vector.broadcast %24 : vector<8x1xf32> to vector<8x16xf32>
    %26 = arith.mulf %21, %25 : vector<8x16xf32>
    %cst_17 = arith.constant dense<0.000000e+00> : vector<8x16xf32>
    %27 = tpu.matmul %26, %13, %cst_17 {dimension_numbers = #tpu.dot_dimension_numbers<[1], [0], [0], [1], [0, 0, 1, 1], [], []>} : vector<8x16xf32>, vector<16x16xf32>, vector<8x16xf32> -> vector<8x16xf32>
    %28 = vector.extract_strided_slice %5 {offsets = [0, 0], sizes = [16, 128], strides = [1, 1]} : vector<32x128xf32> to vector<16x128xf32>
    %cst_18 = arith.constant dense<0.000000e+00> : vector<8x128xf32>
    %29 = tpu.matmul %27, %28, %cst_18 {dimension_numbers = #tpu.dot_dimension_numbers<[1], [0], [0], [1], [0, 0, 1, 1], [], []>} : vector<8x16xf32>, vector<16x128xf32>, vector<8x128xf32> -> vector<8x128xf32>
    %30 = vector.extract_strided_slice %6 {offsets = [0, 16], sizes = [8, 16], strides = [1, 1]} : vector<8x32xf32> to vector<8x16xf32>
    %31 = vector.extract_strided_slice %9 {offsets = [0, 16], sizes = [16, 16], strides = [1, 1]} : vector<16x32xf32> to vector<16x16xf32>
    %32 = vector.extract_strided_slice %10 {offsets = [0, 16], sizes = [16, 16], strides = [1, 1]} : vector<16x32xf32> to vector<16x16xf32>
    %cst_19 = arith.constant dense<0.000000e+00> : vector<8x16xf32>
    %33 = tpu.matmul %30, %31, %cst_19 {dimension_numbers = #tpu.dot_dimension_numbers<[1], [1], [0], [0], [0, 0, 1, 0], [], []>} : vector<8x16xf32>, vector<16x16xf32>, vector<8x16xf32> -> vector<8x16xf32>
    %cst_20 = arith.constant 2.500000e-01 : f32
    %34 = vector.broadcast %cst_20 : f32 to vector<8x16xf32>
    %35 = arith.mulf %33, %34 : vector<8x16xf32>
    %cst_21 = arith.constant dense<0xFF800000> : vector<8xf32>
    %36 = vector.multi_reduction <maximumf>, %35, %cst_21 [1] : vector<8x16xf32> to vector<8xf32>
    %37 = vector.shape_cast %36 : vector<8xf32> to vector<8x1xf32>
    %38 = vector.broadcast %37 : vector<8x1xf32> to vector<8x16xf32>
    %39 = arith.subf %35, %38 : vector<8x16xf32>
    %40 = math.exp %39 : vector<8x16xf32>
    %cst_22 = arith.constant dense<0.000000e+00> : vector<8xf32>
    %41 = vector.multi_reduction <add>, %40, %cst_22 [1] : vector<8x16xf32> to vector<8xf32>
    %42 = vector.shape_cast %41 : vector<8xf32> to vector<8x1xf32>
    %43 = tpu.reciprocal %42 {approx = true} : vector<8x1xf32> -> vector<8x1xf32>
    %44 = vector.broadcast %43 : vector<8x1xf32> to vector<8x16xf32>
    %45 = arith.mulf %40, %44 : vector<8x16xf32>
    %cst_23 = arith.constant dense<0.000000e+00> : vector<8x16xf32>
    %46 = tpu.matmul %45, %32, %cst_23 {dimension_numbers = #tpu.dot_dimension_numbers<[1], [0], [0], [1], [0, 0, 1, 1], [], []>} : vector<8x16xf32>, vector<16x16xf32>, vector<8x16xf32> -> vector<8x16xf32>
    %47 = vector.extract_strided_slice %5 {offsets = [16, 0], sizes = [16, 128], strides = [1, 1]} : vector<32x128xf32> to vector<16x128xf32>
    %cst_24 = arith.constant dense<0.000000e+00> : vector<8x128xf32>
    %48 = tpu.matmul %46, %47, %cst_24 {dimension_numbers = #tpu.dot_dimension_numbers<[1], [0], [0], [1], [0, 0, 1, 1], [], []>} : vector<8x16xf32>, vector<16x128xf32>, vector<8x128xf32> -> vector<8x128xf32>
    %49 = arith.addf %29, %48 : vector<8x128xf32>
    %c0_25 = arith.constant 0 : index
    %c0_26 = arith.constant 0 : index
    %50 = vector.load %arg13[%c0_25, %c0_26] : memref<16x128xf32, #tpu.memory_space<vmem>>, vector<8x128xf32>
    tpu.vector_store %arg13[%c0_25, %c0_26], %49 {strides = array<i32>} : memref<16x128xf32, #tpu.memory_space<vmem>>, vector<8x128xf32>,
    %51 = vector.extract_strided_slice %7 {offsets = [16, 0], sizes = [16, 32], strides = [1, 1]} : vector<32x32xf32> to vector<16x32xf32>
    %52 = vector.extract_strided_slice %8 {offsets = [16, 0], sizes = [16, 32], strides = [1, 1]} : vector<32x32xf32> to vector<16x32xf32>
    %53 = vector.extract_strided_slice %6 {offsets = [0, 0], sizes = [8, 16], strides = [1, 1]} : vector<8x32xf32> to vector<8x16xf32>
    %54 = vector.extract_strided_slice %51 {offsets = [0, 0], sizes = [16, 16], strides = [1, 1]} : vector<16x32xf32> to vector<16x16xf32>
    %55 = vector.extract_strided_slice %52 {offsets = [0, 0], sizes = [16, 16], strides = [1, 1]} : vector<16x32xf32> to vector<16x16xf32>
    %cst_27 = arith.constant dense<0.000000e+00> : vector<8x16xf32>
    %56 = tpu.matmul %53, %54, %cst_27 {dimension_numbers = #tpu.dot_dimension_numbers<[1], [1], [0], [0], [0, 0, 1, 0], [], []>} : vector<8x16xf32>, vector<16x16xf32>, vector<8x16xf32> -> vector<8x16xf32>
    %cst_28 = arith.constant 2.500000e-01 : f32
    %57 = vector.broadcast %cst_28 : f32 to vector<8x16xf32>
    %58 = arith.mulf %56, %57 : vector<8x16xf32>
    %cst_29 = arith.constant dense<0xFF800000> : vector<8xf32>
    %59 = vector.multi_reduction <maximumf>, %58, %cst_29 [1] : vector<8x16xf32> to vector<8xf32>
    %60 = vector.shape_cast %59 : vector<8xf32> to vector<8x1xf32>
    %61 = vector.broadcast %60 : vector<8x1xf32> to vector<8x16xf32>
    %62 = arith.subf %58, %61 : vector<8x16xf32>
    %63 = math.exp %62 : vector<8x16xf32>
    %cst_30 = arith.constant dense<0.000000e+00> : vector<8xf32>
    %64 = vector.multi_reduction <add>, %63, %cst_30 [1] : vector<8x16xf32> to vector<8xf32>
    %65 = vector.shape_cast %64 : vector<8xf32> to vector<8x1xf32>
    %66 = tpu.reciprocal %65 {approx = true} : vector<8x1xf32> -> vector<8x1xf32>
    %67 = vector.broadcast %66 : vector<8x1xf32> to vector<8x16xf32>
    %68 = arith.mulf %63, %67 : vector<8x16xf32>
    %cst_31 = arith.constant dense<0.000000e+00> : vector<8x16xf32>
    %69 = tpu.matmul %68, %55, %cst_31 {dimension_numbers = #tpu.dot_dimension_numbers<[1], [0], [0], [1], [0, 0, 1, 1], [], []>} : vector<8x16xf32>, vector<16x16xf32>, vector<8x16xf32> -> vector<8x16xf32>
    %70 = vector.extract_strided_slice %5 {offsets = [0, 0], sizes = [16, 128], strides = [1, 1]} : vector<32x128xf32> to vector<16x128xf32>
    %cst_32 = arith.constant dense<0.000000e+00> : vector<8x128xf32>
    %71 = tpu.matmul %69, %70, %cst_32 {dimension_numbers = #tpu.dot_dimension_numbers<[1], [0], [0], [1], [0, 0, 1, 1], [], []>} : vector<8x16xf32>, vector<16x128xf32>, vector<8x128xf32> -> vector<8x128xf32>
    %72 = vector.extract_strided_slice %6 {offsets = [0, 16], sizes = [8, 16], strides = [1, 1]} : vector<8x32xf32> to vector<8x16xf32>
    %73 = vector.extract_strided_slice %51 {offsets = [0, 16], sizes = [16, 16], strides = [1, 1]} : vector<16x32xf32> to vector<16x16xf32>
    %74 = vector.extract_strided_slice %52 {offsets = [0, 16], sizes = [16, 16], strides = [1, 1]} : vector<16x32xf32> to vector<16x16xf32>
    %cst_33 = arith.constant dense<0.000000e+00> : vector<8x16xf32>
    %75 = tpu.matmul %72, %73, %cst_33 {dimension_numbers = #tpu.dot_dimension_numbers<[1], [1], [0], [0], [0, 0, 1, 0], [], []>} : vector<8x16xf32>, vector<16x16xf32>, vector<8x16xf32> -> vector<8x16xf32>
    %cst_34 = arith.constant 2.500000e-01 : f32
    %76 = vector.broadcast %cst_34 : f32 to vector<8x16xf32>
    %77 = arith.mulf %75, %76 : vector<8x16xf32>
    %cst_35 = arith.constant dense<0xFF800000> : vector<8xf32>
    %78 = vector.multi_reduction <maximumf>, %77, %cst_35 [1] : vector<8x16xf32> to vector<8xf32>
    %79 = vector.shape_cast %78 : vector<8xf32> to vector<8x1xf32>
    %80 = vector.broadcast %79 : vector<8x1xf32> to vector<8x16xf32>
    %81 = arith.subf %77, %80 : vector<8x16xf32>
    %82 = math.exp %81 : vector<8x16xf32>
    %cst_36 = arith.constant dense<0.000000e+00> : vector<8xf32>
    %83 = vector.multi_reduction <add>, %82, %cst_36 [1] : vector<8x16xf32> to vector<8xf32>
    %84 = vector.shape_cast %83 : vector<8xf32> to vector<8x1xf32>
    %85 = tpu.reciprocal %84 {approx = true} : vector<8x1xf32> -> vector<8x1xf32>
    %86 = vector.broadcast %85 : vector<8x1xf32> to vector<8x16xf32>
    %87 = arith.mulf %82, %86 : vector<8x16xf32>
    %cst_37 = arith.constant dense<0.000000e+00> : vector<8x16xf32>
    %88 = tpu.matmul %87, %74, %cst_37 {dimension_numbers = #tpu.dot_dimension_numbers<[1], [0], [0], [1], [0, 0, 1, 1], [], []>} : vector<8x16xf32>, vector<16x16xf32>, vector<8x16xf32> -> vector<8x16xf32>
    %89 = vector.extract_strided_slice %5 {offsets = [16, 0], sizes = [16, 128], strides = [1, 1]} : vector<32x128xf32> to vector<16x128xf32>
    %cst_38 = arith.constant dense<0.000000e+00> : vector<8x128xf32>
    %90 = tpu.matmul %88, %89, %cst_38 {dimension_numbers = #tpu.dot_dimension_numbers<[1], [0], [0], [1], [0, 0, 1, 1], [], []>} : vector<8x16xf32>, vector<16x128xf32>, vector<8x128xf32> -> vector<8x128xf32>
    %91 = arith.addf %71, %90 : vector<8x128xf32>
    %c8 = arith.constant 8 : index
    %c0_39 = arith.constant 0 : index
    %92 = vector.load %arg13[%c8, %c0_39] : memref<16x128xf32, #tpu.memory_space<vmem>>, vector<8x128xf32>
    tpu.vector_store %arg13[%c8, %c0_39], %91 {strides = array<i32>} : memref<16x128xf32, #tpu.memory_space<vmem>>, vector<8x128xf32>,
    %c0_40 = arith.constant 0 : index
    %c0_41 = arith.constant 0 : index
    %93 = vector.load %arg7[%c0_40, %c0_41] : memref<8x32xf32, #tpu.memory_space<vmem>>, vector<8x32xf32>
    %c0_42 = arith.constant 0 : index
    %c0_43 = arith.constant 0 : index
    %94 = vector.load %arg8[%c0_42, %c0_43] : memref<32x32xf32, #tpu.memory_space<vmem>>, vector<32x32xf32>
    %c0_44 = arith.constant 0 : index
    %c0_45 = arith.constant 0 : index
    %95 = vector.load %arg9[%c0_44, %c0_45] : memref<32x32xf32, #tpu.memory_space<vmem>>, vector<32x32xf32>
    %c0_46 = arith.constant 0 : index
    %c0_47 = arith.constant 0 : index
    %96 = vector.load %arg10[%c0_46, %c0_47] : memref<32x32xf32, #tpu.memory_space<vmem>>, vector<32x32xf32>
    %c0_48 = arith.constant 0 : index
    %c0_49 = arith.constant 0 : index
    %97 = vector.load %arg11[%c0_48, %c0_49] : memref<32x32xf32, #tpu.memory_space<vmem>>, vector<32x32xf32>
    %c0_50 = arith.constant 0 : index
    %c0_51 = arith.constant 0 : index
    %98 = vector.load %arg12[%c0_50, %c0_51] : memref<32x128xf32, #tpu.memory_space<vmem>>, vector<32x128xf32>
    %cst_52 = arith.constant dense<0.000000e+00> : vector<8x32xf32>
    %99 = tpu.matmul %93, %95, %cst_52 {dimension_numbers = #tpu.dot_dimension_numbers<[1], [0], [0], [1], [0, 0, 1, 1], [], []>} : vector<8x32xf32>, vector<32x32xf32>, vector<8x32xf32> -> vector<8x32xf32>
    %cst_53 = arith.constant dense<0.000000e+00> : vector<32x32xf32>
    %100 = tpu.matmul %94, %96, %cst_53 {dimension_numbers = #tpu.dot_dimension_numbers<[1], [0], [0], [1], [0, 0, 1, 1], [], []>} : vector<32x32xf32>, vector<32x32xf32>, vector<32x32xf32> -> vector<32x32xf32>
    %cst_54 = arith.constant dense<0.000000e+00> : vector<32x32xf32>
    %101 = tpu.matmul %94, %97, %cst_54 {dimension_numbers = #tpu.dot_dimension_numbers<[1], [0], [0], [1], [0, 0, 1, 1], [], []>} : vector<32x32xf32>, vector<32x32xf32>, vector<32x32xf32> -> vector<32x32xf32>
    %102 = vector.extract_strided_slice %100 {offsets = [0, 0], sizes = [16, 32], strides = [1, 1]} : vector<32x32xf32> to vector<16x32xf32>
    %103 = vector.extract_strided_slice %101 {offsets = [0, 0], sizes = [16, 32], strides = [1, 1]} : vector<32x32xf32> to vector<16x32xf32>
    %104 = vector.extract_strided_slice %99 {offsets = [0, 0], sizes = [8, 16], strides = [1, 1]} : vector<8x32xf32> to vector<8x16xf32>
    %105 = vector.extract_strided_slice %102 {offsets = [0, 0], sizes = [16, 16], strides = [1, 1]} : vector<16x32xf32> to vector<16x16xf32>
    %106 = vector.extract_strided_slice %103 {offsets = [0, 0], sizes = [16, 16], strides = [1, 1]} : vector<16x32xf32> to vector<16x16xf32>
    %cst_55 = arith.constant dense<0.000000e+00> : vector<8x16xf32>
    %107 = tpu.matmul %104, %105, %cst_55 {dimension_numbers = #tpu.dot_dimension_numbers<[1], [1], [0], [0], [0, 0, 1, 0], [], []>} : vector<8x16xf32>, vector<16x16xf32>, vector<8x16xf32> -> vector<8x16xf32>
    %cst_56 = arith.constant 2.500000e-01 : f32
    %108 = vector.broadcast %cst_56 : f32 to vector<8x16xf32>
    %109 = arith.mulf %107, %108 : vector<8x16xf32>
    %cst_57 = arith.constant dense<0xFF800000> : vector<8xf32>
    %110 = vector.multi_reduction <maximumf>, %109, %cst_57 [1] : vector<8x16xf32> to vector<8xf32>
    %111 = vector.shape_cast %110 : vector<8xf32> to vector<8x1xf32>
    %112 = vector.broadcast %111 : vector<8x1xf32> to vector<8x16xf32>
    %113 = arith.subf %109, %112 : vector<8x16xf32>
    %114 = math.exp %113 : vector<8x16xf32>
    %cst_58 = arith.constant dense<0.000000e+00> : vector<8xf32>
    %115 = vector.multi_reduction <add>, %114, %cst_58 [1] : vector<8x16xf32> to vector<8xf32>
    %116 = vector.shape_cast %115 : vector<8xf32> to vector<8x1xf32>
    %117 = tpu.reciprocal %116 {approx = true} : vector<8x1xf32> -> vector<8x1xf32>
    %118 = vector.broadcast %117 : vector<8x1xf32> to vector<8x16xf32>
    %119 = arith.mulf %114, %118 : vector<8x16xf32>
    %cst_59 = arith.constant dense<0.000000e+00> : vector<8x16xf32>
    %120 = tpu.matmul %119, %106, %cst_59 {dimension_numbers = #tpu.dot_dimension_numbers<[1], [0], [0], [1], [0, 0, 1, 1], [], []>} : vector<8x16xf32>, vector<16x16xf32>, vector<8x16xf32> -> vector<8x16xf32>
    %121 = vector.extract_strided_slice %98 {offsets = [0, 0], sizes = [16, 128], strides = [1, 1]} : vector<32x128xf32> to vector<16x128xf32>
    %cst_60 = arith.constant dense<0.000000e+00> : vector<8x128xf32>
    %122 = tpu.matmul %120, %121, %cst_60 {dimension_numbers = #tpu.dot_dimension_numbers<[1], [0], [0], [1], [0, 0, 1, 1], [], []>} : vector<8x16xf32>, vector<16x128xf32>, vector<8x128xf32> -> vector<8x128xf32>
    %123 = vector.extract_strided_slice %99 {offsets = [0, 16], sizes = [8, 16], strides = [1, 1]} : vector<8x32xf32> to vector<8x16xf32>
    %124 = vector.extract_strided_slice %102 {offsets = [0, 16], sizes = [16, 16], strides = [1, 1]} : vector<16x32xf32> to vector<16x16xf32>
    %125 = vector.extract_strided_slice %103 {offsets = [0, 16], sizes = [16, 16], strides = [1, 1]} : vector<16x32xf32> to vector<16x16xf32>
    %cst_61 = arith.constant dense<0.000000e+00> : vector<8x16xf32>
    %126 = tpu.matmul %123, %124, %cst_61 {dimension_numbers = #tpu.dot_dimension_numbers<[1], [1], [0], [0], [0, 0, 1, 0], [], []>} : vector<8x16xf32>, vector<16x16xf32>, vector<8x16xf32> -> vector<8x16xf32>
    %cst_62 = arith.constant 2.500000e-01 : f32
    %127 = vector.broadcast %cst_62 : f32 to vector<8x16xf32>
    %128 = arith.mulf %126, %127 : vector<8x16xf32>
    %cst_63 = arith.constant dense<0xFF800000> : vector<8xf32>
    %129 = vector.multi_reduction <maximumf>, %128, %cst_63 [1] : vector<8x16xf32> to vector<8xf32>
    %130 = vector.shape_cast %129 : vector<8xf32> to vector<8x1xf32>
    %131 = vector.broadcast %130 : vector<8x1xf32> to vector<8x16xf32>
    %132 = arith.subf %128, %131 : vector<8x16xf32>
    %133 = math.exp %132 : vector<8x16xf32>
    %cst_64 = arith.constant dense<0.000000e+00> : vector<8xf32>
    %134 = vector.multi_reduction <add>, %133, %cst_64 [1] : vector<8x16xf32> to vector<8xf32>
    %135 = vector.shape_cast %134 : vector<8xf32> to vector<8x1xf32>
    %136 = tpu.reciprocal %135 {approx = true} : vector<8x1xf32> -> vector<8x1xf32>
    %137 = vector.broadcast %136 : vector<8x1xf32> to vector<8x16xf32>
    %138 = arith.mulf %133, %137 : vector<8x16xf32>
    %cst_65 = arith.constant dense<0.000000e+00> : vector<8x16xf32>
    %139 = tpu.matmul %138, %125, %cst_65 {dimension_numbers = #tpu.dot_dimension_numbers<[1], [0], [0], [1], [0, 0, 1, 1], [], []>} : vector<8x16xf32>, vector<16x16xf32>, vector<8x16xf32> -> vector<8x16xf32>
    %140 = vector.extract_strided_slice %98 {offsets = [16, 0], sizes = [16, 128], strides = [1, 1]} : vector<32x128xf32> to vector<16x128xf32>
    %cst_66 = arith.constant dense<0.000000e+00> : vector<8x128xf32>
    %141 = tpu.matmul %139, %140, %cst_66 {dimension_numbers = #tpu.dot_dimension_numbers<[1], [0], [0], [1], [0, 0, 1, 1], [], []>} : vector<8x16xf32>, vector<16x128xf32>, vector<8x128xf32> -> vector<8x128xf32>
    %142 = arith.addf %122, %141 : vector<8x128xf32>
    %c0_67 = arith.constant 0 : index
    %c0_68 = arith.constant 0 : index
    %143 = vector.load %arg14[%c0_67, %c0_68] : memref<16x128xf32, #tpu.memory_space<vmem>>, vector<8x128xf32>
    tpu.vector_store %arg14[%c0_67, %c0_68], %142 {strides = array<i32>} : memref<16x128xf32, #tpu.memory_space<vmem>>, vector<8x128xf32>,
    %144 = vector.extract_strided_slice %100 {offsets = [16, 0], sizes = [16, 32], strides = [1, 1]} : vector<32x32xf32> to vector<16x32xf32>
    %145 = vector.extract_strided_slice %101 {offsets = [16, 0], sizes = [16, 32], strides = [1, 1]} : vector<32x32xf32> to vector<16x32xf32>
    %146 = vector.extract_strided_slice %99 {offsets = [0, 0], sizes = [8, 16], strides = [1, 1]} : vector<8x32xf32> to vector<8x16xf32>
    %147 = vector.extract_strided_slice %144 {offsets = [0, 0], sizes = [16, 16], strides = [1, 1]} : vector<16x32xf32> to vector<16x16xf32>
    %148 = vector.extract_strided_slice %145 {offsets = [0, 0], sizes = [16, 16], strides = [1, 1]} : vector<16x32xf32> to vector<16x16xf32>
    %cst_69 = arith.constant dense<0.000000e+00> : vector<8x16xf32>
    %149 = tpu.matmul %146, %147, %cst_69 {dimension_numbers = #tpu.dot_dimension_numbers<[1], [1], [0], [0], [0, 0, 1, 0], [], []>} : vector<8x16xf32>, vector<16x16xf32>, vector<8x16xf32> -> vector<8x16xf32>
    %cst_70 = arith.constant 2.500000e-01 : f32
    %150 = vector.broadcast %cst_70 : f32 to vector<8x16xf32>
    %151 = arith.mulf %149, %150 : vector<8x16xf32>
    %cst_71 = arith.constant dense<0xFF800000> : vector<8xf32>
    %152 = vector.multi_reduction <maximumf>, %151, %cst_71 [1] : vector<8x16xf32> to vector<8xf32>
    %153 = vector.shape_cast %152 : vector<8xf32> to vector<8x1xf32>
    %154 = vector.broadcast %153 : vector<8x1xf32> to vector<8x16xf32>
    %155 = arith.subf %151, %154 : vector<8x16xf32>
    %156 = math.exp %155 : vector<8x16xf32>
    %cst_72 = arith.constant dense<0.000000e+00> : vector<8xf32>
    %157 = vector.multi_reduction <add>, %156, %cst_72 [1] : vector<8x16xf32> to vector<8xf32>
    %158 = vector.shape_cast %157 : vector<8xf32> to vector<8x1xf32>
    %159 = tpu.reciprocal %158 {approx = true} : vector<8x1xf32> -> vector<8x1xf32>
    %160 = vector.broadcast %159 : vector<8x1xf32> to vector<8x16xf32>
    %161 = arith.mulf %156, %160 : vector<8x16xf32>
    %cst_73 = arith.constant dense<0.000000e+00> : vector<8x16xf32>
    %162 = tpu.matmul %161, %148, %cst_73 {dimension_numbers = #tpu.dot_dimension_numbers<[1], [0], [0], [1], [0, 0, 1, 1], [], []>} : vector<8x16xf32>, vector<16x16xf32>, vector<8x16xf32> -> vector<8x16xf32>
    %163 = vector.extract_strided_slice %98 {offsets = [0, 0], sizes = [16, 128], strides = [1, 1]} : vector<32x128xf32> to vector<16x128xf32>
    %cst_74 = arith.constant dense<0.000000e+00> : vector<8x128xf32>
    %164 = tpu.matmul %162, %163, %cst_74 {dimension_numbers = #tpu.dot_dimension_numbers<[1], [0], [0], [1], [0, 0, 1, 1], [], []>} : vector<8x16xf32>, vector<16x128xf32>, vector<8x128xf32> -> vector<8x128xf32>
    %165 = vector.extract_strided_slice %99 {offsets = [0, 16], sizes = [8, 16], strides = [1, 1]} : vector<8x32xf32> to vector<8x16xf32>
    %166 = vector.extract_strided_slice %144 {offsets = [0, 16], sizes = [16, 16], strides = [1, 1]} : vector<16x32xf32> to vector<16x16xf32>
    %167 = vector.extract_strided_slice %145 {offsets = [0, 16], sizes = [16, 16], strides = [1, 1]} : vector<16x32xf32> to vector<16x16xf32>
    %cst_75 = arith.constant dense<0.000000e+00> : vector<8x16xf32>
    %168 = tpu.matmul %165, %166, %cst_75 {dimension_numbers = #tpu.dot_dimension_numbers<[1], [1], [0], [0], [0, 0, 1, 0], [], []>} : vector<8x16xf32>, vector<16x16xf32>, vector<8x16xf32> -> vector<8x16xf32>
    %cst_76 = arith.constant 2.500000e-01 : f32
    %169 = vector.broadcast %cst_76 : f32 to vector<8x16xf32>
    %170 = arith.mulf %168, %169 : vector<8x16xf32>
    %cst_77 = arith.constant dense<0xFF800000> : vector<8xf32>
    %171 = vector.multi_reduction <maximumf>, %170, %cst_77 [1] : vector<8x16xf32> to vector<8xf32>
    %172 = vector.shape_cast %171 : vector<8xf32> to vector<8x1xf32>
    %173 = vector.broadcast %172 : vector<8x1xf32> to vector<8x16xf32>
    %174 = arith.subf %170, %173 : vector<8x16xf32>
    %175 = math.exp %174 : vector<8x16xf32>
    %cst_78 = arith.constant dense<0.000000e+00> : vector<8xf32>
    %176 = vector.multi_reduction <add>, %175, %cst_78 [1] : vector<8x16xf32> to vector<8xf32>
    %177 = vector.shape_cast %176 : vector<8xf32> to vector<8x1xf32>
    %178 = tpu.reciprocal %177 {approx = true} : vector<8x1xf32> -> vector<8x1xf32>
    %179 = vector.broadcast %178 : vector<8x1xf32> to vector<8x16xf32>
    %180 = arith.mulf %175, %179 : vector<8x16xf32>
    %cst_79 = arith.constant dense<0.000000e+00> : vector<8x16xf32>
    %181 = tpu.matmul %180, %167, %cst_79 {dimension_numbers = #tpu.dot_dimension_numbers<[1], [0], [0], [1], [0, 0, 1, 1], [], []>} : vector<8x16xf32>, vector<16x16xf32>, vector<8x16xf32> -> vector<8x16xf32>
    %182 = vector.extract_strided_slice %98 {offsets = [16, 0], sizes = [16, 128], strides = [1, 1]} : vector<32x128xf32> to vector<16x128xf32>
    %cst_80 = arith.constant dense<0.000000e+00> : vector<8x128xf32>
    %183 = tpu.matmul %181, %182, %cst_80 {dimension_numbers = #tpu.dot_dimension_numbers<[1], [0], [0], [1], [0, 0, 1, 1], [], []>} : vector<8x16xf32>, vector<16x128xf32>, vector<8x128xf32> -> vector<8x128xf32>
    %184 = arith.addf %164, %183 : vector<8x128xf32>
    %c8_81 = arith.constant 8 : index
    %c0_82 = arith.constant 0 : index
    %185 = vector.load %arg14[%c8_81, %c0_82] : memref<16x128xf32, #tpu.memory_space<vmem>>, vector<8x128xf32>
    tpu.vector_store %arg14[%c8_81, %c0_82], %184 {strides = array<i32>} : memref<16x128xf32, #tpu.memory_space<vmem>>, vector<8x128xf32>,
    return
  }
  func.func @transform_0(%arg0: i32) -> (i32, i32) {
    %c0_i32 = arith.constant 0 : i32
    %c0_i32_0 = arith.constant 0 : i32
    %c0_i32_1 = arith.constant 0 : i32
    return %c0_i32, %c0_i32_0 : i32, i32
  }
  func.func @transform_1(%arg0: i32) -> (i32, i32) {
    %c0_i32 = arith.constant 0 : i32
    %c0_i32_0 = arith.constant 0 : i32
    %c0_i32_1 = arith.constant 0 : i32
    return %c0_i32, %c0_i32_0 : i32, i32
  }
  func.func @transform_2(%arg0: i32) -> (i32, i32) {
    %c0_i32 = arith.constant 0 : i32
    %c0_i32_0 = arith.constant 0 : i32
    %c0_i32_1 = arith.constant 0 : i32
    return %c0_i32, %c0_i32_0 : i32, i32
  }
  func.func @transform_3(%arg0: i32) -> (i32, i32) {
    %c0_i32 = arith.constant 0 : i32
    %c0_i32_0 = arith.constant 0 : i32
    %c0_i32_1 = arith.constant 0 : i32
    return %c0_i32, %c0_i32_0 : i32, i32
  }
  func.func @transform_4(%arg0: i32) -> (i32, i32) {
    %c0_i32 = arith.constant 0 : i32
    %c0_i32_0 = arith.constant 0 : i32
    %c0_i32_1 = arith.constant 0 : i32
    return %c0_i32, %c0_i32_0 : i32, i32
  }
  func.func @transform_5(%arg0: i32) -> (i32, i32) {
    %c0_i32 = arith.constant 0 : i32
    %c0_i32_0 = arith.constant 0 : i32
    %c0_i32_1 = arith.constant 0 : i32
    return %c0_i32, %c0_i32_0 : i32, i32
  }
  func.func @transform_6(%arg0: i32) -> (i32, i32) {
    %c0_i32 = arith.constant 0 : i32
    %c0_i32_0 = arith.constant 0 : i32
    %c0_i32_1 = arith.constant 0 : i32
    return %c0_i32, %c0_i32_0 : i32, i32
  }
  func.func @transform_7(%arg0: i32) -> (i32, i32) {
    %c0_i32 = arith.constant 0 : i32
    %c0_i32_0 = arith.constant 0 : i32
    %c0_i32_1 = arith.constant 0 : i32
    return %c0_i32, %c0_i32_0 : i32, i32
  }
  func.func @transform_8(%arg0: i32) -> (i32, i32) {
    %c0_i32 = arith.constant 0 : i32
    %c0_i32_0 = arith.constant 0 : i32
    %c0_i32_1 = arith.constant 0 : i32
    return %c0_i32, %c0_i32_0 : i32, i32
  }
  func.func @transform_9(%arg0: i32) -> (i32, i32) {
    %c0_i32 = arith.constant 0 : i32
    %c0_i32_0 = arith.constant 0 : i32
    %c0_i32_1 = arith.constant 0 : i32
    return %c0_i32, %c0_i32_0 : i32, i32
  }
  func.func @transform_10(%arg0: i32) -> (i32, i32) {
    %c0_i32 = arith.constant 0 : i32
    %c0_i32_0 = arith.constant 0 : i32
    %c0_i32_1 = arith.constant 0 : i32
    return %c0_i32, %c0_i32_0 : i32, i32
  }
  func.func @transform_11(%arg0: i32) -> (i32, i32) {
    %c0_i32 = arith.constant 0 : i32
    %c0_i32_0 = arith.constant 0 : i32
    %c0_i32_1 = arith.constant 0 : i32
    return %c0_i32, %c0_i32_0 : i32, i32
  }
  func.func @transform_12(%arg0: i32) -> (i32, i32) {
    %c0_i32 = arith.constant 0 : i32
    %c0_i32_0 = arith.constant 0 : i32
    %c0_i32_1 = arith.constant 0 : i32
    return %c0_i32, %c0_i32_0 : i32, i32
  }
  func.func @transform_13(%arg0: i32) -> (i32, i32) {
    %c0_i32 = arith.constant 0 : i32
    %c0_i32_0 = arith.constant 0 : i32
    %c0_i32_1 = arith.constant 0 : i32
    return %c0_i32, %c0_i32_0 : i32, i32
  }
}

</mosaic_0001>

<llo_original>
// kernel: style_module_forward.1
$region0: #{style_module_forward.1}
  #allocation0 [shape = 'u32[]', space=smem, size = 0x4, offset = 0x4, fixed_abs, tag = 'smem constant byte address 0x4 - core index']
  #allocation1 [shape = 'u32[144,128]{1,0:T(1,128)}', space=vmem, size = 0x12000, scoped, tag = 'internal scratch']
  %s0 = inlined_call_operand.vmem [shape: f32[8,32], index: 0, kind: input, shape index: {}]
  %s1 = inlined_call_operand.vmem [shape: f32[32,32], index: 1, kind: input, shape index: {}]
  %s2 = inlined_call_operand.vmem [shape: f32[32,32], index: 2, kind: input, shape index: {}]
  %s3 = inlined_call_operand.vmem [shape: f32[32,32], index: 3, kind: input, shape index: {}]
  %s4 = inlined_call_operand.hbm [shape: f32[32,32], index: 4, kind: input, shape index: {}]
  %s5 = inlined_call_operand.vmem [shape: f32[32,128], index: 5, kind: input, shape index: {}]
  %s6 = inlined_call_operand.vmem [shape: f32[8,32], index: 6, kind: input, shape index: {}]
  %s7 = inlined_call_operand.hbm [shape: f32[32,32], index: 7, kind: input, shape index: {}]
  %s8 = inlined_call_operand.hbm [shape: f32[32,32], index: 8, kind: input, shape index: {}]
  %s9 = inlined_call_operand.hbm [shape: f32[32,32], index: 9, kind: input, shape index: {}]
  %s10 = inlined_call_operand.hbm [shape: f32[32,32], index: 10, kind: input, shape index: {}]
  %s11 = inlined_call_operand.vmem [shape: f32[32,128], index: 11, kind: input, shape index: {}]
  %s12 = inlined_call_operand.vmem [shape: f32[16,128], index: 12, kind: output, shape index: {0}]
  %s13 = inlined_call_operand.vmem [shape: f32[16,128], index: 13, kind: output, shape index: {1}]
  %14 = xla_tuple %s12, %s13
  %s15 = sld [smem:[#allocation0]]
  $region86: #{style_module_forward.1} parent=0
    _
  %s17 = ssub.s32 1, %s15
  %s18 = scalar_select 0, %s17, %s15
  $region1: #{style_module_forward.1} parent=0
    #allocation2 [shape = 'u8[16384]{0}', space=vmem, size = 0x4000, scoped, tag = 'input window, operand 4, single buffered']
    #allocation3 [shape = 's32[1]{0}', space=sflag, size = 0x4, scoped, tag = 'scoped memory for style_module_forward.1']
    #allocation4 [shape = 'u8[16384]{0}', space=vmem, size = 0x4000, scoped, tag = 'input window, operand 7, single buffered']
    #allocation5 [shape = 's32[1]{0}', space=sflag, size = 0x4, scoped, tag = 'scoped memory for style_module_forward.1']
    #allocation6 [shape = 'u8[16384]{0}', space=vmem, size = 0x4000, scoped, tag = 'input window, operand 8, single buffered']
    #allocation7 [shape = 'u8[16384]{0}', space=vmem, size = 0x4000, scoped, tag = 'input window, operand 9, single buffered']
    #allocation8 [shape = 's32[1]{0}', space=sflag, size = 0x4, scoped, tag = 'scoped memory for style_module_forward.1']
    #allocation9 [shape = 'u8[16384]{0}', space=vmem, size = 0x4000, scoped, tag = 'input window, operand 10, single buffered']
    %19 = vsyncpa [#allocation3], 0
    %20 = vsyncpa [#allocation5], 0
    %21 = vsyncpa [#allocation8], 0
    // Predicated region
    $region2: #{style_module_forward.1} parent=1 // pred_check
      _
    $region3: #{style_module_forward.1} parent=1 // pred_check_branch
      %23 = sbr.rel (0) target = $region5
    $region4: #{style_module_forward.1} parent=1 // pred_region
      _
    $region5: #{style_module_forward.1} parent=1 // pred_fallthru
      _
    // Predicated region
    $region6: #{style_module_forward.1} parent=1 // pred_check
      _
    $region7: #{style_module_forward.1} parent=1 // pred_check_branch
      %25 = sbr.rel (0) target = $region9
    $region8: #{style_module_forward.1} parent=1 // pred_region
      _
    $region9: #{style_module_forward.1} parent=1 // pred_fallthru
      _
    // Predicated region
    $region10: #{style_module_forward.1} parent=1 // pred_check
      _
    $region11: #{style_module_forward.1} parent=1 // pred_check_branch
      %27 = sbr.rel (0) target = $region13
    $region12: #{style_module_forward.1} parent=1 // pred_region
      _
    $region13: #{style_module_forward.1} parent=1 // pred_fallthru
      _
    // Predicated region
    $region14: #{style_module_forward.1} parent=1 // pred_check
      _
    $region15: #{style_module_forward.1} parent=1 // pred_check_branch
      %29 = sbr.rel (0) target = $region17
    $region16: #{style_module_forward.1} parent=1 // pred_region
      _
    $region17: #{style_module_forward.1} parent=1 // pred_fallthru
      _
    // Predicated region
    $region18: #{style_module_forward.1} parent=1 // pred_check
      _
    $region19: #{style_module_forward.1} parent=1 // pred_check_branch
      %31 = sbr.rel (0) target = $region21
    $region20: #{style_module_forward.1} parent=1 // pred_region
      %s33 = ssub.s32 512, 512
      %34 = vsyncadd [#allocation3], %s33
      %s35 = sshll.u32 [#allocation2], 4
      %s36 = int_to_ptr.vmem [resolvable:$true] %s35
      %41 = dma.hbm_to_vmem [thread:$0]  %s4, 512, %s36, [#allocation3], 128, 128, 8
    $region21: #{style_module_forward.1} parent=1 // pred_fallthru
      _
    // Predicated region
    $region22: #{style_module_forward.1} parent=1 // pred_check
      _
    $region23: #{style_module_forward.1} parent=1 // pred_check_branch
      %43 = sbr.rel (0) target = $region25
    $region24: #{style_module_forward.1} parent=1 // pred_region
      _
    $region25: #{style_module_forward.1} parent=1 // pred_fallthru
      _
    // Predicated region
    $region26: #{style_module_forward.1} parent=1 // pred_check
      _
    $region27: #{style_module_forward.1} parent=1 // pred_check_branch
      %45 = sbr.rel (0) target = $region29
    $region28: #{style_module_forward.1} parent=1 // pred_region
      _
    $region29: #{style_module_forward.1} parent=1 // pred_fallthru
      _
    // Predicated region
    $region30: #{style_module_forward.1} parent=1 // pred_check
      _
    $region31: #{style_module_forward.1} parent=1 // pred_check_branch
      %47 = sbr.rel (0) target = $region33
    $region32: #{style_module_forward.1} parent=1 // pred_region
      %s49 = ssub.s32 512, 512
      %50 = vsyncadd [#allocation5], %s49
      %s51 = sshll.u32 [#allocation4], 4
      %s52 = int_to_ptr.vmem [resolvable:$true] %s51
      %57 = dma.hbm_to_vmem [thread:$0]  %s7, 512, %s52, [#allocation5], 128, 128, 8
    $region33: #{style_module_forward.1} parent=1 // pred_fallthru
      _
    // Predicated region
    $region34: #{style_module_forward.1} parent=1 // pred_check
      _
    $region35: #{style_module_forward.1} parent=1 // pred_check_branch
      %59 = sbr.rel (0) target = $region37
    $region36: #{style_module_forward.1} parent=1 // pred_region
      %s61 = ssub.s32 512, 512
      %62 = vsyncadd [#allocation5], %s61
      %s63 = sshll.u32 [#allocation6], 4
      %s64 = int_to_ptr.vmem [resolvable:$true] %s63
      %69 = dma.hbm_to_vmem [thread:$0]  %s8, 512, %s64, [#allocation5], 128, 128, 8
    $region37: #{style_module_forward.1} parent=1 // pred_fallthru
      _
    // Predicated region
    $region38: #{style_module_forward.1} parent=1 // pred_check
      _
    $region39: #{style_module_forward.1} parent=1 // pred_check_branch
      %71 = sbr.rel (0) target = $region41
    $region40: #{style_module_forward.1} parent=1 // pred_region
      %s73 = ssub.s32 512, 512
      %74 = vsyncadd [#allocation8], %s73
      %s75 = sshll.u32 [#allocation7], 4
      %s76 = int_to_ptr.vmem [resolvable:$true] %s75
      %81 = dma.hbm_to_vmem [thread:$0]  %s9, 512, %s76, [#allocation8], 128, 128, 8
    $region41: #{style_module_forward.1} parent=1 // pred_fallthru
      _
    // Predicated region
    $region42: #{style_module_forward.1} parent=1 // pred_check
      _
    $region43: #{style_module_forward.1} parent=1 // pred_check_branch
      %83 = sbr.rel (0) target = $region45
    $region44: #{style_module_forward.1} parent=1 // pred_region
      %s85 = ssub.s32 512, 512
      %86 = vsyncadd [#allocation8], %s85
      %s87 = sshll.u32 [#allocation9], 4
      %s88 = int_to_ptr.vmem [resolvable:$true] %s87
      %93 = dma.hbm_to_vmem [thread:$0]  %s10, 512, %s88, [#allocation8], 128, 128, 8
    $region45: #{style_module_forward.1} parent=1 // pred_fallthru
      _
    // Predicated region
    $region46: #{style_module_forward.1} parent=1 // pred_check
      _
    $region47: #{style_module_forward.1} parent=1 // pred_check_branch
      %95 = sbr.rel (0) target = $region49
    $region48: #{style_module_forward.1} parent=1 // pred_region
      _
    $region49: #{style_module_forward.1} parent=1 // pred_fallthru
      _
    // Predicated region
    $region50: #{style_module_forward.1} parent=1 // pred_check
      _
    $region51: #{style_module_forward.1} parent=1 // pred_check_branch
      %97 = sbr.rel (0) target = $region53
    $region52: #{style_module_forward.1} parent=1 // pred_region
      %98 = dma.done [#allocation3], 512
    $region53: #{style_module_forward.1} parent=1 // pred_fallthru
      _
    // Predicated region
    $region54: #{style_module_forward.1} parent=1 // pred_check
      _
    $region55: #{style_module_forward.1} parent=1 // pred_check_branch
      %100 = sbr.rel (0) target = $region57
    $region56: #{style_module_forward.1} parent=1 // pred_region
      %101 = dma.done [#allocation5], 512
    $region57: #{style_module_forward.1} parent=1 // pred_fallthru
      _
    // Predicated region
    $region58: #{style_module_forward.1} parent=1 // pred_check
      _
    $region59: #{style_module_forward.1} parent=1 // pred_check_branch
      %103 = sbr.rel (0) target = $region61
    $region60: #{style_module_forward.1} parent=1 // pred_region
      %104 = dma.done [#allocation5], 512
    $region61: #{style_module_forward.1} parent=1 // pred_fallthru
      _
    // Predicated region
    $region62: #{style_module_forward.1} parent=1 // pred_check
      _
    $region63: #{style_module_forward.1} parent=1 // pred_check_branch
      %106 = sbr.rel (0) target = $region65
    $region64: #{style_module_forward.1} parent=1 // pred_region
      %107 = dma.done [#allocation8], 512
    $region65: #{style_module_forward.1} parent=1 // pred_fallthru
      _
    // Predicated region
    $region66: #{style_module_forward.1} parent=1 // pred_check
      _
    $region67: #{style_module_forward.1} parent=1 // pred_check_branch
      %109 = sbr.rel (0) target = $region69
    $region68: #{style_module_forward.1} parent=1 // pred_region
      %110 = dma.done [#allocation8], 512
    $region69: #{style_module_forward.1} parent=1 // pred_fallthru
      _
    %v111 = vld [vmem:[%s0] sm:$0xff]
    %v112 = vld [vmem:[%s1] sm:$0xff]
    %v113 = vld [vmem:[%s1 + $0x8] sm:$0xff]
    %v114 = vld [vmem:[%s1 + $0x10] sm:$0xff]
    %v115 = vld [vmem:[%s1 + $0x18] sm:$0xff]
    %v116 = vld [vmem:[%s2] sm:$0xff]
    %v117 = vld [vmem:[%s2 + $0x8] sm:$0xff]
    %v118 = vld [vmem:[%s2 + $0x10] sm:$0xff]
    %v119 = vld [vmem:[%s2 + $0x18] sm:$0xff]
    %v120 = vld [vmem:[%s3] sm:$0xff]
    %v121 = vld [vmem:[%s3 + $0x8] sm:$0xff]
    %v122 = vld [vmem:[%s3 + $0x10] sm:$0xff]
    %v123 = vld [vmem:[%s3 + $0x18] sm:$0xff]
    %v124 = vld [vmem:[#allocation2] sm:$0xff]
    %v125 = vld [vmem:[#allocation2 + $0x8] sm:$0xff]
    %v126 = vld [vmem:[#allocation2 + $0x10] sm:$0xff]
    %v127 = vld [vmem:[#allocation2 + $0x18] sm:$0xff]
    %v128 = vld [vmem:[%s5] sm:$0xff]
    %v129 = vld [vmem:[%s5 + $0x8] sm:$0xff]
    %v130 = vld [vmem:[%s5 + $0x10] sm:$0xff]
    %v131 = vld [vmem:[%s5 + $0x18] sm:$0xff]
    %vm132 = vcmask 261120
    %v134 = vsel %vm132, %v111, 0
    %136 = vmatprep.subr.mxu0 0.0
    %137 = vmatpush1.msra.mxu0 %v116
    %138 = vmatprep.subr.mxu0 0.0
    %139 = vmatpush1.msra.mxu0 %v117
    %140 = vmatprep.subr.mxu0 0.0
    %141 = vmatpush1.msra.mxu0 %v118
    %142 = vmatprep.subr.mxu0 0.0
    %143 = vmatpush1.msra.mxu0 %v119
    %144 = vmatprep.subr.mxu0 0.0
    %145 = vmatpush1.msra.mxu0 0.0
    %146 = vmatprep.subr.mxu0 0.0
    %147 = vmatpush1.msra.mxu0 0.0
    %148 = vmatprep.subr.mxu0 0.0
    %149 = vmatpush1.msra.mxu0 0.0
    %150 = vmatprep.subr.mxu0 0.0
    %151 = vmatpush1.msra.mxu0 0.0
    %152 = vmatprep.subr.mxu0 0.0
    %153 = vmatpush1.msra.mxu0 0.0
    %154 = vmatprep.subr.mxu0 0.0
    %155 = vmatpush1.msra.mxu0 0.0
    %156 = vmatprep.subr.mxu0 0.0
    %157 = vmatpush1.msra.mxu0 0.0
    %158 = vmatprep.subr.mxu0 0.0
    %159 = vmatpush1.msra.mxu0 0.0
    %160 = vmatprep.subr.mxu0 0.0
    %161 = vmatpush1.msra.mxu0 0.0
    %162 = vmatprep.subr.mxu0 0.0
    %163 = vmatpush1.msra.mxu0 0.0
    %164 = vmatprep.subr.mxu0 0.0
    %165 = vmatpush1.msra.mxu0 0.0
    %166 = vmatprep.subr.mxu0 0.0
    %167 = vmatpush1.msra.mxu0 0.0
    %168 = vmatprep.subr.mxu0 0.0
    %169 = vmatpush1.msra.mxu0 0.0
    %170 = vmatprep.subr.mxu0 0.0
    %171 = vmatpush1.msra.mxu0 0.0
    %172 = vmatprep.subr.mxu0 0.0
    %173 = vmatpush1.msra.mxu0 0.0
    %174 = vmatprep.subr.mxu0 0.0
    %175 = vmatpush1.msra.mxu0 0.0
    %176 = vmatprep.subr.mxu0 0.0
    %177 = vmatpush1.msra.mxu0 0.0
    %178 = vmatprep.subr.mxu0 0.0
    %179 = vmatpush1.msra.mxu0 0.0
    %180 = vmatprep.subr.mxu0 0.0
    %181 = vmatpush1.msra.mxu0 0.0
    %182 = vmatprep.subr.mxu0 0.0
    %183 = vmatpush1.msra.mxu0 0.0
    %184 = vmatprep.subr.mxu0 0.0
    %185 = vmatpush1.msra.mxu0 0.0
    %186 = vmatprep.subr.mxu0 0.0
    %187 = vmatpush1.msra.mxu0 0.0
    %188 = vmatprep.subr.mxu0 0.0
    %189 = vmatpush1.msra.mxu0 0.0
    %190 = vmatprep.subr.mxu0 0.0
    %191 = vmatpush1.msra.mxu0 0.0
    %192 = vmatprep.subr.mxu0 0.0
    %193 = vmatpush1.msra.mxu0 0.0
    %194 = vmatprep.subr.mxu0 0.0
    %195 = vmatpush1.msra.mxu0 0.0
    %196 = vmatprep.subr.mxu0 0.0
    %197 = vmatpush1.msra.mxu0 0.0
    %198 = vmatprep.subr.mxu0 0.0
    %199 = vmatpush1.msra.mxu0 0.0
    %200 = vmatprep.mubr.f32.mxu0 0.0
    %201 = vmatmul.mubr.f32.gmra.mrb[0].mxu0 %v134
    %v202 = vpop.f32.mrb[0].mxu0
    %v203 = vadd.f32 0.0, %v202
    %v204 = vpop.f32.mrb[0].mxu0
    %205 = vdwg.mxu0
    %v207 = vsel %vm132, %v112, 0
    %v210 = vsel %vm132, %v113, 0
    %v213 = vsel %vm132, %v114, 0
    %v216 = vsel %vm132, %v115, 0
    %218 = vmatprep.subr.mxu0 0.0
    %219 = vmatpush1.msra.mxu0 %v120
    %220 = vmatprep.subr.mxu0 0.0
    %221 = vmatpush1.msra.mxu0 %v121
    %222 = vmatprep.subr.mxu0 0.0
    %223 = vmatpush1.msra.mxu0 %v122
    %224 = vmatprep.subr.mxu0 0.0
    %225 = vmatpush1.msra.mxu0 %v123
    %226 = vmatprep.subr.mxu0 0.0
    %227 = vmatpush1.msra.mxu0 0.0
    %228 = vmatprep.subr.mxu0 0.0
    %229 = vmatpush1.msra.mxu0 0.0
    %230 = vmatprep.subr.mxu0 0.0
    %231 = vmatpush1.msra.mxu0 0.0
    %232 = vmatprep.subr.mxu0 0.0
    %233 = vmatpush1.msra.mxu0 0.0
    %234 = vmatprep.subr.mxu0 0.0
    %235 = vmatpush1.msra.mxu0 0.0
    %236 = vmatprep.subr.mxu0 0.0
    %237 = vmatpush1.msra.mxu0 0.0
    %238 = vmatprep.subr.mxu0 0.0
    %239 = vmatpush1.msra.mxu0 0.0
    %240 = vmatprep.subr.mxu0 0.0
    %241 = vmatpush1.msra.mxu0 0.0
    %242 = vmatprep.subr.mxu0 0.0
    %243 = vmatpush1.msra.mxu0 0.0
    %244 = vmatprep.subr.mxu0 0.0
    %245 = vmatpush1.msra.mxu0 0.0
    %246 = vmatprep.subr.mxu0 0.0
    %247 = vmatpush1.msra.mxu0 0.0
    %248 = vmatprep.subr.mxu0 0.0
    %249 = vmatpush1.msra.mxu0 0.0
    %250 = vmatprep.subr.mxu0 0.0
    %251 = vmatpush1.msra.mxu0 0.0
    %252 = vmatprep.subr.mxu0 0.0
    %253 = vmatpush1.msra.mxu0 0.0
    %254 = vmatprep.subr.mxu0 0.0
    %255 = vmatpush1.msra.mxu0 0.0
    %256 = vmatprep.subr.mxu0 0.0
    %257 = vmatpush1.msra.mxu0 0.0
    %258 = vmatprep.subr.mxu0 0.0
    %259 = vmatpush1.msra.mxu0 0.0
    %260 = vmatprep.subr.mxu0 0.0
    %261 = vmatpush1.msra.mxu0 0.0
    %262 = vmatprep.subr.mxu0 0.0
    %263 = vmatpush1.msra.mxu0 0.0
    %264 = vmatprep.subr.mxu0 0.0
    %265 = vmatpush1.msra.mxu0 0.0
    %266 = vmatprep.subr.mxu0 0.0
    %267 = vmatpush1.msra.mxu0 0.0
    %268 = vmatprep.subr.mxu0 0.0
    %269 = vmatpush1.msra.mxu0 0.0
    %270 = vmatprep.subr.mxu0 0.0
    %271 = vmatpush1.msra.mxu0 0.0
    %272 = vmatprep.subr.mxu0 0.0
    %273 = vmatpush1.msra.mxu0 0.0
    %274 = vmatprep.subr.mxu0 0.0
    %275 = vmatpush1.msra.mxu0 0.0
    %276 = vmatprep.subr.mxu0 0.0
    %277 = vmatpush1.msra.mxu0 0.0
    %278 = vmatprep.subr.mxu0 0.0
    %279 = vmatpush1.msra.mxu0 0.0
    %280 = vmatprep.subr.mxu0 0.0
    %281 = vmatpush1.msra.mxu0 0.0
    %282 = vmatprep.mubr.f32.mxu0 0.0
    %283 = vmatmul.mubr.f32.gmra.mrb[0].mxu0 %v207
    %v284 = vpop.f32.mrb[0].mxu0
    %v285 = vadd.f32 0.0, %v284
    %v286 = vpop.f32.mrb[0].mxu0
    %287 = vmatprep.mubr.f32.mxu0 0.0
    %288 = vmatmul.mubr.f32.gmra.mrb[0].mxu0 %v210
    %v289 = vpop.f32.mrb[0].mxu0
    %v290 = vadd.f32 0.0, %v289
    %v291 = vpop.f32.mrb[0].mxu0
    %292 = vmatprep.mubr.f32.mxu0 0.0
    %293 = vmatmul.mubr.f32.gmra.mrb[0].mxu0 %v213
    %v294 = vpop.f32.mrb[0].mxu0
    %v295 = vadd.f32 0.0, %v294
    %v296 = vpop.f32.mrb[0].mxu0
    %297 = vmatprep.mubr.f32.mxu0 0.0
    %298 = vmatmul.mubr.f32.gmra.mrb[0].mxu0 %v216
    %v299 = vpop.f32.mrb[0].mxu0
    %v300 = vadd.f32 0.0, %v299
    %v301 = vpop.f32.mrb[0].mxu0
    %302 = vdwg.mxu0
    %303 = vmatprep.subr.mxu0 0.0
    %304 = vmatpush1.msra.mxu0 %v124
    %305 = vmatprep.subr.mxu0 0.0
    %306 = vmatpush1.msra.mxu0 %v125
    %307 = vmatprep.subr.mxu0 0.0
    %308 = vmatpush1.msra.mxu0 %v126
    %309 = vmatprep.subr.mxu0 0.0
    %310 = vmatpush1.msra.mxu0 %v127
    %311 = vmatprep.subr.mxu0 0.0
    %312 = vmatpush1.msra.mxu0 0.0
    %313 = vmatprep.subr.mxu0 0.0
    %314 = vmatpush1.msra.mxu0 0.0
    %315 = vmatprep.subr.mxu0 0.0
    %316 = vmatpush1.msra.mxu0 0.0
    %317 = vmatprep.subr.mxu0 0.0
    %318 = vmatpush1.msra.mxu0 0.0
    %319 = vmatprep.subr.mxu0 0.0
    %320 = vmatpush1.msra.mxu0 0.0
    %321 = vmatprep.subr.mxu0 0.0
    %322 = vmatpush1.msra.mxu0 0.0
    %323 = vmatprep.subr.mxu0 0.0
    %324 = vmatpush1.msra.mxu0 0.0
    %325 = vmatprep.subr.mxu0 0.0
    %326 = vmatpush1.msra.mxu0 0.0
    %327 = vmatprep.subr.mxu0 0.0
    %328 = vmatpush1.msra.mxu0 0.0
    %329 = vmatprep.subr.mxu0 0.0
    %330 = vmatpush1.msra.mxu0 0.0
    %331 = vmatprep.subr.mxu0 0.0
    %332 = vmatpush1.msra.mxu0 0.0
    %333 = vmatprep.subr.mxu0 0.0
    %334 = vmatpush1.msra.mxu0 0.0
    %335 = vmatprep.subr.mxu0 0.0
    %336 = vmatpush1.msra.mxu0 0.0
    %337 = vmatprep.subr.mxu0 0.0
    %338 = vmatpush1.msra.mxu0 0.0
    %339 = vmatprep.subr.mxu0 0.0
    %340 = vmatpush1.msra.mxu0 0.0
    %341 = vmatprep.subr.mxu0 0.0
    %342 = vmatpush1.msra.mxu0 0.0
    %343 = vmatprep.subr.mxu0 0.0
    %344 = vmatpush1.msra.mxu0 0.0
    %345 = vmatprep.subr.mxu0 0.0
    %346 = vmatpush1.msra.mxu0 0.0
    %347 = vmatprep.subr.mxu0 0.0
    %348 = vmatpush1.msra.mxu0 0.0
    %349 = vmatprep.subr.mxu0 0.0
    %350 = vmatpush1.msra.mxu0 0.0
    %351 = vmatprep.subr.mxu0 0.0
    %352 = vmatpush1.msra.mxu0 0.0
    %353 = vmatprep.subr.mxu0 0.0
    %354 = vmatpush1.msra.mxu0 0.0
    %355 = vmatprep.subr.mxu0 0.0
    %356 = vmatpush1.msra.mxu0 0.0
    %357 = vmatprep.subr.mxu0 0.0
    %358 = vmatpush1.msra.mxu0 0.0
    %359 = vmatprep.subr.mxu0 0.0
    %360 = vmatpush1.msra.mxu0 0.0
    %361 = vmatprep.subr.mxu0 0.0
    %362 = vmatpush1.msra.mxu0 0.0
    %363 = vmatprep.subr.mxu0 0.0
    %364 = vmatpush1.msra.mxu0 0.0
    %365 = vmatprep.subr.mxu0 0.0
    %366 = vmatpush1.msra.mxu0 0.0
    %367 = vmatprep.mubr.f32.mxu0 0.0
    %368 = vmatmul.mubr.f32.gmra.mrb[0].mxu0 %v207
    %v369 = vpop.f32.mrb[0].mxu0
    %v370 = vadd.f32 0.0, %v369
    %v371 = vpop.f32.mrb[0].mxu0
    %372 = vmatprep.mubr.f32.mxu0 0.0
    %373 = vmatmul.mubr.f32.gmra.mrb[0].mxu0 %v210
    %v374 = vpop.f32.mrb[0].mxu0
    %v375 = vadd.f32 0.0, %v374
    %v376 = vpop.f32.mrb[0].mxu0
    %377 = vmatprep.mubr.f32.mxu0 0.0
    %378 = vmatmul.mubr.f32.gmra.mrb[0].mxu0 %v213
    %v379 = vpop.f32.mrb[0].mxu0
    %v380 = vadd.f32 0.0, %v379
    %v381 = vpop.f32.mrb[0].mxu0
    %382 = vmatprep.mubr.f32.mxu0 0.0
    %383 = vmatmul.mubr.f32.gmra.mrb[0].mxu0 %v216
    %v384 = vpop.f32.mrb[0].mxu0
    %v385 = vadd.f32 0.0, %v384
    %v386 = vpop.f32.mrb[0].mxu0
    %387 = vdwg.mxu0
    %vm388 = vcmask 130048
    %v390 = vsel %vm388, %v203, 0
    %v393 = vsel %vm388, %v285, 0
    %v396 = vsel %vm388, %v290, 0
    %398 = vmatprep.subr.mxu0 0.0
    %399 = vmatpush1.xpose.msra.mxu0 %v393
    %400 = vmatprep.subr.mxu0 0.0
    %401 = vmatpush1.xpose.msra.mxu0 %v396
    %402 = vmatprep.subr.mxu0 0.0
    %403 = vmatpush1.xpose.msra.mxu0 0.0
    %404 = vmatprep.subr.mxu0 0.0
    %405 = vmatpush1.xpose.msra.mxu0 0.0
    %406 = vmatprep.subr.mxu0 0.0
    %407 = vmatpush1.xpose.msra.mxu0 0.0
    %408 = vmatprep.subr.mxu0 0.0
    %409 = vmatpush1.xpose.msra.mxu0 0.0
    %410 = vmatprep.subr.mxu0 0.0
    %411 = vmatpush1.xpose.msra.mxu0 0.0
    %412 = vmatprep.subr.mxu0 0.0
    %413 = vmatpush1.xpose.msra.mxu0 0.0
    %414 = vmatprep.subr.mxu0 0.0
    %415 = vmatpush1.xpose.msra.mxu0 0.0
    %416 = vmatprep.subr.mxu0 0.0
    %417 = vmatpush1.xpose.msra.mxu0 0.0
    %418 = vmatprep.subr.mxu0 0.0
    %419 = vmatpush1.xpose.msra.mxu0 0.0
    %420 = vmatprep.subr.mxu0 0.0
    %421 = vmatpush1.xpose.msra.mxu0 0.0
    %422 = vmatprep.subr.mxu0 0.0
    %423 = vmatpush1.xpose.msra.mxu0 0.0
    %424 = vmatprep.subr.mxu0 0.0
    %425 = vmatpush1.xpose.msra.mxu0 0.0
    %426 = vmatprep.subr.mxu0 0.0
    %427 = vmatpush1.xpose.msra.mxu0 0.0
    %428 = vmatprep.subr.mxu0 0.0
    %429 = vmatpush1.xpose.msra.mxu0 0.0
    %430 = vmatprep.subr.mxu0 0.0
    %431 = vmatpush1.xpose.msra.mxu0 0.0
    %432 = vmatprep.subr.mxu0 0.0
    %433 = vmatpush1.xpose.msra.mxu0 0.0
    %434 = vmatprep.subr.mxu0 0.0
    %435 = vmatpush1.xpose.msra.mxu0 0.0
    %436 = vmatprep.subr.mxu0 0.0
    %437 = vmatpush1.xpose.msra.mxu0 0.0
    %438 = vmatprep.subr.mxu0 0.0
    %439 = vmatpush1.xpose.msra.mxu0 0.0
    %440 = vmatprep.subr.mxu0 0.0
    %441 = vmatpush1.xpose.msra.mxu0 0.0
    %442 = vmatprep.subr.mxu0 0.0
    %443 = vmatpush1.xpose.msra.mxu0 0.0
    %444 = vmatprep.subr.mxu0 0.0
    %445 = vmatpush1.xpose.msra.mxu0 0.0
    %446 = vmatprep.subr.mxu0 0.0
    %447 = vmatpush1.xpose.msra.mxu0 0.0
    %448 = vmatprep.subr.mxu0 0.0
    %449 = vmatpush1.xpose.msra.mxu0 0.0
    %450 = vmatprep.subr.mxu0 0.0
    %451 = vmatpush1.xpose.msra.mxu0 0.0
    %452 = vmatprep.subr.mxu0 0.0
    %453 = vmatpush1.xpose.msra.mxu0 0.0
    %454 = vmatprep.subr.mxu0 0.0
    %455 = vmatpush1.xpose.msra.mxu0 0.0
    %456 = vmatprep.subr.mxu0 0.0
    %457 = vmatpush1.xpose.msra.mxu0 0.0
    %458 = vmatprep.subr.mxu0 0.0
    %459 = vmatpush1.xpose.msra.mxu0 0.0
    %460 = vmatprep.subr.mxu0 0.0
    %461 = vmatpush1.xpose.msra.mxu0 0.0
    %462 = vmatprep.mubr.f32.mxu0 0.0
    %463 = vmatmul.mubr.f32.gmra.mrb[0].mxu0 %v390
    %v464 = vpop.f32.mrb[0].mxu0
    %v465 = vadd.f32 0.0, %v464
    %v466 = vpop.f32.mrb[0].mxu0
    %467 = vdwg.mxu0
    %v468 = vmul.f32 %v465, 0.25
    %v469 = vsel %vm388, %v468, -inf
    %470 = vmax.xlane.f32.xlu0 %v469
    %v471 = vpop.xlane.xlu0 %470
    %v472 = vsub.f32 %v468, %v471
    %v473 = vmul.f32 %v472, 1.442695
    %v474 = vpow.pop %v473
    %v475 = vsel %vm388, %v474, 0.0
    %476 = vadd.xlane.f32.xlu0 %v475
    %v477 = vpop.xlane.xlu0 %476
    %v478 = vrcp.pop %v477
    %v479 = vmul.f32 %v474, %v478
    %v481 = vsel %vm388, %v479, 0
    %483 = vmatprep.subr.mxu0 0.0
    %484 = vmatpush1.msra.mxu0 %v370
    %485 = vmatprep.subr.mxu0 0.0
    %486 = vmatpush1.msra.mxu0 %v375
    %487 = vmatprep.subr.mxu0 0.0
    %488 = vmatpush1.msra.mxu0 0.0
    %489 = vmatprep.subr.mxu0 0.0
    %490 = vmatpush1.msra.mxu0 0.0
    %491 = vmatprep.subr.mxu0 0.0
    %492 = vmatpush1.msra.mxu0 0.0
    %493 = vmatprep.subr.mxu0 0.0
    %494 = vmatpush1.msra.mxu0 0.0
    %495 = vmatprep.subr.mxu0 0.0
    %496 = vmatpush1.msra.mxu0 0.0
    %497 = vmatprep.subr.mxu0 0.0
    %498 = vmatpush1.msra.mxu0 0.0
    %499 = vmatprep.subr.mxu0 0.0
    %500 = vmatpush1.msra.mxu0 0.0
    %501 = vmatprep.subr.mxu0 0.0
    %502 = vmatpush1.msra.mxu0 0.0
    %503 = vmatprep.subr.mxu0 0.0
    %504 = vmatpush1.msra.mxu0 0.0
    %505 = vmatprep.subr.mxu0 0.0
    %506 = vmatpush1.msra.mxu0 0.0
    %507 = vmatprep.subr.mxu0 0.0
    %508 = vmatpush1.msra.mxu0 0.0
    %509 = vmatprep.subr.mxu0 0.0
    %510 = vmatpush1.msra.mxu0 0.0
    %511 = vmatprep.subr.mxu0 0.0
    %512 = vmatpush1.msra.mxu0 0.0
    %513 = vmatprep.subr.mxu0 0.0
    %514 = vmatpush1.msra.mxu0 0.0
    %515 = vmatprep.subr.mxu0 0.0
    %516 = vmatpush1.msra.mxu0 0.0
    %517 = vmatprep.subr.mxu0 0.0
    %518 = vmatpush1.msra.mxu0 0.0
    %519 = vmatprep.subr.mxu0 0.0
    %520 = vmatpush1.msra.mxu0 0.0
    %521 = vmatprep.subr.mxu0 0.0
    %522 = vmatpush1.msra.mxu0 0.0
    %523 = vmatprep.subr.mxu0 0.0
    %524 = vmatpush1.msra.mxu0 0.0
    %525 = vmatprep.subr.mxu0 0.0
    %526 = vmatpush1.msra.mxu0 0.0
    %527 = vmatprep.subr.mxu0 0.0
    %528 = vmatpush1.msra.mxu0 0.0
    %529 = vmatprep.subr.mxu0 0.0
    %530 = vmatpush1.msra.mxu0 0.0
    %531 = vmatprep.subr.mxu0 0.0
    %532 = vmatpush1.msra.mxu0 0.0
    %533 = vmatprep.subr.mxu0 0.0
    %534 = vmatpush1.msra.mxu0 0.0
    %535 = vmatprep.subr.mxu0 0.0
    %536 = vmatpush1.msra.mxu0 0.0
    %537 = vmatprep.subr.mxu0 0.0
    %538 = vmatpush1.msra.mxu0 0.0
    %539 = vmatprep.subr.mxu0 0.0
    %540 = vmatpush1.msra.mxu0 0.0
    %541 = vmatprep.subr.mxu0 0.0
    %542 = vmatpush1.msra.mxu0 0.0
    %543 = vmatprep.subr.mxu0 0.0
    %544 = vmatpush1.msra.mxu0 0.0
    %545 = vmatprep.subr.mxu0 0.0
    %546 = vmatpush1.msra.mxu0 0.0
    %547 = vmatprep.mubr.f32.mxu0 0.0
    %548 = vmatmul.mubr.f32.gmra.mrb[0].mxu0 %v481
    %v549 = vpop.f32.mrb[0].mxu0
    %v550 = vadd.f32 0.0, %v549
    %v551 = vpop.f32.mrb[0].mxu0
    %552 = vdwg.mxu0
    %553 = vrot.lane.b32.xlu0 %v203, 112
    %v554 = vpop.permute.xlu0 %553
    %555 = vrot.lane.b32.xlu0 %v285, 112
    %v556 = vpop.permute.xlu0 %555
    %557 = vrot.lane.b32.xlu0 %v290, 112
    %v558 = vpop.permute.xlu0 %557
    %v559 = vsel %vm388, %v554, 0
    %v561 = vsel %vm388, %v556, 0
    %v563 = vsel %vm388, %v558, 0
    %565 = vmatprep.subr.mxu0 0.0
    %566 = vmatpush1.xpose.msra.mxu0 %v561
    %567 = vmatprep.subr.mxu0 0.0
    %568 = vmatpush1.xpose.msra.mxu0 %v563
    %569 = vmatprep.subr.mxu0 0.0
    %570 = vmatpush1.xpose.msra.mxu0 0.0
    %571 = vmatprep.subr.mxu0 0.0
    %572 = vmatpush1.xpose.msra.mxu0 0.0
    %573 = vmatprep.subr.mxu0 0.0
    %574 = vmatpush1.xpose.msra.mxu0 0.0
    %575 = vmatprep.subr.mxu0 0.0
    %576 = vmatpush1.xpose.msra.mxu0 0.0
    %577 = vmatprep.subr.mxu0 0.0
    %578 = vmatpush1.xpose.msra.mxu0 0.0
    %579 = vmatprep.subr.mxu0 0.0
    %580 = vmatpush1.xpose.msra.mxu0 0.0
    %581 = vmatprep.subr.mxu0 0.0
    %582 = vmatpush1.xpose.msra.mxu0 0.0
    %583 = vmatprep.subr.mxu0 0.0
    %584 = vmatpush1.xpose.msra.mxu0 0.0
    %585 = vmatprep.subr.mxu0 0.0
    %586 = vmatpush1.xpose.msra.mxu0 0.0
    %587 = vmatprep.subr.mxu0 0.0
    %588 = vmatpush1.xpose.msra.mxu0 0.0
    %589 = vmatprep.subr.mxu0 0.0
    %590 = vmatpush1.xpose.msra.mxu0 0.0
    %591 = vmatprep.subr.mxu0 0.0
    %592 = vmatpush1.xpose.msra.mxu0 0.0
    %593 = vmatprep.subr.mxu0 0.0
    %594 = vmatpush1.xpose.msra.mxu0 0.0
    %595 = vmatprep.subr.mxu0 0.0
    %596 = vmatpush1.xpose.msra.mxu0 0.0
    %597 = vmatprep.subr.mxu0 0.0
    %598 = vmatpush1.xpose.msra.mxu0 0.0
    %599 = vmatprep.subr.mxu0 0.0
    %600 = vmatpush1.xpose.msra.mxu0 0.0
    %601 = vmatprep.subr.mxu0 0.0
    %602 = vmatpush1.xpose.msra.mxu0 0.0
    %603 = vmatprep.subr.mxu0 0.0
    %604 = vmatpush1.xpose.msra.mxu0 0.0
    %605 = vmatprep.subr.mxu0 0.0
    %606 = vmatpush1.xpose.msra.mxu0 0.0
    %607 = vmatprep.subr.mxu0 0.0
    %608 = vmatpush1.xpose.msra.mxu0 0.0
    %609 = vmatprep.subr.mxu0 0.0
    %610 = vmatpush1.xpose.msra.mxu0 0.0
    %611 = vmatprep.subr.mxu0 0.0
    %612 = vmatpush1.xpose.msra.mxu0 0.0
    %613 = vmatprep.subr.mxu0 0.0
    %614 = vmatpush1.xpose.msra.mxu0 0.0
    %615 = vmatprep.subr.mxu0 0.0
    %616 = vmatpush1.xpose.msra.mxu0 0.0
    %617 = vmatprep.subr.mxu0 0.0
    %618 = vmatpush1.xpose.msra.mxu0 0.0
    %619 = vmatprep.subr.mxu0 0.0
    %620 = vmatpush1.xpose.msra.mxu0 0.0
    %621 = vmatprep.subr.mxu0 0.0
    %622 = vmatpush1.xpose.msra.mxu0 0.0
    %623 = vmatprep.subr.mxu0 0.0
    %624 = vmatpush1.xpose.msra.mxu0 0.0
    %625 = vmatprep.subr.mxu0 0.0
    %626 = vmatpush1.xpose.msra.mxu0 0.0
    %627 = vmatprep.subr.mxu0 0.0
    %628 = vmatpush1.xpose.msra.mxu0 0.0
    %629 = vmatprep.mubr.f32.mxu0 0.0
    %630 = vmatmul.mubr.f32.gmra.mrb[0].mxu0 %v559
    %v631 = vpop.f32.mrb[0].mxu0
    %v632 = vadd.f32 0.0, %v631
    %v633 = vpop.f32.mrb[0].mxu0
    %634 = vdwg.mxu0
    %v635 = vmul.f32 %v632, 0.25
    %v636 = vsel %vm388, %v635, -inf
    %637 = vmax.xlane.f32.xlu0 %v636
    %v638 = vpop.xlane.xlu0 %637
    %v639 = vsub.f32 %v635, %v638
    %v640 = vmul.f32 %v639, 1.442695
    %v641 = vpow.pop %v640
    %v642 = vsel %vm388, %v641, 0.0
    %643 = vadd.xlane.f32.xlu0 %v642
    %v644 = vpop.xlane.xlu0 %643
    %v645 = vrcp.pop %v644
    %v646 = vmul.f32 %v641, %v645
    %649 = vrot.lane.b32.xlu0 %v370, 112
    %v650 = vpop.permute.xlu0 %649
    %651 = vrot.lane.b32.xlu0 %v375, 112
    %v652 = vpop.permute.xlu0 %651
    %v656 = vsel %vm388, %v646, 0
    %658 = vmatprep.subr.mxu0 0.0
    %659 = vmatpush1.msra.mxu0 %v650
    %660 = vmatprep.subr.mxu0 0.0
    %661 = vmatpush1.msra.mxu0 %v652
    %662 = vmatprep.subr.mxu0 0.0
    %663 = vmatpush1.msra.mxu0 0.0
    %664 = vmatprep.subr.mxu0 0.0
    %665 = vmatpush1.msra.mxu0 0.0
    %666 = vmatprep.subr.mxu0 0.0
    %667 = vmatpush1.msra.mxu0 0.0
    %668 = vmatprep.subr.mxu0 0.0
    %669 = vmatpush1.msra.mxu0 0.0
    %670 = vmatprep.subr.mxu0 0.0
    %671 = vmatpush1.msra.mxu0 0.0
    %672 = vmatprep.subr.mxu0 0.0
    %673 = vmatpush1.msra.mxu0 0.0
    %674 = vmatprep.subr.mxu0 0.0
    %675 = vmatpush1.msra.mxu0 0.0
    %676 = vmatprep.subr.mxu0 0.0
    %677 = vmatpush1.msra.mxu0 0.0
    %678 = vmatprep.subr.mxu0 0.0
    %679 = vmatpush1.msra.mxu0 0.0
    %680 = vmatprep.subr.mxu0 0.0
    %681 = vmatpush1.msra.mxu0 0.0
    %682 = vmatprep.subr.mxu0 0.0
    %683 = vmatpush1.msra.mxu0 0.0
    %684 = vmatprep.subr.mxu0 0.0
    %685 = vmatpush1.msra.mxu0 0.0
    %686 = vmatprep.subr.mxu0 0.0
    %687 = vmatpush1.msra.mxu0 0.0
    %688 = vmatprep.subr.mxu0 0.0
    %689 = vmatpush1.msra.mxu0 0.0
    %690 = vmatprep.subr.mxu0 0.0
    %691 = vmatpush1.msra.mxu0 0.0
    %692 = vmatprep.subr.mxu0 0.0
    %693 = vmatpush1.msra.mxu0 0.0
    %694 = vmatprep.subr.mxu0 0.0
    %695 = vmatpush1.msra.mxu0 0.0
    %696 = vmatprep.subr.mxu0 0.0
    %697 = vmatpush1.msra.mxu0 0.0
    %698 = vmatprep.subr.mxu0 0.0
    %699 = vmatpush1.msra.mxu0 0.0
    %700 = vmatprep.subr.mxu0 0.0
    %701 = vmatpush1.msra.mxu0 0.0
    %702 = vmatprep.subr.mxu0 0.0
    %703 = vmatpush1.msra.mxu0 0.0
    %704 = vmatprep.subr.mxu0 0.0
    %705 = vmatpush1.msra.mxu0 0.0
    %706 = vmatprep.subr.mxu0 0.0
    %707 = vmatpush1.msra.mxu0 0.0
    %708 = vmatprep.subr.mxu0 0.0
    %709 = vmatpush1.msra.mxu0 0.0
    %710 = vmatprep.subr.mxu0 0.0
    %711 = vmatpush1.msra.mxu0 0.0
    %712 = vmatprep.subr.mxu0 0.0
    %713 = vmatpush1.msra.mxu0 0.0
    %714 = vmatprep.subr.mxu0 0.0
    %715 = vmatpush1.msra.mxu0 0.0
    %716 = vmatprep.subr.mxu0 0.0
    %717 = vmatpush1.msra.mxu0 0.0
    %718 = vmatprep.subr.mxu0 0.0
    %719 = vmatpush1.msra.mxu0 0.0
    %720 = vmatprep.subr.mxu0 0.0
    %721 = vmatpush1.msra.mxu0 0.0
    %722 = vmatprep.mubr.f32.mxu0 0.0
    %723 = vmatmul.mubr.f32.gmra.mrb[0].mxu0 %v656
    %v724 = vpop.f32.mrb[0].mxu0
    %v725 = vadd.f32 0.0, %v724
    %v726 = vpop.f32.mrb[0].mxu0
    %727 = vdwg.mxu0
    %v729 = vsel %vm388, %v725, 0
    %731 = vmatprep.subr.mxu0 0.0
    %732 = vmatpush1.msra.mxu0 %v130
    %733 = vmatprep.subr.mxu0 0.0
    %734 = vmatpush1.msra.mxu0 %v131
    %735 = vmatprep.subr.mxu0 0.0
    %736 = vmatpush1.msra.mxu0 0.0
    %737 = vmatprep.subr.mxu0 0.0
    %738 = vmatpush1.msra.mxu0 0.0
    %739 = vmatprep.subr.mxu0 0.0
    %740 = vmatpush1.msra.mxu0 0.0
    %741 = vmatprep.subr.mxu0 0.0
    %742 = vmatpush1.msra.mxu0 0.0
    %743 = vmatprep.subr.mxu0 0.0
    %744 = vmatpush1.msra.mxu0 0.0
    %745 = vmatprep.subr.mxu0 0.0
    %746 = vmatpush1.msra.mxu0 0.0
    %747 = vmatprep.subr.mxu0 0.0
    %748 = vmatpush1.msra.mxu0 0.0
    %749 = vmatprep.subr.mxu0 0.0
    %750 = vmatpush1.msra.mxu0 0.0
    %751 = vmatprep.subr.mxu0 0.0
    %752 = vmatpush1.msra.mxu0 0.0
    %753 = vmatprep.subr.mxu0 0.0
    %754 = vmatpush1.msra.mxu0 0.0
    %755 = vmatprep.subr.mxu0 0.0
    %756 = vmatpush1.msra.mxu0 0.0
    %757 = vmatprep.subr.mxu0 0.0
    %758 = vmatpush1.msra.mxu0 0.0
    %759 = vmatprep.subr.mxu0 0.0
    %760 = vmatpush1.msra.mxu0 0.0
    %761 = vmatprep.subr.mxu0 0.0
    %762 = vmatpush1.msra.mxu0 0.0
    %763 = vmatprep.subr.mxu0 0.0
    %764 = vmatpush1.msra.mxu0 0.0
    %765 = vmatprep.subr.mxu0 0.0
    %766 = vmatpush1.msra.mxu0 0.0
    %767 = vmatprep.subr.mxu0 0.0
    %768 = vmatpush1.msra.mxu0 0.0
    %769 = vmatprep.subr.mxu0 0.0
    %770 = vmatpush1.msra.mxu0 0.0
    %771 = vmatprep.subr.mxu0 0.0
    %772 = vmatpush1.msra.mxu0 0.0
    %773 = vmatprep.subr.mxu0 0.0
    %774 = vmatpush1.msra.mxu0 0.0
    %775 = vmatprep.subr.mxu0 0.0
    %776 = vmatpush1.msra.mxu0 0.0
    %777 = vmatprep.subr.mxu0 0.0
    %778 = vmatpush1.msra.mxu0 0.0
    %779 = vmatprep.subr.mxu0 0.0
    %780 = vmatpush1.msra.mxu0 0.0
    %781 = vmatprep.subr.mxu0 0.0
    %782 = vmatpush1.msra.mxu0 0.0
    %783 = vmatprep.subr.mxu0 0.0
    %784 = vmatpush1.msra.mxu0 0.0
    %785 = vmatprep.subr.mxu0 0.0
    %786 = vmatpush1.msra.mxu0 0.0
    %787 = vmatprep.subr.mxu0 0.0
    %788 = vmatpush1.msra.mxu0 0.0
    %789 = vmatprep.subr.mxu0 0.0
    %790 = vmatpush1.msra.mxu0 0.0
    %791 = vmatprep.subr.mxu0 0.0
    %792 = vmatpush1.msra.mxu0 0.0
    %793 = vmatprep.subr.mxu0 0.0
    %794 = vmatpush1.msra.mxu0 0.0
    %795 = vmatprep.mubr.f32.mxu0 0.0
    %796 = vmatmul.mubr.f32.gmra.mrb[0].mxu0 %v729
    %v797 = vpop.f32.mrb[0].mxu0
    %v798 = vadd.f32 0.0, %v797
    %v799 = vpop.f32.mrb[0].mxu0
    %800 = vdwg.mxu0
    %v802 = vsel %vm388, %v550, 0
    %804 = vmatprep.subr.mxu0 0.0
    %805 = vmatpush1.msra.mxu0 %v128
    %806 = vmatprep.subr.mxu0 0.0
    %807 = vmatpush1.msra.mxu0 %v129
    %808 = vmatprep.subr.mxu0 0.0
    %809 = vmatpush1.msra.mxu0 0.0
    %810 = vmatprep.subr.mxu0 0.0
    %811 = vmatpush1.msra.mxu0 0.0
    %812 = vmatprep.subr.mxu0 0.0
    %813 = vmatpush1.msra.mxu0 0.0
    %814 = vmatprep.subr.mxu0 0.0
    %815 = vmatpush1.msra.mxu0 0.0
    %816 = vmatprep.subr.mxu0 0.0
    %817 = vmatpush1.msra.mxu0 0.0
    %818 = vmatprep.subr.mxu0 0.0
    %819 = vmatpush1.msra.mxu0 0.0
    %820 = vmatprep.subr.mxu0 0.0
    %821 = vmatpush1.msra.mxu0 0.0
    %822 = vmatprep.subr.mxu0 0.0
    %823 = vmatpush1.msra.mxu0 0.0
    %824 = vmatprep.subr.mxu0 0.0
    %825 = vmatpush1.msra.mxu0 0.0
    %826 = vmatprep.subr.mxu0 0.0
    %827 = vmatpush1.msra.mxu0 0.0
    %828 = vmatprep.subr.mxu0 0.0
    %829 = vmatpush1.msra.mxu0 0.0
    %830 = vmatprep.subr.mxu0 0.0
    %831 = vmatpush1.msra.mxu0 0.0
    %832 = vmatprep.subr.mxu0 0.0
    %833 = vmatpush1.msra.mxu0 0.0
    %834 = vmatprep.subr.mxu0 0.0
    %835 = vmatpush1.msra.mxu0 0.0
    %836 = vmatprep.subr.mxu0 0.0
    %837 = vmatpush1.msra.mxu0 0.0
    %838 = vmatprep.subr.mxu0 0.0
    %839 = vmatpush1.msra.mxu0 0.0
    %840 = vmatprep.subr.mxu0 0.0
    %841 = vmatpush1.msra.mxu0 0.0
    %842 = vmatprep.subr.mxu0 0.0
    %843 = vmatpush1.msra.mxu0 0.0
    %844 = vmatprep.subr.mxu0 0.0
    %845 = vmatpush1.msra.mxu0 0.0
    %846 = vmatprep.subr.mxu0 0.0
    %847 = vmatpush1.msra.mxu0 0.0
    %848 = vmatprep.subr.mxu0 0.0
    %849 = vmatpush1.msra.mxu0 0.0
    %850 = vmatprep.subr.mxu0 0.0
    %851 = vmatpush1.msra.mxu0 0.0
    %852 = vmatprep.subr.mxu0 0.0
    %853 = vmatpush1.msra.mxu0 0.0
    %854 = vmatprep.subr.mxu0 0.0
    %855 = vmatpush1.msra.mxu0 0.0
    %856 = vmatprep.subr.mxu0 0.0
    %857 = vmatpush1.msra.mxu0 0.0
    %858 = vmatprep.subr.mxu0 0.0
    %859 = vmatpush1.msra.mxu0 0.0
    %860 = vmatprep.subr.mxu0 0.0
    %861 = vmatpush1.msra.mxu0 0.0
    %862 = vmatprep.subr.mxu0 0.0
    %863 = vmatpush1.msra.mxu0 0.0
    %864 = vmatprep.subr.mxu0 0.0
    %865 = vmatpush1.msra.mxu0 0.0
    %866 = vmatprep.subr.mxu0 0.0
    %867 = vmatpush1.msra.mxu0 0.0
    %868 = vmatprep.mubr.f32.mxu0 0.0
    %869 = vmatmul.mubr.f32.gmra.mrb[0].mxu0 %v802
    %v870 = vpop.f32.mrb[0].mxu0
    %v871 = vadd.f32 %v798, %v870
    %v872 = vpop.f32.mrb[0].mxu0
    %873 = vdwg.mxu0
    %874 = vst [vmem:[%s12] sm:$0xff] %v871
    %v876 = vsel %vm388, %v295, 0
    %v879 = vsel %vm388, %v300, 0
    %881 = vmatprep.subr.mxu0 0.0
    %882 = vmatpush1.xpose.msra.mxu0 %v876
    %883 = vmatprep.subr.mxu0 0.0
    %884 = vmatpush1.xpose.msra.mxu0 %v879
    %885 = vmatprep.subr.mxu0 0.0
    %886 = vmatpush1.xpose.msra.mxu0 0.0
    %887 = vmatprep.subr.mxu0 0.0
    %888 = vmatpush1.xpose.msra.mxu0 0.0
    %889 = vmatprep.subr.mxu0 0.0
    %890 = vmatpush1.xpose.msra.mxu0 0.0
    %891 = vmatprep.subr.mxu0 0.0
    %892 = vmatpush1.xpose.msra.mxu0 0.0
    %893 = vmatprep.subr.mxu0 0.0
    %894 = vmatpush1.xpose.msra.mxu0 0.0
    %895 = vmatprep.subr.mxu0 0.0
    %896 = vmatpush1.xpose.msra.mxu0 0.0
    %897 = vmatprep.subr.mxu0 0.0
    %898 = vmatpush1.xpose.msra.mxu0 0.0
    %899 = vmatprep.subr.mxu0 0.0
    %900 = vmatpush1.xpose.msra.mxu0 0.0
    %901 = vmatprep.subr.mxu0 0.0
    %902 = vmatpush1.xpose.msra.mxu0 0.0
    %903 = vmatprep.subr.mxu0 0.0
    %904 = vmatpush1.xpose.msra.mxu0 0.0
    %905 = vmatprep.subr.mxu0 0.0
    %906 = vmatpush1.xpose.msra.mxu0 0.0
    %907 = vmatprep.subr.mxu0 0.0
    %908 = vmatpush1.xpose.msra.mxu0 0.0
    %909 = vmatprep.subr.mxu0 0.0
    %910 = vmatpush1.xpose.msra.mxu0 0.0
    %911 = vmatprep.subr.mxu0 0.0
    %912 = vmatpush1.xpose.msra.mxu0 0.0
    %913 = vmatprep.subr.mxu0 0.0
    %914 = vmatpush1.xpose.msra.mxu0 0.0
    %915 = vmatprep.subr.mxu0 0.0
    %916 = vmatpush1.xpose.msra.mxu0 0.0
    %917 = vmatprep.subr.mxu0 0.0
    %918 = vmatpush1.xpose.msra.mxu0 0.0
    %919 = vmatprep.subr.mxu0 0.0
    %920 = vmatpush1.xpose.msra.mxu0 0.0
    %921 = vmatprep.subr.mxu0 0.0
    %922 = vmatpush1.xpose.msra.mxu0 0.0
    %923 = vmatprep.subr.mxu0 0.0
    %924 = vmatpush1.xpose.msra.mxu0 0.0
    %925 = vmatprep.subr.mxu0 0.0
    %926 = vmatpush1.xpose.msra.mxu0 0.0
    %927 = vmatprep.subr.mxu0 0.0
    %928 = vmatpush1.xpose.msra.mxu0 0.0
    %929 = vmatprep.subr.mxu0 0.0
    %930 = vmatpush1.xpose.msra.mxu0 0.0
    %931 = vmatprep.subr.mxu0 0.0
    %932 = vmatpush1.xpose.msra.mxu0 0.0
    %933 = vmatprep.subr.mxu0 0.0
    %934 = vmatpush1.xpose.msra.mxu0 0.0
    %935 = vmatprep.subr.mxu0 0.0
    %936 = vmatpush1.xpose.msra.mxu0 0.0
    %937 = vmatprep.subr.mxu0 0.0
    %938 = vmatpush1.xpose.msra.mxu0 0.0
    %939 = vmatprep.subr.mxu0 0.0
    %940 = vmatpush1.xpose.msra.mxu0 0.0
    %941 = vmatprep.subr.mxu0 0.0
    %942 = vmatpush1.xpose.msra.mxu0 0.0
    %943 = vmatprep.subr.mxu0 0.0
    %944 = vmatpush1.xpose.msra.mxu0 0.0
    %945 = vmatprep.mubr.f32.mxu0 0.0
    %946 = vmatmul.mubr.f32.gmra.mrb[0].mxu0 %v390
    %v947 = vpop.f32.mrb[0].mxu0
    %v948 = vadd.f32 0.0, %v947
    %v949 = vpop.f32.mrb[0].mxu0
    %950 = vdwg.mxu0
    %v951 = vmul.f32 %v948, 0.25
    %v952 = vsel %vm388, %v951, -inf
    %953 = vmax.xlane.f32.xlu0 %v952
    %v954 = vpop.xlane.xlu0 %953
    %v955 = vsub.f32 %v951, %v954
    %v956 = vmul.f32 %v955, 1.442695
    %v957 = vpow.pop %v956
    %v958 = vsel %vm388, %v957, 0.0
    %959 = vadd.xlane.f32.xlu0 %v958
    %v960 = vpop.xlane.xlu0 %959
    %v961 = vrcp.pop %v960
    %v962 = vmul.f32 %v957, %v961
    %v964 = vsel %vm388, %v962, 0
    %966 = vmatprep.subr.mxu0 0.0
    %967 = vmatpush1.msra.mxu0 %v380
    %968 = vmatprep.subr.mxu0 0.0
    %969 = vmatpush1.msra.mxu0 %v385
    %970 = vmatprep.subr.mxu0 0.0
    %971 = vmatpush1.msra.mxu0 0.0
    %972 = vmatprep.subr.mxu0 0.0
    %973 = vmatpush1.msra.mxu0 0.0
    %974 = vmatprep.subr.mxu0 0.0
    %975 = vmatpush1.msra.mxu0 0.0
    %976 = vmatprep.subr.mxu0 0.0
    %977 = vmatpush1.msra.mxu0 0.0
    %978 = vmatprep.subr.mxu0 0.0
    %979 = vmatpush1.msra.mxu0 0.0
    %980 = vmatprep.subr.mxu0 0.0
    %981 = vmatpush1.msra.mxu0 0.0
    %982 = vmatprep.subr.mxu0 0.0
    %983 = vmatpush1.msra.mxu0 0.0
    %984 = vmatprep.subr.mxu0 0.0
    %985 = vmatpush1.msra.mxu0 0.0
    %986 = vmatprep.subr.mxu0 0.0
    %987 = vmatpush1.msra.mxu0 0.0
    %988 = vmatprep.subr.mxu0 0.0
    %989 = vmatpush1.msra.mxu0 0.0
    %990 = vmatprep.subr.mxu0 0.0
    %991 = vmatpush1.msra.mxu0 0.0
    %992 = vmatprep.subr.mxu0 0.0
    %993 = vmatpush1.msra.mxu0 0.0
    %994 = vmatprep.subr.mxu0 0.0
    %995 = vmatpush1.msra.mxu0 0.0
    %996 = vmatprep.subr.mxu0 0.0
    %997 = vmatpush1.msra.mxu0 0.0
    %998 = vmatprep.subr.mxu0 0.0
    %999 = vmatpush1.msra.mxu0 0.0
    %1000 = vmatprep.subr.mxu0 0.0
    %1001 = vmatpush1.msra.mxu0 0.0
    %1002 = vmatprep.subr.mxu0 0.0
    %1003 = vmatpush1.msra.mxu0 0.0
    %1004 = vmatprep.subr.mxu0 0.0
    %1005 = vmatpush1.msra.mxu0 0.0
    %1006 = vmatprep.subr.mxu0 0.0
    %1007 = vmatpush1.msra.mxu0 0.0
    %1008 = vmatprep.subr.mxu0 0.0
    %1009 = vmatpush1.msra.mxu0 0.0
    %1010 = vmatprep.subr.mxu0 0.0
    %1011 = vmatpush1.msra.mxu0 0.0
    %1012 = vmatprep.subr.mxu0 0.0
    %1013 = vmatpush1.msra.mxu0 0.0
    %1014 = vmatprep.subr.mxu0 0.0
    %1015 = vmatpush1.msra.mxu0 0.0
    %1016 = vmatprep.subr.mxu0 0.0
    %1017 = vmatpush1.msra.mxu0 0.0
    %1018 = vmatprep.subr.mxu0 0.0
    %1019 = vmatpush1.msra.mxu0 0.0
    %1020 = vmatprep.subr.mxu0 0.0
    %1021 = vmatpush1.msra.mxu0 0.0
    %1022 = vmatprep.subr.mxu0 0.0
    %1023 = vmatpush1.msra.mxu0 0.0
    %1024 = vmatprep.subr.mxu0 0.0
    %1025 = vmatpush1.msra.mxu0 0.0
    %1026 = vmatprep.subr.mxu0 0.0
    %1027 = vmatpush1.msra.mxu0 0.0
    %1028 = vmatprep.subr.mxu0 0.0
    %1029 = vmatpush1.msra.mxu0 0.0
    %1030 = vmatprep.mubr.f32.mxu0 0.0
    %1031 = vmatmul.mubr.f32.gmra.mrb[0].mxu0 %v964
    %v1032 = vpop.f32.mrb[0].mxu0
    %v1033 = vadd.f32 0.0, %v1032
    %v1034 = vpop.f32.mrb[0].mxu0
    %1035 = vdwg.mxu0
    %1036 = vrot.lane.b32.xlu0 %v295, 112
    %v1037 = vpop.permute.xlu0 %1036
    %1038 = vrot.lane.b32.xlu0 %v300, 112
    %v1039 = vpop.permute.xlu0 %1038
    %v1040 = vsel %vm388, %v1037, 0
    %v1042 = vsel %vm388, %v1039, 0
    %1044 = vmatprep.subr.mxu0 0.0
    %1045 = vmatpush1.xpose.msra.mxu0 %v1040
    %1046 = vmatprep.subr.mxu0 0.0
    %1047 = vmatpush1.xpose.msra.mxu0 %v1042
    %1048 = vmatprep.subr.mxu0 0.0
    %1049 = vmatpush1.xpose.msra.mxu0 0.0
    %1050 = vmatprep.subr.mxu0 0.0
    %1051 = vmatpush1.xpose.msra.mxu0 0.0
    %1052 = vmatprep.subr.mxu0 0.0
    %1053 = vmatpush1.xpose.msra.mxu0 0.0
    %1054 = vmatprep.subr.mxu0 0.0
    %1055 = vmatpush1.xpose.msra.mxu0 0.0
    %1056 = vmatprep.subr.mxu0 0.0
    %1057 = vmatpush1.xpose.msra.mxu0 0.0
    %1058 = vmatprep.subr.mxu0 0.0
    %1059 = vmatpush1.xpose.msra.mxu0 0.0
    %1060 = vmatprep.subr.mxu0 0.0
    %1061 = vmatpush1.xpose.msra.mxu0 0.0
    %1062 = vmatprep.subr.mxu0 0.0
    %1063 = vmatpush1.xpose.msra.mxu0 0.0
    %1064 = vmatprep.subr.mxu0 0.0
    %1065 = vmatpush1.xpose.msra.mxu0 0.0
    %1066 = vmatprep.subr.mxu0 0.0
    %1067 = vmatpush1.xpose.msra.mxu0 0.0
    %1068 = vmatprep.subr.mxu0 0.0
    %1069 = vmatpush1.xpose.msra.mxu0 0.0
    %1070 = vmatprep.subr.mxu0 0.0
    %1071 = vmatpush1.xpose.msra.mxu0 0.0
    %1072 = vmatprep.subr.mxu0 0.0
    %1073 = vmatpush1.xpose.msra.mxu0 0.0
    %1074 = vmatprep.subr.mxu0 0.0
    %1075 = vmatpush1.xpose.msra.mxu0 0.0
    %1076 = vmatprep.subr.mxu0 0.0
    %1077 = vmatpush1.xpose.msra.mxu0 0.0
    %1078 = vmatprep.subr.mxu0 0.0
    %1079 = vmatpush1.xpose.msra.mxu0 0.0
    %1080 = vmatprep.subr.mxu0 0.0
    %1081 = vmatpush1.xpose.msra.mxu0 0.0
    %1082 = vmatprep.subr.mxu0 0.0
    %1083 = vmatpush1.xpose.msra.mxu0 0.0
    %1084 = vmatprep.subr.mxu0 0.0
    %1085 = vmatpush1.xpose.msra.mxu0 0.0
    %1086 = vmatprep.subr.mxu0 0.0
    %1087 = vmatpush1.xpose.msra.mxu0 0.0
    %1088 = vmatprep.subr.mxu0 0.0
    %1089 = vmatpush1.xpose.msra.mxu0 0.0
    %1090 = vmatprep.subr.mxu0 0.0
    %1091 = vmatpush1.xpose.msra.mxu0 0.0
    %1092 = vmatprep.subr.mxu0 0.0
    %1093 = vmatpush1.xpose.msra.mxu0 0.0
    %1094 = vmatprep.subr.mxu0 0.0
    %1095 = vmatpush1.xpose.msra.mxu0 0.0
    %1096 = vmatprep.subr.mxu0 0.0
    %1097 = vmatpush1.xpose.msra.mxu0 0.0
    %1098 = vmatprep.subr.mxu0 0.0
    %1099 = vmatpush1.xpose.msra.mxu0 0.0
    %1100 = vmatprep.subr.mxu0 0.0
    %1101 = vmatpush1.xpose.msra.mxu0 0.0
    %1102 = vmatprep.subr.mxu0 0.0
    %1103 = vmatpush1.xpose.msra.mxu0 0.0
    %1104 = vmatprep.subr.mxu0 0.0
    %1105 = vmatpush1.xpose.msra.mxu0 0.0
    %1106 = vmatprep.subr.mxu0 0.0
    %1107 = vmatpush1.xpose.msra.mxu0 0.0
    %1108 = vmatprep.mubr.f32.mxu0 0.0
    %1109 = vmatmul.mubr.f32.gmra.mrb[0].mxu0 %v559
    %v1110 = vpop.f32.mrb[0].mxu0
    %v1111 = vadd.f32 0.0, %v1110
    %v1112 = vpop.f32.mrb[0].mxu0
    %1113 = vdwg.mxu0
    %v1114 = vmul.f32 %v1111, 0.25
    %v1115 = vsel %vm388, %v1114, -inf
    %1116 = vmax.xlane.f32.xlu0 %v1115
    %v1117 = vpop.xlane.xlu0 %1116
    %v1118 = vsub.f32 %v1114, %v1117
    %v1119 = vmul.f32 %v1118, 1.442695
    %v1120 = vpow.pop %v1119
    %v1121 = vsel %vm388, %v1120, 0.0
    %1122 = vadd.xlane.f32.xlu0 %v1121
    %v1123 = vpop.xlane.xlu0 %1122
    %v1124 = vrcp.pop %v1123
    %v1125 = vmul.f32 %v1120, %v1124
    %1128 = vrot.lane.b32.xlu0 %v380, 112
    %v1129 = vpop.permute.xlu0 %1128
    %1130 = vrot.lane.b32.xlu0 %v385, 112
    %v1131 = vpop.permute.xlu0 %1130
    %v1135 = vsel %vm388, %v1125, 0
    %1137 = vmatprep.subr.mxu0 0.0
    %1138 = vmatpush1.msra.mxu0 %v1129
    %1139 = vmatprep.subr.mxu0 0.0
    %1140 = vmatpush1.msra.mxu0 %v1131
    %1141 = vmatprep.subr.mxu0 0.0
    %1142 = vmatpush1.msra.mxu0 0.0
    %1143 = vmatprep.subr.mxu0 0.0
    %1144 = vmatpush1.msra.mxu0 0.0
    %1145 = vmatprep.subr.mxu0 0.0
    %1146 = vmatpush1.msra.mxu0 0.0
    %1147 = vmatprep.subr.mxu0 0.0
    %1148 = vmatpush1.msra.mxu0 0.0
    %1149 = vmatprep.subr.mxu0 0.0
    %1150 = vmatpush1.msra.mxu0 0.0
    %1151 = vmatprep.subr.mxu0 0.0
    %1152 = vmatpush1.msra.mxu0 0.0
    %1153 = vmatprep.subr.mxu0 0.0
    %1154 = vmatpush1.msra.mxu0 0.0
    %1155 = vmatprep.subr.mxu0 0.0
    %1156 = vmatpush1.msra.mxu0 0.0
    %1157 = vmatprep.subr.mxu0 0.0
    %1158 = vmatpush1.msra.mxu0 0.0
    %1159 = vmatprep.subr.mxu0 0.0
    %1160 = vmatpush1.msra.mxu0 0.0
    %1161 = vmatprep.subr.mxu0 0.0
    %1162 = vmatpush1.msra.mxu0 0.0
    %1163 = vmatprep.subr.mxu0 0.0
    %1164 = vmatpush1.msra.mxu0 0.0
    %1165 = vmatprep.subr.mxu0 0.0
    %1166 = vmatpush1.msra.mxu0 0.0
    %1167 = vmatprep.subr.mxu0 0.0
    %1168 = vmatpush1.msra.mxu0 0.0
    %1169 = vmatprep.subr.mxu0 0.0
    %1170 = vmatpush1.msra.mxu0 0.0
    %1171 = vmatprep.subr.mxu0 0.0
    %1172 = vmatpush1.msra.mxu0 0.0
    %1173 = vmatprep.subr.mxu0 0.0
    %1174 = vmatpush1.msra.mxu0 0.0
    %1175 = vmatprep.subr.mxu0 0.0
    %1176 = vmatpush1.msra.mxu0 0.0
    %1177 = vmatprep.subr.mxu0 0.0
    %1178 = vmatpush1.msra.mxu0 0.0
    %1179 = vmatprep.subr.mxu0 0.0
    %1180 = vmatpush1.msra.mxu0 0.0
    %1181 = vmatprep.subr.mxu0 0.0
    %1182 = vmatpush1.msra.mxu0 0.0
    %1183 = vmatprep.subr.mxu0 0.0
    %1184 = vmatpush1.msra.mxu0 0.0
    %1185 = vmatprep.subr.mxu0 0.0
    %1186 = vmatpush1.msra.mxu0 0.0
    %1187 = vmatprep.subr.mxu0 0.0
    %1188 = vmatpush1.msra.mxu0 0.0
    %1189 = vmatprep.subr.mxu0 0.0
    %1190 = vmatpush1.msra.mxu0 0.0
    %1191 = vmatprep.subr.mxu0 0.0
    %1192 = vmatpush1.msra.mxu0 0.0
    %1193 = vmatprep.subr.mxu0 0.0
    %1194 = vmatpush1.msra.mxu0 0.0
    %1195 = vmatprep.subr.mxu0 0.0
    %1196 = vmatpush1.msra.mxu0 0.0
    %1197 = vmatprep.subr.mxu0 0.0
    %1198 = vmatpush1.msra.mxu0 0.0
    %1199 = vmatprep.subr.mxu0 0.0
    %1200 = vmatpush1.msra.mxu0 0.0
    %1201 = vmatprep.mubr.f32.mxu0 0.0
    %1202 = vmatmul.mubr.f32.gmra.mrb[0].mxu0 %v1135
    %v1203 = vpop.f32.mrb[0].mxu0
    %v1204 = vadd.f32 0.0, %v1203
    %v1205 = vpop.f32.mrb[0].mxu0
    %1206 = vdwg.mxu0
    %v1208 = vsel %vm388, %v1204, 0
    %1210 = vmatprep.subr.mxu0 0.0
    %1211 = vmatpush1.msra.mxu0 %v130
    %1212 = vmatprep.subr.mxu0 0.0
    %1213 = vmatpush1.msra.mxu0 %v131
    %1214 = vmatprep.subr.mxu0 0.0
    %1215 = vmatpush1.msra.mxu0 0.0
    %1216 = vmatprep.subr.mxu0 0.0
    %1217 = vmatpush1.msra.mxu0 0.0
    %1218 = vmatprep.subr.mxu0 0.0
    %1219 = vmatpush1.msra.mxu0 0.0
    %1220 = vmatprep.subr.mxu0 0.0
    %1221 = vmatpush1.msra.mxu0 0.0
    %1222 = vmatprep.subr.mxu0 0.0
    %1223 = vmatpush1.msra.mxu0 0.0
    %1224 = vmatprep.subr.mxu0 0.0
    %1225 = vmatpush1.msra.mxu0 0.0
    %1226 = vmatprep.subr.mxu0 0.0
    %1227 = vmatpush1.msra.mxu0 0.0
    %1228 = vmatprep.subr.mxu0 0.0
    %1229 = vmatpush1.msra.mxu0 0.0
    %1230 = vmatprep.subr.mxu0 0.0
    %1231 = vmatpush1.msra.mxu0 0.0
    %1232 = vmatprep.subr.mxu0 0.0
    %1233 = vmatpush1.msra.mxu0 0.0
    %1234 = vmatprep.subr.mxu0 0.0
    %1235 = vmatpush1.msra.mxu0 0.0
    %1236 = vmatprep.subr.mxu0 0.0
    %1237 = vmatpush1.msra.mxu0 0.0
    %1238 = vmatprep.subr.mxu0 0.0
    %1239 = vmatpush1.msra.mxu0 0.0
    %1240 = vmatprep.subr.mxu0 0.0
    %1241 = vmatpush1.msra.mxu0 0.0
    %1242 = vmatprep.subr.mxu0 0.0
    %1243 = vmatpush1.msra.mxu0 0.0
    %1244 = vmatprep.subr.mxu0 0.0
    %1245 = vmatpush1.msra.mxu0 0.0
    %1246 = vmatprep.subr.mxu0 0.0
    %1247 = vmatpush1.msra.mxu0 0.0
    %1248 = vmatprep.subr.mxu0 0.0
    %1249 = vmatpush1.msra.mxu0 0.0
    %1250 = vmatprep.subr.mxu0 0.0
    %1251 = vmatpush1.msra.mxu0 0.0
    %1252 = vmatprep.subr.mxu0 0.0
    %1253 = vmatpush1.msra.mxu0 0.0
    %1254 = vmatprep.subr.mxu0 0.0
    %1255 = vmatpush1.msra.mxu0 0.0
    %1256 = vmatprep.subr.mxu0 0.0
    %1257 = vmatpush1.msra.mxu0 0.0
    %1258 = vmatprep.subr.mxu0 0.0
    %1259 = vmatpush1.msra.mxu0 0.0
    %1260 = vmatprep.subr.mxu0 0.0
    %1261 = vmatpush1.msra.mxu0 0.0
    %1262 = vmatprep.subr.mxu0 0.0
    %1263 = vmatpush1.msra.mxu0 0.0
    %1264 = vmatprep.subr.mxu0 0.0
    %1265 = vmatpush1.msra.mxu0 0.0
    %1266 = vmatprep.subr.mxu0 0.0
    %1267 = vmatpush1.msra.mxu0 0.0
    %1268 = vmatprep.subr.mxu0 0.0
    %1269 = vmatpush1.msra.mxu0 0.0
    %1270 = vmatprep.subr.mxu0 0.0
    %1271 = vmatpush1.msra.mxu0 0.0
    %1272 = vmatprep.subr.mxu0 0.0
    %1273 = vmatpush1.msra.mxu0 0.0
    %1274 = vmatprep.mubr.f32.mxu0 0.0
    %1275 = vmatmul.mubr.f32.gmra.mrb[0].mxu0 %v1208
    %v1276 = vpop.f32.mrb[0].mxu0
    %v1277 = vadd.f32 0.0, %v1276
    %v1278 = vpop.f32.mrb[0].mxu0
    %1279 = vdwg.mxu0
    %v1281 = vsel %vm388, %v1033, 0
    %1283 = vmatprep.subr.mxu0 0.0
    %1284 = vmatpush1.msra.mxu0 %v128
    %1285 = vmatprep.subr.mxu0 0.0
    %1286 = vmatpush1.msra.mxu0 %v129
    %1287 = vmatprep.subr.mxu0 0.0
    %1288 = vmatpush1.msra.mxu0 0.0
    %1289 = vmatprep.subr.mxu0 0.0
    %1290 = vmatpush1.msra.mxu0 0.0
    %1291 = vmatprep.subr.mxu0 0.0
    %1292 = vmatpush1.msra.mxu0 0.0
    %1293 = vmatprep.subr.mxu0 0.0
    %1294 = vmatpush1.msra.mxu0 0.0
    %1295 = vmatprep.subr.mxu0 0.0
    %1296 = vmatpush1.msra.mxu0 0.0
    %1297 = vmatprep.subr.mxu0 0.0
    %1298 = vmatpush1.msra.mxu0 0.0
    %1299 = vmatprep.subr.mxu0 0.0
    %1300 = vmatpush1.msra.mxu0 0.0
    %1301 = vmatprep.subr.mxu0 0.0
    %1302 = vmatpush1.msra.mxu0 0.0
    %1303 = vmatprep.subr.mxu0 0.0
    %1304 = vmatpush1.msra.mxu0 0.0
    %1305 = vmatprep.subr.mxu0 0.0
    %1306 = vmatpush1.msra.mxu0 0.0
    %1307 = vmatprep.subr.mxu0 0.0
    %1308 = vmatpush1.msra.mxu0 0.0
    %1309 = vmatprep.subr.mxu0 0.0
    %1310 = vmatpush1.msra.mxu0 0.0
    %1311 = vmatprep.subr.mxu0 0.0
    %1312 = vmatpush1.msra.mxu0 0.0
    %1313 = vmatprep.subr.mxu0 0.0
    %1314 = vmatpush1.msra.mxu0 0.0
    %1315 = vmatprep.subr.mxu0 0.0
    %1316 = vmatpush1.msra.mxu0 0.0
    %1317 = vmatprep.subr.mxu0 0.0
    %1318 = vmatpush1.msra.mxu0 0.0
    %1319 = vmatprep.subr.mxu0 0.0
    %1320 = vmatpush1.msra.mxu0 0.0
    %1321 = vmatprep.subr.mxu0 0.0
    %1322 = vmatpush1.msra.mxu0 0.0
    %1323 = vmatprep.subr.mxu0 0.0
    %1324 = vmatpush1.msra.mxu0 0.0
    %1325 = vmatprep.subr.mxu0 0.0
    %1326 = vmatpush1.msra.mxu0 0.0
    %1327 = vmatprep.subr.mxu0 0.0
    %1328 = vmatpush1.msra.mxu0 0.0
    %1329 = vmatprep.subr.mxu0 0.0
    %1330 = vmatpush1.msra.mxu0 0.0
    %1331 = vmatprep.subr.mxu0 0.0
    %1332 = vmatpush1.msra.mxu0 0.0
    %1333 = vmatprep.subr.mxu0 0.0
    %1334 = vmatpush1.msra.mxu0 0.0
    %1335 = vmatprep.subr.mxu0 0.0
    %1336 = vmatpush1.msra.mxu0 0.0
    %1337 = vmatprep.subr.mxu0 0.0
    %1338 = vmatpush1.msra.mxu0 0.0
    %1339 = vmatprep.subr.mxu0 0.0
    %1340 = vmatpush1.msra.mxu0 0.0
    %1341 = vmatprep.subr.mxu0 0.0
    %1342 = vmatpush1.msra.mxu0 0.0
    %1343 = vmatprep.subr.mxu0 0.0
    %1344 = vmatpush1.msra.mxu0 0.0
    %1345 = vmatprep.subr.mxu0 0.0
    %1346 = vmatpush1.msra.mxu0 0.0
    %1347 = vmatprep.mubr.f32.mxu0 0.0
    %1348 = vmatmul.mubr.f32.gmra.mrb[0].mxu0 %v1281
    %v1349 = vpop.f32.mrb[0].mxu0
    %v1350 = vadd.f32 %v1277, %v1349
    %v1351 = vpop.f32.mrb[0].mxu0
    %1352 = vdwg.mxu0
    %1353 = vst [vmem:[%s12 + $0x8] sm:$0xff] %v1350
    %v1354 = vld [vmem:[%s6] sm:$0xff]
    %v1355 = vld [vmem:[#allocation4] sm:$0xff]
    %v1356 = vld [vmem:[#allocation4 + $0x8] sm:$0xff]
    %v1357 = vld [vmem:[#allocation4 + $0x10] sm:$0xff]
    %v1358 = vld [vmem:[#allocation4 + $0x18] sm:$0xff]
    %v1359 = vld [vmem:[#allocation6] sm:$0xff]
    %v1360 = vld [vmem:[#allocation6 + $0x8] sm:$0xff]
    %v1361 = vld [vmem:[#allocation6 + $0x10] sm:$0xff]
    %v1362 = vld [vmem:[#allocation6 + $0x18] sm:$0xff]
    %v1363 = vld [vmem:[#allocation7] sm:$0xff]
    %v1364 = vld [vmem:[#allocation7 + $0x8] sm:$0xff]
    %v1365 = vld [vmem:[#allocation7 + $0x10] sm:$0xff]
    %v1366 = vld [vmem:[#allocation7 + $0x18] sm:$0xff]
    %v1367 = vld [vmem:[#allocation9] sm:$0xff]
    %v1368 = vld [vmem:[#allocation9 + $0x8] sm:$0xff]
    %v1369 = vld [vmem:[#allocation9 + $0x10] sm:$0xff]
    %v1370 = vld [vmem:[#allocation9 + $0x18] sm:$0xff]
    %v1371 = vld [vmem:[%s11] sm:$0xff]
    %v1372 = vld [vmem:[%s11 + $0x8] sm:$0xff]
    %v1373 = vld [vmem:[%s11 + $0x10] sm:$0xff]
    %v1374 = vld [vmem:[%s11 + $0x18] sm:$0xff]
    %v1376 = vsel %vm132, %v1354, 0
    %1378 = vmatprep.subr.mxu0 0.0
    %1379 = vmatpush1.msra.mxu0 %v1359
    %1380 = vmatprep.subr.mxu0 0.0
    %1381 = vmatpush1.msra.mxu0 %v1360
    %1382 = vmatprep.subr.mxu0 0.0
    %1383 = vmatpush1.msra.mxu0 %v1361
    %1384 = vmatprep.subr.mxu0 0.0
    %1385 = vmatpush1.msra.mxu0 %v1362
    %1386 = vmatprep.subr.mxu0 0.0
    %1387 = vmatpush1.msra.mxu0 0.0
    %1388 = vmatprep.subr.mxu0 0.0
    %1389 = vmatpush1.msra.mxu0 0.0
    %1390 = vmatprep.subr.mxu0 0.0
    %1391 = vmatpush1.msra.mxu0 0.0
    %1392 = vmatprep.subr.mxu0 0.0
    %1393 = vmatpush1.msra.mxu0 0.0
    %1394 = vmatprep.subr.mxu0 0.0
    %1395 = vmatpush1.msra.mxu0 0.0
    %1396 = vmatprep.subr.mxu0 0.0
    %1397 = vmatpush1.msra.mxu0 0.0
    %1398 = vmatprep.subr.mxu0 0.0
    %1399 = vmatpush1.msra.mxu0 0.0
    %1400 = vmatprep.subr.mxu0 0.0
    %1401 = vmatpush1.msra.mxu0 0.0
    %1402 = vmatprep.subr.mxu0 0.0
    %1403 = vmatpush1.msra.mxu0 0.0
    %1404 = vmatprep.subr.mxu0 0.0
    %1405 = vmatpush1.msra.mxu0 0.0
    %1406 = vmatprep.subr.mxu0 0.0
    %1407 = vmatpush1.msra.mxu0 0.0
    %1408 = vmatprep.subr.mxu0 0.0
    %1409 = vmatpush1.msra.mxu0 0.0
    %1410 = vmatprep.subr.mxu0 0.0
    %1411 = vmatpush1.msra.mxu0 0.0
    %1412 = vmatprep.subr.mxu0 0.0
    %1413 = vmatpush1.msra.mxu0 0.0
    %1414 = vmatprep.subr.mxu0 0.0
    %1415 = vmatpush1.msra.mxu0 0.0
    %1416 = vmatprep.subr.mxu0 0.0
    %1417 = vmatpush1.msra.mxu0 0.0
    %1418 = vmatprep.subr.mxu0 0.0
    %1419 = vmatpush1.msra.mxu0 0.0
    %1420 = vmatprep.subr.mxu0 0.0
    %1421 = vmatpush1.msra.mxu0 0.0
    %1422 = vmatprep.subr.mxu0 0.0
    %1423 = vmatpush1.msra.mxu0 0.0
    %1424 = vmatprep.subr.mxu0 0.0
    %1425 = vmatpush1.msra.mxu0 0.0
    %1426 = vmatprep.subr.mxu0 0.0
    %1427 = vmatpush1.msra.mxu0 0.0
    %1428 = vmatprep.subr.mxu0 0.0
    %1429 = vmatpush1.msra.mxu0 0.0
    %1430 = vmatprep.subr.mxu0 0.0
    %1431 = vmatpush1.msra.mxu0 0.0
    %1432 = vmatprep.subr.mxu0 0.0
    %1433 = vmatpush1.msra.mxu0 0.0
    %1434 = vmatprep.subr.mxu0 0.0
    %1435 = vmatpush1.msra.mxu0 0.0
    %1436 = vmatprep.subr.mxu0 0.0
    %1437 = vmatpush1.msra.mxu0 0.0
    %1438 = vmatprep.subr.mxu0 0.0
    %1439 = vmatpush1.msra.mxu0 0.0
    %1440 = vmatprep.subr.mxu0 0.0
    %1441 = vmatpush1.msra.mxu0 0.0
    %1442 = vmatprep.mubr.f32.mxu0 0.0
    %1443 = vmatmul.mubr.f32.gmra.mrb[0].mxu0 %v1376
    %v1444 = vpop.f32.mrb[0].mxu0
    %v1445 = vadd.f32 0.0, %v1444
    %v1446 = vpop.f32.mrb[0].mxu0
    %1447 = vdwg.mxu0
    %v1449 = vsel %vm132, %v1355, 0
    %v1452 = vsel %vm132, %v1356, 0
    %v1455 = vsel %vm132, %v1357, 0
    %v1458 = vsel %vm132, %v1358, 0
    %1460 = vmatprep.subr.mxu0 0.0
    %1461 = vmatpush1.msra.mxu0 %v1363
    %1462 = vmatprep.subr.mxu0 0.0
    %1463 = vmatpush1.msra.mxu0 %v1364
    %1464 = vmatprep.subr.mxu0 0.0
    %1465 = vmatpush1.msra.mxu0 %v1365
    %1466 = vmatprep.subr.mxu0 0.0
    %1467 = vmatpush1.msra.mxu0 %v1366
    %1468 = vmatprep.subr.mxu0 0.0
    %1469 = vmatpush1.msra.mxu0 0.0
    %1470 = vmatprep.subr.mxu0 0.0
    %1471 = vmatpush1.msra.mxu0 0.0
    %1472 = vmatprep.subr.mxu0 0.0
    %1473 = vmatpush1.msra.mxu0 0.0
    %1474 = vmatprep.subr.mxu0 0.0
    %1475 = vmatpush1.msra.mxu0 0.0
    %1476 = vmatprep.subr.mxu0 0.0
    %1477 = vmatpush1.msra.mxu0 0.0
    %1478 = vmatprep.subr.mxu0 0.0
    %1479 = vmatpush1.msra.mxu0 0.0
    %1480 = vmatprep.subr.mxu0 0.0
    %1481 = vmatpush1.msra.mxu0 0.0
    %1482 = vmatprep.subr.mxu0 0.0
    %1483 = vmatpush1.msra.mxu0 0.0
    %1484 = vmatprep.subr.mxu0 0.0
    %1485 = vmatpush1.msra.mxu0 0.0
    %1486 = vmatprep.subr.mxu0 0.0
    %1487 = vmatpush1.msra.mxu0 0.0
    %1488 = vmatprep.subr.mxu0 0.0
    %1489 = vmatpush1.msra.mxu0 0.0
    %1490 = vmatprep.subr.mxu0 0.0
    %1491 = vmatpush1.msra.mxu0 0.0
    %1492 = vmatprep.subr.mxu0 0.0
    %1493 = vmatpush1.msra.mxu0 0.0
    %1494 = vmatprep.subr.mxu0 0.0
    %1495 = vmatpush1.msra.mxu0 0.0
    %1496 = vmatprep.subr.mxu0 0.0
    %1497 = vmatpush1.msra.mxu0 0.0
    %1498 = vmatprep.subr.mxu0 0.0
    %1499 = vmatpush1.msra.mxu0 0.0
    %1500 = vmatprep.subr.mxu0 0.0
    %1501 = vmatpush1.msra.mxu0 0.0
    %1502 = vmatprep.subr.mxu0 0.0
    %1503 = vmatpush1.msra.mxu0 0.0
    %1504 = vmatprep.subr.mxu0 0.0
    %1505 = vmatpush1.msra.mxu0 0.0
    %1506 = vmatprep.subr.mxu0 0.0
    %1507 = vmatpush1.msra.mxu0 0.0
    %1508 = vmatprep.subr.mxu0 0.0
    %1509 = vmatpush1.msra.mxu0 0.0
    %1510 = vmatprep.subr.mxu0 0.0
    %1511 = vmatpush1.msra.mxu0 0.0
    %1512 = vmatprep.subr.mxu0 0.0
    %1513 = vmatpush1.msra.mxu0 0.0
    %1514 = vmatprep.subr.mxu0 0.0
    %1515 = vmatpush1.msra.mxu0 0.0
    %1516 = vmatprep.subr.mxu0 0.0
    %1517 = vmatpush1.msra.mxu0 0.0
    %1518 = vmatprep.subr.mxu0 0.0
    %1519 = vmatpush1.msra.mxu0 0.0
    %1520 = vmatprep.subr.mxu0 0.0
    %1521 = vmatpush1.msra.mxu0 0.0
    %1522 = vmatprep.subr.mxu0 0.0
    %1523 = vmatpush1.msra.mxu0 0.0
    %1524 = vmatprep.mubr.f32.mxu0 0.0
    %1525 = vmatmul.mubr.f32.gmra.mrb[0].mxu0 %v1449
    %v1526 = vpop.f32.mrb[0].mxu0
    %v1527 = vadd.f32 0.0, %v1526
    %v1528 = vpop.f32.mrb[0].mxu0
    %1529 = vmatprep.mubr.f32.mxu0 0.0
    %1530 = vmatmul.mubr.f32.gmra.mrb[0].mxu0 %v1452
    %v1531 = vpop.f32.mrb[0].mxu0
    %v1532 = vadd.f32 0.0, %v1531
    %v1533 = vpop.f32.mrb[0].mxu0
    %1534 = vmatprep.mubr.f32.mxu0 0.0
    %1535 = vmatmul.mubr.f32.gmra.mrb[0].mxu0 %v1455
    %v1536 = vpop.f32.mrb[0].mxu0
    %v1537 = vadd.f32 0.0, %v1536
    %v1538 = vpop.f32.mrb[0].mxu0
    %1539 = vmatprep.mubr.f32.mxu0 0.0
    %1540 = vmatmul.mubr.f32.gmra.mrb[0].mxu0 %v1458
    %v1541 = vpop.f32.mrb[0].mxu0
    %v1542 = vadd.f32 0.0, %v1541
    %v1543 = vpop.f32.mrb[0].mxu0
    %1544 = vdwg.mxu0
    %1545 = vmatprep.subr.mxu0 0.0
    %1546 = vmatpush1.msra.mxu0 %v1367
    %1547 = vmatprep.subr.mxu0 0.0
    %1548 = vmatpush1.msra.mxu0 %v1368
    %1549 = vmatprep.subr.mxu0 0.0
    %1550 = vmatpush1.msra.mxu0 %v1369
    %1551 = vmatprep.subr.mxu0 0.0
    %1552 = vmatpush1.msra.mxu0 %v1370
    %1553 = vmatprep.subr.mxu0 0.0
    %1554 = vmatpush1.msra.mxu0 0.0
    %1555 = vmatprep.subr.mxu0 0.0
    %1556 = vmatpush1.msra.mxu0 0.0
    %1557 = vmatprep.subr.mxu0 0.0
    %1558 = vmatpush1.msra.mxu0 0.0
    %1559 = vmatprep.subr.mxu0 0.0
    %1560 = vmatpush1.msra.mxu0 0.0
    %1561 = vmatprep.subr.mxu0 0.0
    %1562 = vmatpush1.msra.mxu0 0.0
    %1563 = vmatprep.subr.mxu0 0.0
    %1564 = vmatpush1.msra.mxu0 0.0
    %1565 = vmatprep.subr.mxu0 0.0
    %1566 = vmatpush1.msra.mxu0 0.0
    %1567 = vmatprep.subr.mxu0 0.0
    %1568 = vmatpush1.msra.mxu0 0.0
    %1569 = vmatprep.subr.mxu0 0.0
    %1570 = vmatpush1.msra.mxu0 0.0
    %1571 = vmatprep.subr.mxu0 0.0
    %1572 = vmatpush1.msra.mxu0 0.0
    %1573 = vmatprep.subr.mxu0 0.0
    %1574 = vmatpush1.msra.mxu0 0.0
    %1575 = vmatprep.subr.mxu0 0.0
    %1576 = vmatpush1.msra.mxu0 0.0
    %1577 = vmatprep.subr.mxu0 0.0
    %1578 = vmatpush1.msra.mxu0 0.0
    %1579 = vmatprep.subr.mxu0 0.0
    %1580 = vmatpush1.msra.mxu0 0.0
    %1581 = vmatprep.subr.mxu0 0.0
    %1582 = vmatpush1.msra.mxu0 0.0
    %1583 = vmatprep.subr.mxu0 0.0
    %1584 = vmatpush1.msra.mxu0 0.0
    %1585 = vmatprep.subr.mxu0 0.0
    %1586 = vmatpush1.msra.mxu0 0.0
    %1587 = vmatprep.subr.mxu0 0.0
    %1588 = vmatpush1.msra.mxu0 0.0
    %1589 = vmatprep.subr.mxu0 0.0
    %1590 = vmatpush1.msra.mxu0 0.0
    %1591 = vmatprep.subr.mxu0 0.0
    %1592 = vmatpush1.msra.mxu0 0.0
    %1593 = vmatprep.subr.mxu0 0.0
    %1594 = vmatpush1.msra.mxu0 0.0
    %1595 = vmatprep.subr.mxu0 0.0
    %1596 = vmatpush1.msra.mxu0 0.0
    %1597 = vmatprep.subr.mxu0 0.0
    %1598 = vmatpush1.msra.mxu0 0.0
    %1599 = vmatprep.subr.mxu0 0.0
    %1600 = vmatpush1.msra.mxu0 0.0
    %1601 = vmatprep.subr.mxu0 0.0
    %1602 = vmatpush1.msra.mxu0 0.0
    %1603 = vmatprep.subr.mxu0 0.0
    %1604 = vmatpush1.msra.mxu0 0.0
    %1605 = vmatprep.subr.mxu0 0.0
    %1606 = vmatpush1.msra.mxu0 0.0
    %1607 = vmatprep.subr.mxu0 0.0
    %1608 = vmatpush1.msra.mxu0 0.0
    %1609 = vmatprep.mubr.f32.mxu0 0.0
    %1610 = vmatmul.mubr.f32.gmra.mrb[0].mxu0 %v1449
    %v1611 = vpop.f32.mrb[0].mxu0
    %v1612 = vadd.f32 0.0, %v1611
    %v1613 = vpop.f32.mrb[0].mxu0
    %1614 = vmatprep.mubr.f32.mxu0 0.0
    %1615 = vmatmul.mubr.f32.gmra.mrb[0].mxu0 %v1452
    %v1616 = vpop.f32.mrb[0].mxu0
    %v1617 = vadd.f32 0.0, %v1616
    %v1618 = vpop.f32.mrb[0].mxu0
    %1619 = vmatprep.mubr.f32.mxu0 0.0
    %1620 = vmatmul.mubr.f32.gmra.mrb[0].mxu0 %v1455
    %v1621 = vpop.f32.mrb[0].mxu0
    %v1622 = vadd.f32 0.0, %v1621
    %v1623 = vpop.f32.mrb[0].mxu0
    %1624 = vmatprep.mubr.f32.mxu0 0.0
    %1625 = vmatmul.mubr.f32.gmra.mrb[0].mxu0 %v1458
    %v1626 = vpop.f32.mrb[0].mxu0
    %v1627 = vadd.f32 0.0, %v1626
    %v1628 = vpop.f32.mrb[0].mxu0
    %1629 = vdwg.mxu0
    %v1631 = vsel %vm388, %v1445, 0
    %v1634 = vsel %vm388, %v1527, 0
    %v1637 = vsel %vm388, %v1532, 0
    %1639 = vmatprep.subr.mxu0 0.0
    %1640 = vmatpush1.xpose.msra.mxu0 %v1634
    %1641 = vmatprep.subr.mxu0 0.0
    %1642 = vmatpush1.xpose.msra.mxu0 %v1637
    %1643 = vmatprep.subr.mxu0 0.0
    %1644 = vmatpush1.xpose.msra.mxu0 0.0
    %1645 = vmatprep.subr.mxu0 0.0
    %1646 = vmatpush1.xpose.msra.mxu0 0.0
    %1647 = vmatprep.subr.mxu0 0.0
    %1648 = vmatpush1.xpose.msra.mxu0 0.0
    %1649 = vmatprep.subr.mxu0 0.0
    %1650 = vmatpush1.xpose.msra.mxu0 0.0
    %1651 = vmatprep.subr.mxu0 0.0
    %1652 = vmatpush1.xpose.msra.mxu0 0.0
    %1653 = vmatprep.subr.mxu0 0.0
    %1654 = vmatpush1.xpose.msra.mxu0 0.0
    %1655 = vmatprep.subr.mxu0 0.0
    %1656 = vmatpush1.xpose.msra.mxu0 0.0
    %1657 = vmatprep.subr.mxu0 0.0
    %1658 = vmatpush1.xpose.msra.mxu0 0.0
    %1659 = vmatprep.subr.mxu0 0.0
    %1660 = vmatpush1.xpose.msra.mxu0 0.0
    %1661 = vmatprep.subr.mxu0 0.0
    %1662 = vmatpush1.xpose.msra.mxu0 0.0
    %1663 = vmatprep.subr.mxu0 0.0
    %1664 = vmatpush1.xpose.msra.mxu0 0.0
    %1665 = vmatprep.subr.mxu0 0.0
    %1666 = vmatpush1.xpose.msra.mxu0 0.0
    %1667 = vmatprep.subr.mxu0 0.0
    %1668 = vmatpush1.xpose.msra.mxu0 0.0
    %1669 = vmatprep.subr.mxu0 0.0
    %1670 = vmatpush1.xpose.msra.mxu0 0.0
    %1671 = vmatprep.subr.mxu0 0.0
    %1672 = vmatpush1.xpose.msra.mxu0 0.0
    %1673 = vmatprep.subr.mxu0 0.0
    %1674 = vmatpush1.xpose.msra.mxu0 0.0
    %1675 = vmatprep.subr.mxu0 0.0
    %1676 = vmatpush1.xpose.msra.mxu0 0.0
    %1677 = vmatprep.subr.mxu0 0.0
    %1678 = vmatpush1.xpose.msra.mxu0 0.0
    %1679 = vmatprep.subr.mxu0 0.0
    %1680 = vmatpush1.xpose.msra.mxu0 0.0
    %1681 = vmatprep.subr.mxu0 0.0
    %1682 = vmatpush1.xpose.msra.mxu0 0.0
    %1683 = vmatprep.subr.mxu0 0.0
    %1684 = vmatpush1.xpose.msra.mxu0 0.0
    %1685 = vmatprep.subr.mxu0 0.0
    %1686 = vmatpush1.xpose.msra.mxu0 0.0
    %1687 = vmatprep.subr.mxu0 0.0
    %1688 = vmatpush1.xpose.msra.mxu0 0.0
    %1689 = vmatprep.subr.mxu0 0.0
    %1690 = vmatpush1.xpose.msra.mxu0 0.0
    %1691 = vmatprep.subr.mxu0 0.0
    %1692 = vmatpush1.xpose.msra.mxu0 0.0
    %1693 = vmatprep.subr.mxu0 0.0
    %1694 = vmatpush1.xpose.msra.mxu0 0.0
    %1695 = vmatprep.subr.mxu0 0.0
    %1696 = vmatpush1.xpose.msra.mxu0 0.0
    %1697 = vmatprep.subr.mxu0 0.0
    %1698 = vmatpush1.xpose.msra.mxu0 0.0
    %1699 = vmatprep.subr.mxu0 0.0
    %1700 = vmatpush1.xpose.msra.mxu0 0.0
    %1701 = vmatprep.subr.mxu0 0.0
    %1702 = vmatpush1.xpose.msra.mxu0 0.0
    %1703 = vmatprep.mubr.f32.mxu0 0.0
    %1704 = vmatmul.mubr.f32.gmra.mrb[0].mxu0 %v1631
    %v1705 = vpop.f32.mrb[0].mxu0
    %v1706 = vadd.f32 0.0, %v1705
    %v1707 = vpop.f32.mrb[0].mxu0
    %1708 = vdwg.mxu0
    %v1709 = vmul.f32 %v1706, 0.25
    %v1710 = vsel %vm388, %v1709, -inf
    %1711 = vmax.xlane.f32.xlu0 %v1710
    %v1712 = vpop.xlane.xlu0 %1711
    %v1713 = vsub.f32 %v1709, %v1712
    %v1714 = vmul.f32 %v1713, 1.442695
    %v1715 = vpow.pop %v1714
    %v1716 = vsel %vm388, %v1715, 0.0
    %1717 = vadd.xlane.f32.xlu0 %v1716
    %v1718 = vpop.xlane.xlu0 %1717
    %v1719 = vrcp.pop %v1718
    %v1720 = vmul.f32 %v1715, %v1719
    %v1722 = vsel %vm388, %v1720, 0
    %1724 = vmatprep.subr.mxu0 0.0
    %1725 = vmatpush1.msra.mxu0 %v1612
    %1726 = vmatprep.subr.mxu0 0.0
    %1727 = vmatpush1.msra.mxu0 %v1617
    %1728 = vmatprep.subr.mxu0 0.0
    %1729 = vmatpush1.msra.mxu0 0.0
    %1730 = vmatprep.subr.mxu0 0.0
    %1731 = vmatpush1.msra.mxu0 0.0
    %1732 = vmatprep.subr.mxu0 0.0
    %1733 = vmatpush1.msra.mxu0 0.0
    %1734 = vmatprep.subr.mxu0 0.0
    %1735 = vmatpush1.msra.mxu0 0.0
    %1736 = vmatprep.subr.mxu0 0.0
    %1737 = vmatpush1.msra.mxu0 0.0
    %1738 = vmatprep.subr.mxu0 0.0
    %1739 = vmatpush1.msra.mxu0 0.0
    %1740 = vmatprep.subr.mxu0 0.0
    %1741 = vmatpush1.msra.mxu0 0.0
    %1742 = vmatprep.subr.mxu0 0.0
    %1743 = vmatpush1.msra.mxu0 0.0
    %1744 = vmatprep.subr.mxu0 0.0
    %1745 = vmatpush1.msra.mxu0 0.0
    %1746 = vmatprep.subr.mxu0 0.0
    %1747 = vmatpush1.msra.mxu0 0.0
    %1748 = vmatprep.subr.mxu0 0.0
    %1749 = vmatpush1.msra.mxu0 0.0
    %1750 = vmatprep.subr.mxu0 0.0
    %1751 = vmatpush1.msra.mxu0 0.0
    %1752 = vmatprep.subr.mxu0 0.0
    %1753 = vmatpush1.msra.mxu0 0.0
    %1754 = vmatprep.subr.mxu0 0.0
    %1755 = vmatpush1.msra.mxu0 0.0
    %1756 = vmatprep.subr.mxu0 0.0
    %1757 = vmatpush1.msra.mxu0 0.0
    %1758 = vmatprep.subr.mxu0 0.0
    %1759 = vmatpush1.msra.mxu0 0.0
    %1760 = vmatprep.subr.mxu0 0.0
    %1761 = vmatpush1.msra.mxu0 0.0
    %1762 = vmatprep.subr.mxu0 0.0
    %1763 = vmatpush1.msra.mxu0 0.0
    %1764 = vmatprep.subr.mxu0 0.0
    %1765 = vmatpush1.msra.mxu0 0.0
    %1766 = vmatprep.subr.mxu0 0.0
    %1767 = vmatpush1.msra.mxu0 0.0
    %1768 = vmatprep.subr.mxu0 0.0
    %1769 = vmatpush1.msra.mxu0 0.0
    %1770 = vmatprep.subr.mxu0 0.0
    %1771 = vmatpush1.msra.mxu0 0.0
    %1772 = vmatprep.subr.mxu0 0.0
    %1773 = vmatpush1.msra.mxu0 0.0
    %1774 = vmatprep.subr.mxu0 0.0
    %1775 = vmatpush1.msra.mxu0 0.0
    %1776 = vmatprep.subr.mxu0 0.0
    %1777 = vmatpush1.msra.mxu0 0.0
    %1778 = vmatprep.subr.mxu0 0.0
    %1779 = vmatpush1.msra.mxu0 0.0
    %1780 = vmatprep.subr.mxu0 0.0
    %1781 = vmatpush1.msra.mxu0 0.0
    %1782 = vmatprep.subr.mxu0 0.0
    %1783 = vmatpush1.msra.mxu0 0.0
    %1784 = vmatprep.subr.mxu0 0.0
    %1785 = vmatpush1.msra.mxu0 0.0
    %1786 = vmatprep.subr.mxu0 0.0
    %1787 = vmatpush1.msra.mxu0 0.0
    %1788 = vmatprep.mubr.f32.mxu0 0.0
    %1789 = vmatmul.mubr.f32.gmra.mrb[0].mxu0 %v1722
    %v1790 = vpop.f32.mrb[0].mxu0
    %v1791 = vadd.f32 0.0, %v1790
    %v1792 = vpop.f32.mrb[0].mxu0
    %1793 = vdwg.mxu0
    %1794 = vrot.lane.b32.xlu0 %v1445, 112
    %v1795 = vpop.permute.xlu0 %1794
    %1796 = vrot.lane.b32.xlu0 %v1527, 112
    %v1797 = vpop.permute.xlu0 %1796
    %1798 = vrot.lane.b32.xlu0 %v1532, 112
    %v1799 = vpop.permute.xlu0 %1798
    %v1800 = vsel %vm388, %v1795, 0
    %v1802 = vsel %vm388, %v1797, 0
    %v1804 = vsel %vm388, %v1799, 0
    %1806 = vmatprep.subr.mxu0 0.0
    %1807 = vmatpush1.xpose.msra.mxu0 %v1802
    %1808 = vmatprep.subr.mxu0 0.0
    %1809 = vmatpush1.xpose.msra.mxu0 %v1804
    %1810 = vmatprep.subr.mxu0 0.0
    %1811 = vmatpush1.xpose.msra.mxu0 0.0
    %1812 = vmatprep.subr.mxu0 0.0
    %1813 = vmatpush1.xpose.msra.mxu0 0.0
    %1814 = vmatprep.subr.mxu0 0.0
    %1815 = vmatpush1.xpose.msra.mxu0 0.0
    %1816 = vmatprep.subr.mxu0 0.0
    %1817 = vmatpush1.xpose.msra.mxu0 0.0
    %1818 = vmatprep.subr.mxu0 0.0
    %1819 = vmatpush1.xpose.msra.mxu0 0.0
    %1820 = vmatprep.subr.mxu0 0.0
    %1821 = vmatpush1.xpose.msra.mxu0 0.0
    %1822 = vmatprep.subr.mxu0 0.0
    %1823 = vmatpush1.xpose.msra.mxu0 0.0
    %1824 = vmatprep.subr.mxu0 0.0
    %1825 = vmatpush1.xpose.msra.mxu0 0.0
    %1826 = vmatprep.subr.mxu0 0.0
    %1827 = vmatpush1.xpose.msra.mxu0 0.0
    %1828 = vmatprep.subr.mxu0 0.0
    %1829 = vmatpush1.xpose.msra.mxu0 0.0
    %1830 = vmatprep.subr.mxu0 0.0
    %1831 = vmatpush1.xpose.msra.mxu0 0.0
    %1832 = vmatprep.subr.mxu0 0.0
    %1833 = vmatpush1.xpose.msra.mxu0 0.0
    %1834 = vmatprep.subr.mxu0 0.0
    %1835 = vmatpush1.xpose.msra.mxu0 0.0
    %1836 = vmatprep.subr.mxu0 0.0
    %1837 = vmatpush1.xpose.msra.mxu0 0.0
    %1838 = vmatprep.subr.mxu0 0.0
    %1839 = vmatpush1.xpose.msra.mxu0 0.0
    %1840 = vmatprep.subr.mxu0 0.0
    %1841 = vmatpush1.xpose.msra.mxu0 0.0
    %1842 = vmatprep.subr.mxu0 0.0
    %1843 = vmatpush1.xpose.msra.mxu0 0.0
    %1844 = vmatprep.subr.mxu0 0.0
    %1845 = vmatpush1.xpose.msra.mxu0 0.0
    %1846 = vmatprep.subr.mxu0 0.0
    %1847 = vmatpush1.xpose.msra.mxu0 0.0
    %1848 = vmatprep.subr.mxu0 0.0
    %1849 = vmatpush1.xpose.msra.mxu0 0.0
    %1850 = vmatprep.subr.mxu0 0.0
    %1851 = vmatpush1.xpose.msra.mxu0 0.0
    %1852 = vmatprep.subr.mxu0 0.0
    %1853 = vmatpush1.xpose.msra.mxu0 0.0
    %1854 = vmatprep.subr.mxu0 0.0
    %1855 = vmatpush1.xpose.msra.mxu0 0.0
    %1856 = vmatprep.subr.mxu0 0.0
    %1857 = vmatpush1.xpose.msra.mxu0 0.0
    %1858 = vmatprep.subr.mxu0 0.0
    %1859 = vmatpush1.xpose.msra.mxu0 0.0
    %1860 = vmatprep.subr.mxu0 0.0
    %1861 = vmatpush1.xpose.msra.mxu0 0.0
    %1862 = vmatprep.subr.mxu0 0.0
    %1863 = vmatpush1.xpose.msra.mxu0 0.0
    %1864 = vmatprep.subr.mxu0 0.0
    %1865 = vmatpush1.xpose.msra.mxu0 0.0
    %1866 = vmatprep.subr.mxu0 0.0
    %1867 = vmatpush1.xpose.msra.mxu0 0.0
    %1868 = vmatprep.subr.mxu0 0.0
    %1869 = vmatpush1.xpose.msra.mxu0 0.0
    %1870 = vmatprep.mubr.f32.mxu0 0.0
    %1871 = vmatmul.mubr.f32.gmra.mrb[0].mxu0 %v1800
    %v1872 = vpop.f32.mrb[0].mxu0
    %v1873 = vadd.f32 0.0, %v1872
    %v1874 = vpop.f32.mrb[0].mxu0
    %1875 = vdwg.mxu0
    %v1876 = vmul.f32 %v1873, 0.25
    %v1877 = vsel %vm388, %v1876, -inf
    %1878 = vmax.xlane.f32.xlu0 %v1877
    %v1879 = vpop.xlane.xlu0 %1878
    %v1880 = vsub.f32 %v1876, %v1879
    %v1881 = vmul.f32 %v1880, 1.442695
    %v1882 = vpow.pop %v1881
    %v1883 = vsel %vm388, %v1882, 0.0
    %1884 = vadd.xlane.f32.xlu0 %v1883
    %v1885 = vpop.xlane.xlu0 %1884
    %v1886 = vrcp.pop %v1885
    %v1887 = vmul.f32 %v1882, %v1886
    %1890 = vrot.lane.b32.xlu0 %v1612, 112
    %v1891 = vpop.permute.xlu0 %1890
    %1892 = vrot.lane.b32.xlu0 %v1617, 112
    %v1893 = vpop.permute.xlu0 %1892
    %v1897 = vsel %vm388, %v1887, 0
    %1899 = vmatprep.subr.mxu0 0.0
    %1900 = vmatpush1.msra.mxu0 %v1891
    %1901 = vmatprep.subr.mxu0 0.0
    %1902 = vmatpush1.msra.mxu0 %v1893
    %1903 = vmatprep.subr.mxu0 0.0
    %1904 = vmatpush1.msra.mxu0 0.0
    %1905 = vmatprep.subr.mxu0 0.0
    %1906 = vmatpush1.msra.mxu0 0.0
    %1907 = vmatprep.subr.mxu0 0.0
    %1908 = vmatpush1.msra.mxu0 0.0
    %1909 = vmatprep.subr.mxu0 0.0
    %1910 = vmatpush1.msra.mxu0 0.0
    %1911 = vmatprep.subr.mxu0 0.0
    %1912 = vmatpush1.msra.mxu0 0.0
    %1913 = vmatprep.subr.mxu0 0.0
    %1914 = vmatpush1.msra.mxu0 0.0
    %1915 = vmatprep.subr.mxu0 0.0
    %1916 = vmatpush1.msra.mxu0 0.0
    %1917 = vmatprep.subr.mxu0 0.0
    %1918 = vmatpush1.msra.mxu0 0.0
    %1919 = vmatprep.subr.mxu0 0.0
    %1920 = vmatpush1.msra.mxu0 0.0
    %1921 = vmatprep.subr.mxu0 0.0
    %1922 = vmatpush1.msra.mxu0 0.0
    %1923 = vmatprep.subr.mxu0 0.0
    %1924 = vmatpush1.msra.mxu0 0.0
    %1925 = vmatprep.subr.mxu0 0.0
    %1926 = vmatpush1.msra.mxu0 0.0
    %1927 = vmatprep.subr.mxu0 0.0
    %1928 = vmatpush1.msra.mxu0 0.0
    %1929 = vmatprep.subr.mxu0 0.0
    %1930 = vmatpush1.msra.mxu0 0.0
    %1931 = vmatprep.subr.mxu0 0.0
    %1932 = vmatpush1.msra.mxu0 0.0
    %1933 = vmatprep.subr.mxu0 0.0
    %1934 = vmatpush1.msra.mxu0 0.0
    %1935 = vmatprep.subr.mxu0 0.0
    %1936 = vmatpush1.msra.mxu0 0.0
    %1937 = vmatprep.subr.mxu0 0.0
    %1938 = vmatpush1.msra.mxu0 0.0
    %1939 = vmatprep.subr.mxu0 0.0
    %1940 = vmatpush1.msra.mxu0 0.0
    %1941 = vmatprep.subr.mxu0 0.0
    %1942 = vmatpush1.msra.mxu0 0.0
    %1943 = vmatprep.subr.mxu0 0.0
    %1944 = vmatpush1.msra.mxu0 0.0
    %1945 = vmatprep.subr.mxu0 0.0
    %1946 = vmatpush1.msra.mxu0 0.0
    %1947 = vmatprep.subr.mxu0 0.0
    %1948 = vmatpush1.msra.mxu0 0.0
    %1949 = vmatprep.subr.mxu0 0.0
    %1950 = vmatpush1.msra.mxu0 0.0
    %1951 = vmatprep.subr.mxu0 0.0
    %1952 = vmatpush1.msra.mxu0 0.0
    %1953 = vmatprep.subr.mxu0 0.0
    %1954 = vmatpush1.msra.mxu0 0.0
    %1955 = vmatprep.subr.mxu0 0.0
    %1956 = vmatpush1.msra.mxu0 0.0
    %1957 = vmatprep.subr.mxu0 0.0
    %1958 = vmatpush1.msra.mxu0 0.0
    %1959 = vmatprep.subr.mxu0 0.0
    %1960 = vmatpush1.msra.mxu0 0.0
    %1961 = vmatprep.subr.mxu0 0.0
    %1962 = vmatpush1.msra.mxu0 0.0
    %1963 = vmatprep.mubr.f32.mxu0 0.0
    %1964 = vmatmul.mubr.f32.gmra.mrb[0].mxu0 %v1897
    %v1965 = vpop.f32.mrb[0].mxu0
    %v1966 = vadd.f32 0.0, %v1965
    %v1967 = vpop.f32.mrb[0].mxu0
    %1968 = vdwg.mxu0
    %v1970 = vsel %vm388, %v1966, 0
    %1972 = vmatprep.subr.mxu0 0.0
    %1973 = vmatpush1.msra.mxu0 %v1373
    %1974 = vmatprep.subr.mxu0 0.0
    %1975 = vmatpush1.msra.mxu0 %v1374
    %1976 = vmatprep.subr.mxu0 0.0
    %1977 = vmatpush1.msra.mxu0 0.0
    %1978 = vmatprep.subr.mxu0 0.0
    %1979 = vmatpush1.msra.mxu0 0.0
    %1980 = vmatprep.subr.mxu0 0.0
    %1981 = vmatpush1.msra.mxu0 0.0
    %1982 = vmatprep.subr.mxu0 0.0
    %1983 = vmatpush1.msra.mxu0 0.0
    %1984 = vmatprep.subr.mxu0 0.0
    %1985 = vmatpush1.msra.mxu0 0.0
    %1986 = vmatprep.subr.mxu0 0.0
    %1987 = vmatpush1.msra.mxu0 0.0
    %1988 = vmatprep.subr.mxu0 0.0
    %1989 = vmatpush1.msra.mxu0 0.0
    %1990 = vmatprep.subr.mxu0 0.0
    %1991 = vmatpush1.msra.mxu0 0.0
    %1992 = vmatprep.subr.mxu0 0.0
    %1993 = vmatpush1.msra.mxu0 0.0
    %1994 = vmatprep.subr.mxu0 0.0
    %1995 = vmatpush1.msra.mxu0 0.0
    %1996 = vmatprep.subr.mxu0 0.0
    %1997 = vmatpush1.msra.mxu0 0.0
    %1998 = vmatprep.subr.mxu0 0.0
    %1999 = vmatpush1.msra.mxu0 0.0
    %2000 = vmatprep.subr.mxu0 0.0
    %2001 = vmatpush1.msra.mxu0 0.0
    %2002 = vmatprep.subr.mxu0 0.0
    %2003 = vmatpush1.msra.mxu0 0.0
    %2004 = vmatprep.subr.mxu0 0.0
    %2005 = vmatpush1.msra.mxu0 0.0
    %2006 = vmatprep.subr.mxu0 0.0
    %2007 = vmatpush1.msra.mxu0 0.0
    %2008 = vmatprep.subr.mxu0 0.0
    %2009 = vmatpush1.msra.mxu0 0.0
    %2010 = vmatprep.subr.mxu0 0.0
    %2011 = vmatpush1.msra.mxu0 0.0
    %2012 = vmatprep.subr.mxu0 0.0
    %2013 = vmatpush1.msra.mxu0 0.0
    %2014 = vmatprep.subr.mxu0 0.0
    %2015 = vmatpush1.msra.mxu0 0.0
    %2016 = vmatprep.subr.mxu0 0.0
    %2017 = vmatpush1.msra.mxu0 0.0
    %2018 = vmatprep.subr.mxu0 0.0
    %2019 = vmatpush1.msra.mxu0 0.0
    %2020 = vmatprep.subr.mxu0 0.0
    %2021 = vmatpush1.msra.mxu0 0.0
    %2022 = vmatprep.subr.mxu0 0.0
    %2023 = vmatpush1.msra.mxu0 0.0
    %2024 = vmatprep.subr.mxu0 0.0
    %2025 = vmatpush1.msra.mxu0 0.0
    %2026 = vmatprep.subr.mxu0 0.0
    %2027 = vmatpush1.msra.mxu0 0.0
    %2028 = vmatprep.subr.mxu0 0.0
    %2029 = vmatpush1.msra.mxu0 0.0
    %2030 = vmatprep.subr.mxu0 0.0
    %2031 = vmatpush1.msra.mxu0 0.0
    %2032 = vmatprep.subr.mxu0 0.0
    %2033 = vmatpush1.msra.mxu0 0.0
    %2034 = vmatprep.subr.mxu0 0.0
    %2035 = vmatpush1.msra.mxu0 0.0
    %2036 = vmatprep.mubr.f32.mxu0 0.0
    %2037 = vmatmul.mubr.f32.gmra.mrb[0].mxu0 %v1970
    %v2038 = vpop.f32.mrb[0].mxu0
    %v2039 = vadd.f32 0.0, %v2038
    %v2040 = vpop.f32.mrb[0].mxu0
    %2041 = vdwg.mxu0
    %v2043 = vsel %vm388, %v1791, 0
    %2045 = vmatprep.subr.mxu0 0.0
    %2046 = vmatpush1.msra.mxu0 %v1371
    %2047 = vmatprep.subr.mxu0 0.0
    %2048 = vmatpush1.msra.mxu0 %v1372
    %2049 = vmatprep.subr.mxu0 0.0
    %2050 = vmatpush1.msra.mxu0 0.0
    %2051 = vmatprep.subr.mxu0 0.0
    %2052 = vmatpush1.msra.mxu0 0.0
    %2053 = vmatprep.subr.mxu0 0.0
    %2054 = vmatpush1.msra.mxu0 0.0
    %2055 = vmatprep.subr.mxu0 0.0
    %2056 = vmatpush1.msra.mxu0 0.0
    %2057 = vmatprep.subr.mxu0 0.0
    %2058 = vmatpush1.msra.mxu0 0.0
    %2059 = vmatprep.subr.mxu0 0.0
    %2060 = vmatpush1.msra.mxu0 0.0
    %2061 = vmatprep.subr.mxu0 0.0
    %2062 = vmatpush1.msra.mxu0 0.0
    %2063 = vmatprep.subr.mxu0 0.0
    %2064 = vmatpush1.msra.mxu0 0.0
    %2065 = vmatprep.subr.mxu0 0.0
    %2066 = vmatpush1.msra.mxu0 0.0
    %2067 = vmatprep.subr.mxu0 0.0
    %2068 = vmatpush1.msra.mxu0 0.0
    %2069 = vmatprep.subr.mxu0 0.0
    %2070 = vmatpush1.msra.mxu0 0.0
    %2071 = vmatprep.subr.mxu0 0.0
    %2072 = vmatpush1.msra.mxu0 0.0
    %2073 = vmatprep.subr.mxu0 0.0
    %2074 = vmatpush1.msra.mxu0 0.0
    %2075 = vmatprep.subr.mxu0 0.0
    %2076 = vmatpush1.msra.mxu0 0.0
    %2077 = vmatprep.subr.mxu0 0.0
    %2078 = vmatpush1.msra.mxu0 0.0
    %2079 = vmatprep.subr.mxu0 0.0
    %2080 = vmatpush1.msra.mxu0 0.0
    %2081 = vmatprep.subr.mxu0 0.0
    %2082 = vmatpush1.msra.mxu0 0.0
    %2083 = vmatprep.subr.mxu0 0.0
    %2084 = vmatpush1.msra.mxu0 0.0
    %2085 = vmatprep.subr.mxu0 0.0
    %2086 = vmatpush1.msra.mxu0 0.0
    %2087 = vmatprep.subr.mxu0 0.0
    %2088 = vmatpush1.msra.mxu0 0.0
    %2089 = vmatprep.subr.mxu0 0.0
    %2090 = vmatpush1.msra.mxu0 0.0
    %2091 = vmatprep.subr.mxu0 0.0
    %2092 = vmatpush1.msra.mxu0 0.0
    %2093 = vmatprep.subr.mxu0 0.0
    %2094 = vmatpush1.msra.mxu0 0.0
    %2095 = vmatprep.subr.mxu0 0.0
    %2096 = vmatpush1.msra.mxu0 0.0
    %2097 = vmatprep.subr.mxu0 0.0
    %2098 = vmatpush1.msra.mxu0 0.0
    %2099 = vmatprep.subr.mxu0 0.0
    %2100 = vmatpush1.msra.mxu0 0.0
    %2101 = vmatprep.subr.mxu0 0.0
    %2102 = vmatpush1.msra.mxu0 0.0
    %2103 = vmatprep.subr.mxu0 0.0
    %2104 = vmatpush1.msra.mxu0 0.0
    %2105 = vmatprep.subr.mxu0 0.0
    %2106 = vmatpush1.msra.mxu0 0.0
    %2107 = vmatprep.subr.mxu0 0.0
    %2108 = vmatpush1.msra.mxu0 0.0
    %2109 = vmatprep.mubr.f32.mxu0 0.0
    %2110 = vmatmul.mubr.f32.gmra.mrb[0].mxu0 %v2043
    %v2111 = vpop.f32.mrb[0].mxu0
    %v2112 = vadd.f32 %v2039, %v2111
    %v2113 = vpop.f32.mrb[0].mxu0
    %2114 = vdwg.mxu0
    %2115 = vst [vmem:[%s13] sm:$0xff] %v2112
    %v2117 = vsel %vm388, %v1537, 0
    %v2120 = vsel %vm388, %v1542, 0
    %2122 = vmatprep.subr.mxu0 0.0
    %2123 = vmatpush1.xpose.msra.mxu0 %v2117
    %2124 = vmatprep.subr.mxu0 0.0
    %2125 = vmatpush1.xpose.msra.mxu0 %v2120
    %2126 = vmatprep.subr.mxu0 0.0
    %2127 = vmatpush1.xpose.msra.mxu0 0.0
    %2128 = vmatprep.subr.mxu0 0.0
    %2129 = vmatpush1.xpose.msra.mxu0 0.0
    %2130 = vmatprep.subr.mxu0 0.0
    %2131 = vmatpush1.xpose.msra.mxu0 0.0
    %2132 = vmatprep.subr.mxu0 0.0
    %2133 = vmatpush1.xpose.msra.mxu0 0.0
    %2134 = vmatprep.subr.mxu0 0.0
    %2135 = vmatpush1.xpose.msra.mxu0 0.0
    %2136 = vmatprep.subr.mxu0 0.0
    %2137 = vmatpush1.xpose.msra.mxu0 0.0
    %2138 = vmatprep.subr.mxu0 0.0
    %2139 = vmatpush1.xpose.msra.mxu0 0.0
    %2140 = vmatprep.subr.mxu0 0.0
    %2141 = vmatpush1.xpose.msra.mxu0 0.0
    %2142 = vmatprep.subr.mxu0 0.0
    %2143 = vmatpush1.xpose.msra.mxu0 0.0
    %2144 = vmatprep.subr.mxu0 0.0
    %2145 = vmatpush1.xpose.msra.mxu0 0.0
    %2146 = vmatprep.subr.mxu0 0.0
    %2147 = vmatpush1.xpose.msra.mxu0 0.0
    %2148 = vmatprep.subr.mxu0 0.0
    %2149 = vmatpush1.xpose.msra.mxu0 0.0
    %2150 = vmatprep.subr.mxu0 0.0
    %2151 = vmatpush1.xpose.msra.mxu0 0.0
    %2152 = vmatprep.subr.mxu0 0.0
    %2153 = vmatpush1.xpose.msra.mxu0 0.0
    %2154 = vmatprep.subr.mxu0 0.0
    %2155 = vmatpush1.xpose.msra.mxu0 0.0
    %2156 = vmatprep.subr.mxu0 0.0
    %2157 = vmatpush1.xpose.msra.mxu0 0.0
    %2158 = vmatprep.subr.mxu0 0.0
    %2159 = vmatpush1.xpose.msra.mxu0 0.0
    %2160 = vmatprep.subr.mxu0 0.0
    %2161 = vmatpush1.xpose.msra.mxu0 0.0
    %2162 = vmatprep.subr.mxu0 0.0
    %2163 = vmatpush1.xpose.msra.mxu0 0.0
    %2164 = vmatprep.subr.mxu0 0.0
    %2165 = vmatpush1.xpose.msra.mxu0 0.0
    %2166 = vmatprep.subr.mxu0 0.0
    %2167 = vmatpush1.xpose.msra.mxu0 0.0
    %2168 = vmatprep.subr.mxu0 0.0
    %2169 = vmatpush1.xpose.msra.mxu0 0.0
    %2170 = vmatprep.subr.mxu0 0.0
    %2171 = vmatpush1.xpose.msra.mxu0 0.0
    %2172 = vmatprep.subr.mxu0 0.0
    %2173 = vmatpush1.xpose.msra.mxu0 0.0
    %2174 = vmatprep.subr.mxu0 0.0
    %2175 = vmatpush1.xpose.msra.mxu0 0.0
    %2176 = vmatprep.subr.mxu0 0.0
    %2177 = vmatpush1.xpose.msra.mxu0 0.0
    %2178 = vmatprep.subr.mxu0 0.0
    %2179 = vmatpush1.xpose.msra.mxu0 0.0
    %2180 = vmatprep.subr.mxu0 0.0
    %2181 = vmatpush1.xpose.msra.mxu0 0.0
    %2182 = vmatprep.subr.mxu0 0.0
    %2183 = vmatpush1.xpose.msra.mxu0 0.0
    %2184 = vmatprep.subr.mxu0 0.0
    %2185 = vmatpush1.xpose.msra.mxu0 0.0
    %2186 = vmatprep.mubr.f32.mxu0 0.0
    %2187 = vmatmul.mubr.f32.gmra.mrb[0].mxu0 %v1631
    %v2188 = vpop.f32.mrb[0].mxu0
    %v2189 = vadd.f32 0.0, %v2188
    %v2190 = vpop.f32.mrb[0].mxu0
    %2191 = vdwg.mxu0
    %v2192 = vmul.f32 %v2189, 0.25
    %v2193 = vsel %vm388, %v2192, -inf
    %2194 = vmax.xlane.f32.xlu0 %v2193
    %v2195 = vpop.xlane.xlu0 %2194
    %v2196 = vsub.f32 %v2192, %v2195
    %v2197 = vmul.f32 %v2196, 1.442695
    %v2198 = vpow.pop %v2197
    %v2199 = vsel %vm388, %v2198, 0.0
    %2200 = vadd.xlane.f32.xlu0 %v2199
    %v2201 = vpop.xlane.xlu0 %2200
    %v2202 = vrcp.pop %v2201
    %v2203 = vmul.f32 %v2198, %v2202
    %v2205 = vsel %vm388, %v2203, 0
    %2207 = vmatprep.subr.mxu0 0.0
    %2208 = vmatpush1.msra.mxu0 %v1622
    %2209 = vmatprep.subr.mxu0 0.0
    %2210 = vmatpush1.msra.mxu0 %v1627
    %2211 = vmatprep.subr.mxu0 0.0
    %2212 = vmatpush1.msra.mxu0 0.0
    %2213 = vmatprep.subr.mxu0 0.0
    %2214 = vmatpush1.msra.mxu0 0.0
    %2215 = vmatprep.subr.mxu0 0.0
    %2216 = vmatpush1.msra.mxu0 0.0
    %2217 = vmatprep.subr.mxu0 0.0
    %2218 = vmatpush1.msra.mxu0 0.0
    %2219 = vmatprep.subr.mxu0 0.0
    %2220 = vmatpush1.msra.mxu0 0.0
    %2221 = vmatprep.subr.mxu0 0.0
    %2222 = vmatpush1.msra.mxu0 0.0
    %2223 = vmatprep.subr.mxu0 0.0
    %2224 = vmatpush1.msra.mxu0 0.0
    %2225 = vmatprep.subr.mxu0 0.0
    %2226 = vmatpush1.msra.mxu0 0.0
    %2227 = vmatprep.subr.mxu0 0.0
    %2228 = vmatpush1.msra.mxu0 0.0
    %2229 = vmatprep.subr.mxu0 0.0
    %2230 = vmatpush1.msra.mxu0 0.0
    %2231 = vmatprep.subr.mxu0 0.0
    %2232 = vmatpush1.msra.mxu0 0.0
    %2233 = vmatprep.subr.mxu0 0.0
    %2234 = vmatpush1.msra.mxu0 0.0
    %2235 = vmatprep.subr.mxu0 0.0
    %2236 = vmatpush1.msra.mxu0 0.0
    %2237 = vmatprep.subr.mxu0 0.0
    %2238 = vmatpush1.msra.mxu0 0.0
    %2239 = vmatprep.subr.mxu0 0.0
    %2240 = vmatpush1.msra.mxu0 0.0
    %2241 = vmatprep.subr.mxu0 0.0
    %2242 = vmatpush1.msra.mxu0 0.0
    %2243 = vmatprep.subr.mxu0 0.0
    %2244 = vmatpush1.msra.mxu0 0.0
    %2245 = vmatprep.subr.mxu0 0.0
    %2246 = vmatpush1.msra.mxu0 0.0
    %2247 = vmatprep.subr.mxu0 0.0
    %2248 = vmatpush1.msra.mxu0 0.0
    %2249 = vmatprep.subr.mxu0 0.0
    %2250 = vmatpush1.msra.mxu0 0.0
    %2251 = vmatprep.subr.mxu0 0.0
    %2252 = vmatpush1.msra.mxu0 0.0
    %2253 = vmatprep.subr.mxu0 0.0
    %2254 = vmatpush1.msra.mxu0 0.0
    %2255 = vmatprep.subr.mxu0 0.0
    %2256 = vmatpush1.msra.mxu0 0.0
    %2257 = vmatprep.subr.mxu0 0.0
    %2258 = vmatpush1.msra.mxu0 0.0
    %2259 = vmatprep.subr.mxu0 0.0
    %2260 = vmatpush1.msra.mxu0 0.0
    %2261 = vmatprep.subr.mxu0 0.0
    %2262 = vmatpush1.msra.mxu0 0.0
    %2263 = vmatprep.subr.mxu0 0.0
    %2264 = vmatpush1.msra.mxu0 0.0
    %2265 = vmatprep.subr.mxu0 0.0
    %2266 = vmatpush1.msra.mxu0 0.0
    %2267 = vmatprep.subr.mxu0 0.0
    %2268 = vmatpush1.msra.mxu0 0.0
    %2269 = vmatprep.subr.mxu0 0.0
    %2270 = vmatpush1.msra.mxu0 0.0
    %2271 = vmatprep.mubr.f32.mxu0 0.0
    %2272 = vmatmul.mubr.f32.gmra.mrb[0].mxu0 %v2205
    %v2273 = vpop.f32.mrb[0].mxu0
    %v2274 = vadd.f32 0.0, %v2273
    %v2275 = vpop.f32.mrb[0].mxu0
    %2276 = vdwg.mxu0
    %2277 = vrot.lane.b32.xlu0 %v1537, 112
    %v2278 = vpop.permute.xlu0 %2277
    %2279 = vrot.lane.b32.xlu0 %v1542, 112
    %v2280 = vpop.permute.xlu0 %2279
    %v2281 = vsel %vm388, %v2278, 0
    %v2283 = vsel %vm388, %v2280, 0
    %2285 = vmatprep.subr.mxu0 0.0
    %2286 = vmatpush1.xpose.msra.mxu0 %v2281
    %2287 = vmatprep.subr.mxu0 0.0
    %2288 = vmatpush1.xpose.msra.mxu0 %v2283
    %2289 = vmatprep.subr.mxu0 0.0
    %2290 = vmatpush1.xpose.msra.mxu0 0.0
    %2291 = vmatprep.subr.mxu0 0.0
    %2292 = vmatpush1.xpose.msra.mxu0 0.0
    %2293 = vmatprep.subr.mxu0 0.0
    %2294 = vmatpush1.xpose.msra.mxu0 0.0
    %2295 = vmatprep.subr.mxu0 0.0
    %2296 = vmatpush1.xpose.msra.mxu0 0.0
    %2297 = vmatprep.subr.mxu0 0.0
    %2298 = vmatpush1.xpose.msra.mxu0 0.0
    %2299 = vmatprep.subr.mxu0 0.0
    %2300 = vmatpush1.xpose.msra.mxu0 0.0
    %2301 = vmatprep.subr.mxu0 0.0
    %2302 = vmatpush1.xpose.msra.mxu0 0.0
    %2303 = vmatprep.subr.mxu0 0.0
    %2304 = vmatpush1.xpose.msra.mxu0 0.0
    %2305 = vmatprep.subr.mxu0 0.0
    %2306 = vmatpush1.xpose.msra.mxu0 0.0
    %2307 = vmatprep.subr.mxu0 0.0
    %2308 = vmatpush1.xpose.msra.mxu0 0.0
    %2309 = vmatprep.subr.mxu0 0.0
    %2310 = vmatpush1.xpose.msra.mxu0 0.0
    %2311 = vmatprep.subr.mxu0 0.0
    %2312 = vmatpush1.xpose.msra.mxu0 0.0
    %2313 = vmatprep.subr.mxu0 0.0
    %2314 = vmatpush1.xpose.msra.mxu0 0.0
    %2315 = vmatprep.subr.mxu0 0.0
    %2316 = vmatpush1.xpose.msra.mxu0 0.0
    %2317 = vmatprep.subr.mxu0 0.0
    %2318 = vmatpush1.xpose.msra.mxu0 0.0
    %2319 = vmatprep.subr.mxu0 0.0
    %2320 = vmatpush1.xpose.msra.mxu0 0.0
    %2321 = vmatprep.subr.mxu0 0.0
    %2322 = vmatpush1.xpose.msra.mxu0 0.0
    %2323 = vmatprep.subr.mxu0 0.0
    %2324 = vmatpush1.xpose.msra.mxu0 0.0
    %2325 = vmatprep.subr.mxu0 0.0
    %2326 = vmatpush1.xpose.msra.mxu0 0.0
    %2327 = vmatprep.subr.mxu0 0.0
    %2328 = vmatpush1.xpose.msra.mxu0 0.0
    %2329 = vmatprep.subr.mxu0 0.0
    %2330 = vmatpush1.xpose.msra.mxu0 0.0
    %2331 = vmatprep.subr.mxu0 0.0
    %2332 = vmatpush1.xpose.msra.mxu0 0.0
    %2333 = vmatprep.subr.mxu0 0.0
    %2334 = vmatpush1.xpose.msra.mxu0 0.0
    %2335 = vmatprep.subr.mxu0 0.0
    %2336 = vmatpush1.xpose.msra.mxu0 0.0
    %2337 = vmatprep.subr.mxu0 0.0
    %2338 = vmatpush1.xpose.msra.mxu0 0.0
    %2339 = vmatprep.subr.mxu0 0.0
    %2340 = vmatpush1.xpose.msra.mxu0 0.0
    %2341 = vmatprep.subr.mxu0 0.0
    %2342 = vmatpush1.xpose.msra.mxu0 0.0
    %2343 = vmatprep.subr.mxu0 0.0
    %2344 = vmatpush1.xpose.msra.mxu0 0.0
    %2345 = vmatprep.subr.mxu0 0.0
    %2346 = vmatpush1.xpose.msra.mxu0 0.0
    %2347 = vmatprep.subr.mxu0 0.0
    %2348 = vmatpush1.xpose.msra.mxu0 0.0
    %2349 = vmatprep.mubr.f32.mxu0 0.0
    %2350 = vmatmul.mubr.f32.gmra.mrb[0].mxu0 %v1800
    %v2351 = vpop.f32.mrb[0].mxu0
    %v2352 = vadd.f32 0.0, %v2351
    %v2353 = vpop.f32.mrb[0].mxu0
    %2354 = vdwg.mxu0
    %v2355 = vmul.f32 %v2352, 0.25
    %v2356 = vsel %vm388, %v2355, -inf
    %2357 = vmax.xlane.f32.xlu0 %v2356
    %v2358 = vpop.xlane.xlu0 %2357
    %v2359 = vsub.f32 %v2355, %v2358
    %v2360 = vmul.f32 %v2359, 1.442695
    %v2361 = vpow.pop %v2360
    %v2362 = vsel %vm388, %v2361, 0.0
    %2363 = vadd.xlane.f32.xlu0 %v2362
    %v2364 = vpop.xlane.xlu0 %2363
    %v2365 = vrcp.pop %v2364
    %v2366 = vmul.f32 %v2361, %v2365
    %2369 = vrot.lane.b32.xlu0 %v1622, 112
    %v2370 = vpop.permute.xlu0 %2369
    %2371 = vrot.lane.b32.xlu0 %v1627, 112
    %v2372 = vpop.permute.xlu0 %2371
    %v2376 = vsel %vm388, %v2366, 0
    %2378 = vmatprep.subr.mxu0 0.0
    %2379 = vmatpush1.msra.mxu0 %v2370
    %2380 = vmatprep.subr.mxu0 0.0
    %2381 = vmatpush1.msra.mxu0 %v2372
    %2382 = vmatprep.subr.mxu0 0.0
    %2383 = vmatpush1.msra.mxu0 0.0
    %2384 = vmatprep.subr.mxu0 0.0
    %2385 = vmatpush1.msra.mxu0 0.0
    %2386 = vmatprep.subr.mxu0 0.0
    %2387 = vmatpush1.msra.mxu0 0.0
    %2388 = vmatprep.subr.mxu0 0.0
    %2389 = vmatpush1.msra.mxu0 0.0
    %2390 = vmatprep.subr.mxu0 0.0
    %2391 = vmatpush1.msra.mxu0 0.0
    %2392 = vmatprep.subr.mxu0 0.0
    %2393 = vmatpush1.msra.mxu0 0.0
    %2394 = vmatprep.subr.mxu0 0.0
    %2395 = vmatpush1.msra.mxu0 0.0
    %2396 = vmatprep.subr.mxu0 0.0
    %2397 = vmatpush1.msra.mxu0 0.0
    %2398 = vmatprep.subr.mxu0 0.0
    %2399 = vmatpush1.msra.mxu0 0.0
    %2400 = vmatprep.subr.mxu0 0.0
    %2401 = vmatpush1.msra.mxu0 0.0
    %2402 = vmatprep.subr.mxu0 0.0
    %2403 = vmatpush1.msra.mxu0 0.0
    %2404 = vmatprep.subr.mxu0 0.0
    %2405 = vmatpush1.msra.mxu0 0.0
    %2406 = vmatprep.subr.mxu0 0.0
    %2407 = vmatpush1.msra.mxu0 0.0
    %2408 = vmatprep.subr.mxu0 0.0
    %2409 = vmatpush1.msra.mxu0 0.0
    %2410 = vmatprep.subr.mxu0 0.0
    %2411 = vmatpush1.msra.mxu0 0.0
    %2412 = vmatprep.subr.mxu0 0.0
    %2413 = vmatpush1.msra.mxu0 0.0
    %2414 = vmatprep.subr.mxu0 0.0
    %2415 = vmatpush1.msra.mxu0 0.0
    %2416 = vmatprep.subr.mxu0 0.0
    %2417 = vmatpush1.msra.mxu0 0.0
    %2418 = vmatprep.subr.mxu0 0.0
    %2419 = vmatpush1.msra.mxu0 0.0
    %2420 = vmatprep.subr.mxu0 0.0
    %2421 = vmatpush1.msra.mxu0 0.0
    %2422 = vmatprep.subr.mxu0 0.0
    %2423 = vmatpush1.msra.mxu0 0.0
    %2424 = vmatprep.subr.mxu0 0.0
    %2425 = vmatpush1.msra.mxu0 0.0
    %2426 = vmatprep.subr.mxu0 0.0
    %2427 = vmatpush1.msra.mxu0 0.0
    %2428 = vmatprep.subr.mxu0 0.0
    %2429 = vmatpush1.msra.mxu0 0.0
    %2430 = vmatprep.subr.mxu0 0.0
    %2431 = vmatpush1.msra.mxu0 0.0
    %2432 = vmatprep.subr.mxu0 0.0
    %2433 = vmatpush1.msra.mxu0 0.0
    %2434 = vmatprep.subr.mxu0 0.0
    %2435 = vmatpush1.msra.mxu0 0.0
    %2436 = vmatprep.subr.mxu0 0.0
    %2437 = vmatpush1.msra.mxu0 0.0
    %2438 = vmatprep.subr.mxu0 0.0
    %2439 = vmatpush1.msra.mxu0 0.0
    %2440 = vmatprep.subr.mxu0 0.0
    %2441 = vmatpush1.msra.mxu0 0.0
    %2442 = vmatprep.mubr.f32.mxu0 0.0
    %2443 = vmatmul.mubr.f32.gmra.mrb[0].mxu0 %v2376
    %v2444 = vpop.f32.mrb[0].mxu0
    %v2445 = vadd.f32 0.0, %v2444
    %v2446 = vpop.f32.mrb[0].mxu0
    %2447 = vdwg.mxu0
    %v2449 = vsel %vm388, %v2445, 0
    %2451 = vmatprep.subr.mxu0 0.0
    %2452 = vmatpush1.msra.mxu0 %v1373
    %2453 = vmatprep.subr.mxu0 0.0
    %2454 = vmatpush1.msra.mxu0 %v1374
    %2455 = vmatprep.subr.mxu0 0.0
    %2456 = vmatpush1.msra.mxu0 0.0
    %2457 = vmatprep.subr.mxu0 0.0
    %2458 = vmatpush1.msra.mxu0 0.0
    %2459 = vmatprep.subr.mxu0 0.0
    %2460 = vmatpush1.msra.mxu0 0.0
    %2461 = vmatprep.subr.mxu0 0.0
    %2462 = vmatpush1.msra.mxu0 0.0
    %2463 = vmatprep.subr.mxu0 0.0
    %2464 = vmatpush1.msra.mxu0 0.0
    %2465 = vmatprep.subr.mxu0 0.0
    %2466 = vmatpush1.msra.mxu0 0.0
    %2467 = vmatprep.subr.mxu0 0.0
    %2468 = vmatpush1.msra.mxu0 0.0
    %2469 = vmatprep.subr.mxu0 0.0
    %2470 = vmatpush1.msra.mxu0 0.0
    %2471 = vmatprep.subr.mxu0 0.0
    %2472 = vmatpush1.msra.mxu0 0.0
    %2473 = vmatprep.subr.mxu0 0.0
    %2474 = vmatpush1.msra.mxu0 0.0
    %2475 = vmatprep.subr.mxu0 0.0
    %2476 = vmatpush1.msra.mxu0 0.0
    %2477 = vmatprep.subr.mxu0 0.0
    %2478 = vmatpush1.msra.mxu0 0.0
    %2479 = vmatprep.subr.mxu0 0.0
    %2480 = vmatpush1.msra.mxu0 0.0
    %2481 = vmatprep.subr.mxu0 0.0
    %2482 = vmatpush1.msra.mxu0 0.0
    %2483 = vmatprep.subr.mxu0 0.0
    %2484 = vmatpush1.msra.mxu0 0.0
    %2485 = vmatprep.subr.mxu0 0.0
    %2486 = vmatpush1.msra.mxu0 0.0
    %2487 = vmatprep.subr.mxu0 0.0
    %2488 = vmatpush1.msra.mxu0 0.0
    %2489 = vmatprep.subr.mxu0 0.0
    %2490 = vmatpush1.msra.mxu0 0.0
    %2491 = vmatprep.subr.mxu0 0.0
    %2492 = vmatpush1.msra.mxu0 0.0
    %2493 = vmatprep.subr.mxu0 0.0
    %2494 = vmatpush1.msra.mxu0 0.0
    %2495 = vmatprep.subr.mxu0 0.0
    %2496 = vmatpush1.msra.mxu0 0.0
    %2497 = vmatprep.subr.mxu0 0.0
    %2498 = vmatpush1.msra.mxu0 0.0
    %2499 = vmatprep.subr.mxu0 0.0
    %2500 = vmatpush1.msra.mxu0 0.0
    %2501 = vmatprep.subr.mxu0 0.0
    %2502 = vmatpush1.msra.mxu0 0.0
    %2503 = vmatprep.subr.mxu0 0.0
    %2504 = vmatpush1.msra.mxu0 0.0
    %2505 = vmatprep.subr.mxu0 0.0
    %2506 = vmatpush1.msra.mxu0 0.0
    %2507 = vmatprep.subr.mxu0 0.0
    %2508 = vmatpush1.msra.mxu0 0.0
    %2509 = vmatprep.subr.mxu0 0.0
    %2510 = vmatpush1.msra.mxu0 0.0
    %2511 = vmatprep.subr.mxu0 0.0
    %2512 = vmatpush1.msra.mxu0 0.0
    %2513 = vmatprep.subr.mxu0 0.0
    %2514 = vmatpush1.msra.mxu0 0.0
    %2515 = vmatprep.mubr.f32.mxu0 0.0
    %2516 = vmatmul.mubr.f32.gmra.mrb[0].mxu0 %v2449
    %v2517 = vpop.f32.mrb[0].mxu0
    %v2518 = vadd.f32 0.0, %v2517
    %v2519 = vpop.f32.mrb[0].mxu0
    %2520 = vdwg.mxu0
    %v2522 = vsel %vm388, %v2274, 0
    %2524 = vmatprep.subr.mxu0 0.0
    %2525 = vmatpush1.msra.mxu0 %v1371
    %2526 = vmatprep.subr.mxu0 0.0
    %2527 = vmatpush1.msra.mxu0 %v1372
    %2528 = vmatprep.subr.mxu0 0.0
    %2529 = vmatpush1.msra.mxu0 0.0
    %2530 = vmatprep.subr.mxu0 0.0
    %2531 = vmatpush1.msra.mxu0 0.0
    %2532 = vmatprep.subr.mxu0 0.0
    %2533 = vmatpush1.msra.mxu0 0.0
    %2534 = vmatprep.subr.mxu0 0.0
    %2535 = vmatpush1.msra.mxu0 0.0
    %2536 = vmatprep.subr.mxu0 0.0
    %2537 = vmatpush1.msra.mxu0 0.0
    %2538 = vmatprep.subr.mxu0 0.0
    %2539 = vmatpush1.msra.mxu0 0.0
    %2540 = vmatprep.subr.mxu0 0.0
    %2541 = vmatpush1.msra.mxu0 0.0
    %2542 = vmatprep.subr.mxu0 0.0
    %2543 = vmatpush1.msra.mxu0 0.0
    %2544 = vmatprep.subr.mxu0 0.0
    %2545 = vmatpush1.msra.mxu0 0.0
    %2546 = vmatprep.subr.mxu0 0.0
    %2547 = vmatpush1.msra.mxu0 0.0
    %2548 = vmatprep.subr.mxu0 0.0
    %2549 = vmatpush1.msra.mxu0 0.0
    %2550 = vmatprep.subr.mxu0 0.0
    %2551 = vmatpush1.msra.mxu0 0.0
    %2552 = vmatprep.subr.mxu0 0.0
    %2553 = vmatpush1.msra.mxu0 0.0
    %2554 = vmatprep.subr.mxu0 0.0
    %2555 = vmatpush1.msra.mxu0 0.0
    %2556 = vmatprep.subr.mxu0 0.0
    %2557 = vmatpush1.msra.mxu0 0.0
    %2558 = vmatprep.subr.mxu0 0.0
    %2559 = vmatpush1.msra.mxu0 0.0
    %2560 = vmatprep.subr.mxu0 0.0
    %2561 = vmatpush1.msra.mxu0 0.0
    %2562 = vmatprep.subr.mxu0 0.0
    %2563 = vmatpush1.msra.mxu0 0.0
    %2564 = vmatprep.subr.mxu0 0.0
    %2565 = vmatpush1.msra.mxu0 0.0
    %2566 = vmatprep.subr.mxu0 0.0
    %2567 = vmatpush1.msra.mxu0 0.0
    %2568 = vmatprep.subr.mxu0 0.0
    %2569 = vmatpush1.msra.mxu0 0.0
    %2570 = vmatprep.subr.mxu0 0.0
    %2571 = vmatpush1.msra.mxu0 0.0
    %2572 = vmatprep.subr.mxu0 0.0
    %2573 = vmatpush1.msra.mxu0 0.0
    %2574 = vmatprep.subr.mxu0 0.0
    %2575 = vmatpush1.msra.mxu0 0.0
    %2576 = vmatprep.subr.mxu0 0.0
    %2577 = vmatpush1.msra.mxu0 0.0
    %2578 = vmatprep.subr.mxu0 0.0
    %2579 = vmatpush1.msra.mxu0 0.0
    %2580 = vmatprep.subr.mxu0 0.0
    %2581 = vmatpush1.msra.mxu0 0.0
    %2582 = vmatprep.subr.mxu0 0.0
    %2583 = vmatpush1.msra.mxu0 0.0
    %2584 = vmatprep.subr.mxu0 0.0
    %2585 = vmatpush1.msra.mxu0 0.0
    %2586 = vmatprep.subr.mxu0 0.0
    %2587 = vmatpush1.msra.mxu0 0.0
    %2588 = vmatprep.mubr.f32.mxu0 0.0
    %2589 = vmatmul.mubr.f32.gmra.mrb[0].mxu0 %v2522
    %v2590 = vpop.f32.mrb[0].mxu0
    %v2591 = vadd.f32 %v2518, %v2590
    %v2592 = vpop.f32.mrb[0].mxu0
    %2593 = vdwg.mxu0
    %2594 = vst [vmem:[%s13 + $0x8] sm:$0xff] %v2591
    // Predicated region
    $region70: #{style_module_forward.1} parent=1 // pred_check
      _
    $region71: #{style_module_forward.1} parent=1 // pred_check_branch
      %2596 = sbr.rel (0) target = $region73
    $region72: #{style_module_forward.1} parent=1 // pred_region
      _
    $region73: #{style_module_forward.1} parent=1 // pred_fallthru
      _
    // Predicated region
    $region74: #{style_module_forward.1} parent=1 // pred_check
      _
    $region75: #{style_module_forward.1} parent=1 // pred_check_branch
      %2598 = sbr.rel (0) target = $region77
    $region76: #{style_module_forward.1} parent=1 // pred_region
      _
    $region77: #{style_module_forward.1} parent=1 // pred_fallthru
      _
    // Predicated region
    $region78: #{style_module_forward.1} parent=1 // pred_check
      _
    $region79: #{style_module_forward.1} parent=1 // pred_check_branch
      %2600 = sbr.rel (0) target = $region81
    $region80: #{style_module_forward.1} parent=1 // pred_region
      _
    $region81: #{style_module_forward.1} parent=1 // pred_fallthru
      _
    // Predicated region
    $region82: #{style_module_forward.1} parent=1 // pred_check
      _
    $region83: #{style_module_forward.1} parent=1 // pred_check_branch
      %2602 = sbr.rel (0) target = $region85
    $region84: #{style_module_forward.1} parent=1 // pred_region
      _
    $region85: #{style_module_forward.1} parent=1 // pred_fallthru
      _
    %2603 = vsyncpa [#allocation3], 1
    %2604 = vsyncpa [#allocation5], 1
    %2605 = vsyncpa [#allocation8], 1

</llo_original>
